<compile_context>
chip_gen: v6e
topology: v6e:2x2x1
jax: 0.10.0
libtpu: 0.0.40
codegen_flags: <defaults>
</compile_context>

<pallas_src>
import jax
import jax.numpy as jnp
from jax import lax
from jax.experimental import pallas as pl
from jax.experimental.pallas import tpu as pltpu


# -----------------------------------------------------------------------------
# small helpers
# -----------------------------------------------------------------------------
def _round_up(x, m):
    return (x + m - 1) // m * m


def _vmem_capacity_bytes():
    """Physical VMEM per core; conservative v7x fallback if query unavailable."""
    try:
        cap = getattr(pltpu.get_tpu_info(), "vmem_capacity_bytes", None)
        if cap:
            return int(cap)
    except Exception:
        pass
    return 64 * 1024 * 1024


def _vmem_usage_bytes(t_chunk, bt, kp, hp, cp):
    """Conservative per-kernel VMEM estimate (double-buffered blocks + scratch)."""
    g4 = 4 * hp
    use = 2 * t_chunk * bt * kp * 2       # x block (bf16, double-buffered)
    use += 2 * kp * g4 * 2                # W_ih^T (bf16)
    use += 2 * hp * g4 * 2                # W_hh^T (bf16)
    use += 2 * g4 * 4                     # folded bias (f32)
    use += 2 * t_chunk * bt * hp * 2      # h_seq out block (bf16)
    use += 2 * (hp * cp * 2 + cp * 4)     # fc weight / bias
    use += 2 * bt * cp * 4                # logits out block (f32)
    use += t_chunk * bt * g4 * 4          # chunk-wide gates scratch (f32)
    use += 2 * bt * hp * 4                # h / c state scratch (f32)
    return use


def _pick_tiles(s, bp, kp_max, hp, cp, budget):
    """Pick (batch_tile, time_chunk) under the VMEM budget.

    Preference: batch tile a multiple of 256 (v6e/v7x MXU M dim), else 128,
    else the largest multiple of 16; keep >= 2 batch tiles when possible so
    the "parallel" grid axis can be sharded across v7x's two TensorCores;
    time chunk as large as possible (capped at 16 unrolled steps).
    """
    bt_cands = [t for t in range(16, bp + 1, 16) if bp % t == 0]
    bt_cands.sort(key=lambda t: (t % 256 == 0, t % 128 == 0,
                                 (bp // t) >= 2, t), reverse=True)
    tc_cands = sorted({c for c in (16, 8, 4, 2, 1, s) if 1 <= c <= min(s, 16)},
                      reverse=True)
    for bt in bt_cands:
        for tc in tc_cands:
            if _vmem_usage_bytes(tc, bt, kp_max, hp, cp) <= budget:
                return bt, tc
    return min(bt_cands), 1


def _pad_gate_rows(w, h, hp):
    """(4h, ...) -> (4hp, ...): zero-pad each PyTorch gate block [i, f, g, o]."""
    pad = [(0, hp - h)] + [(0, 0)] * (w.ndim - 1)
    parts = [jnp.pad(w[g * h:(g + 1) * h], pad) for g in range(4)]
    return jnp.concatenate(parts, axis=0)


def _sigmoid_tanh(x):
    # sigmoid(x) == 0.5*tanh(0.5*x) + 0.5 : single EUP push vs exp + reciprocal.
    return 0.5 * jnp.tanh(0.5 * x) + 0.5


# -----------------------------------------------------------------------------
# Fused LSTM-layer kernel.
#   Per (batch_tile, time_chunk) grid step:
#     1) one chunk-wide MXU matmul:  gates_x = x_chunk @ W_ih^T + b  -> VMEM
#     2) unrolled serial loop over t_chunk steps:
#          gates = gates_x[t] + h @ W_hh^T   (bf16 matmul, f32 accumulate)
#          i,f,g,o -> c,h update             (f32 VPU, tanh-only EUP)
#   Non-last layers stream the hidden sequence (bf16) back to HBM.
#   The last layer fuses fc1:  logits = c_final @ W_fc^T + b_fc.
# -----------------------------------------------------------------------------
def _make_lstm_kernel(t_chunk, seq_len, fuse_fc):
    ragged = (seq_len % t_chunk) != 0

    def kernel(*refs):
        if fuse_fc:
            (x_ref, wih_ref, whh_ref, b_ref, fcw_ref, fcb_ref,
             logits_ref, gx_sc, h_st, c_st) = refs
        else:
            (x_ref, wih_ref, whh_ref, b_ref,
             hseq_ref, gx_sc, h_st, c_st) = refs

        chunk = pl.program_id(1)
        bt, hp = h_st.shape
        kp = x_ref.shape[-1]

        @pl.when(chunk == 0)
        def _():
            h_st[...] = jnp.zeros_like(h_st)
            c_st[...] = jnp.zeros_like(c_st)

        # (1) chunk-wide input projection; never touches HBM.
        x_chunk = x_ref[...].reshape(t_chunk * bt, kp)            # bf16
        gx_sc[...] = (
            jnp.dot(x_chunk, wih_ref[...], preferred_element_type=jnp.float32)
            + b_ref[...]).reshape(t_chunk, bt, 4 * hp)

        # (2) serial recurrence over the chunk.
        def step(t, carry):
            h, c = carry
            gates = gx_sc[t] + jnp.dot(h.astype(jnp.bfloat16), whh_ref[...],
                                       preferred_element_type=jnp.float32)
            i_g = _sigmoid_tanh(gates[:, 0 * hp:1 * hp])
            f_g = _sigmoid_tanh(gates[:, 1 * hp:2 * hp])
            g_g = jnp.tanh(gates[:, 2 * hp:3 * hp])
            o_g = _sigmoid_tanh(gates[:, 3 * hp:4 * hp])
            c_new = f_g * c + i_g * g_g
            h_new = o_g * jnp.tanh(c_new)
            if ragged:  # mask padded tail steps of the final chunk
                valid = (chunk * t_chunk + t) < seq_len
                h_new = jnp.where(valid, h_new, h)
                c_new = jnp.where(valid, c_new, c)
            if not fuse_fc:
                hseq_ref[t] = h_new.astype(jnp.bfloat16)   # lane-dense bf16 store
            return h_new, c_new

        h_fin, c_fin = lax.fori_loop(0, t_chunk, step,
                                     (h_st[...], c_st[...]), unroll=True)
        h_st[...] = h_fin
        c_st[...] = c_fin

        if fuse_fc:
            # Classifier on the final CELL state (matches `cell[-1]` in PyTorch).
            @pl.when(chunk == pl.num_programs(1) - 1)
            def _():
                logits_ref[...] = (
                    jnp.dot(c_fin.astype(jnp.bfloat16), fcw_ref[...],
                            preferred_element_type=jnp.float32) + fcb_ref[...])

    return kernel


def _lstm_layer_call(x_seq, w_ih_t, w_hh_t, b, *, seq_len, t_chunk, bt,
                     fc_w_t=None, fc_b=None, vmem_limit=48 * 1024 * 1024):
    s_pad, bp, kp = x_seq.shape
    g4 = w_hh_t.shape[1]
    hp = g4 // 4
    fuse_fc = fc_w_t is not None

    in_specs = [
        pl.BlockSpec((t_chunk, bt, kp), lambda bi, ci: (ci, bi, 0)),
        pl.BlockSpec((kp, g4), lambda bi, ci: (0, 0)),
        pl.BlockSpec((hp, g4), lambda bi, ci: (0, 0)),
        pl.BlockSpec((1, g4), lambda bi, ci: (0, 0)),
    ]
    args = [x_seq, w_ih_t, w_hh_t, b]
    if fuse_fc:
        cp = fc_w_t.shape[1]
        in_specs += [pl.BlockSpec((hp, cp), lambda bi, ci: (0, 0)),
                     pl.BlockSpec((1, cp), lambda bi, ci: (0, 0))]
        args += [fc_w_t, fc_b]
        out_shape = jax.ShapeDtypeStruct((bp, cp), jnp.float32)
        out_specs = pl.BlockSpec((bt, cp), lambda bi, ci: (bi, 0))
    else:
        out_shape = jax.ShapeDtypeStruct((s_pad, bp, hp), jnp.bfloat16)
        out_specs = pl.BlockSpec((t_chunk, bt, hp), lambda bi, ci: (ci, bi, 0))

    return pl.pallas_call(
        _make_lstm_kernel(t_chunk, seq_len, fuse_fc),
        out_shape=out_shape,
        grid=(bp // bt, s_pad // t_chunk),
        in_specs=in_specs,
        out_specs=out_specs,
        scratch_shapes=[pltpu.VMEM((t_chunk, bt, g4), jnp.float32),
                        pltpu.VMEM((bt, hp), jnp.float32),
                        pltpu.VMEM((bt, hp), jnp.float32)],
        compiler_params=pltpu.CompilerParams(
            dimension_semantics=("parallel", "arbitrary"),
            vmem_limit_bytes=vmem_limit),
    )(*args)


# -----------------------------------------------------------------------------
# Parameters: raw (PyTorch layout) init + packing into padded kernel layout.
# -----------------------------------------------------------------------------
def init_params(key, vocab_size, embedding_size, hidden_size, num_layers,
                num_classes):
    k_emb, k_rest = jax.random.split(key)
    raw = {"embedding": jax.random.normal(
        k_emb, (vocab_size, embedding_size), jnp.float32) * 0.1}

    stdv = float(hidden_size) ** -0.5
    keys = jax.random.split(k_rest, num_layers * 4 + 2)
    layers = []
    for l in range(num_layers):
        d_in = embedding_size if l == 0 else hidden_size
        kw1, kw2, kb1, kb2 = keys[4 * l:4 * l + 4]
        layers.append({
            "w_ih": jax.random.uniform(kw1, (4 * hidden_size, d_in),
                                       jnp.float32, -stdv, stdv),
            "w_hh": jax.random.uniform(kw2, (4 * hidden_size, hidden_size),
                                       jnp.float32, -stdv, stdv),
            "b_ih": jax.random.uniform(kb1, (4 * hidden_size,), jnp.float32,
                                       -stdv, stdv),
            "b_hh": jax.random.uniform(kb2, (4 * hidden_size,), jnp.float32,
                                       -stdv, stdv),
        })
    raw["lstm"] = layers

    kf_w, kf_b = keys[-2:]
    raw["fc_w"] = jax.random.uniform(kf_w, (num_classes, hidden_size),
                                     jnp.float32, -stdv, stdv)
    raw["fc_b"] = jax.random.uniform(kf_b, (num_classes,), jnp.float32,
                                     -stdv, stdv)
    return raw


def pack_params(raw, embedding_size, hidden_size, num_classes):
    """Pad to lane/sublane-friendly sizes, fold biases, transpose, cast bf16."""
    h = hidden_size
    hp = _round_up(h, 128)
    ep = _round_up(embedding_size, 128)
    cp = _round_up(num_classes, 128)

    packed = {"H": h, "Hp": hp, "Ep": ep, "Cp": cp, "num_classes": num_classes}
    packed["embedding"] = jnp.pad(
        raw["embedding"], ((0, 0), (0, ep - embedding_size))
    ).astype(jnp.bfloat16)                                      # bf16 activations

    layers = []
    for l, lyr in enumerate(raw["lstm"]):
        d_in = embedding_size if l == 0 else h
        d_in_p = ep if l == 0 else hp
        w_ih = _pad_gate_rows(lyr["w_ih"], h, hp)                  # (4Hp, d_in)
        w_ih = jnp.pad(w_ih, ((0, 0), (0, d_in_p - d_in)))         # (4Hp, d_in_p)
        w_hh = _pad_gate_rows(lyr["w_hh"], h, hp)
        w_hh = jnp.pad(w_hh, ((0, 0), (0, hp - h)))                # (4Hp, Hp)
        b = _pad_gate_rows(lyr["b_ih"] + lyr["b_hh"], h, hp)       # (4Hp,)
        layers.append({
            "w_ih_t": jnp.transpose(w_ih).astype(jnp.bfloat16),    # (d_in_p, 4Hp)
            "w_hh_t": jnp.transpose(w_hh).astype(jnp.bfloat16),    # (Hp, 4Hp)
            "b": b.reshape(1, 4 * hp).astype(jnp.float32),
        })
    packed["lstm"] = layers

    fc_w = jnp.pad(raw["fc_w"], ((0, cp - num_classes), (0, hp - h)))  # (Cp, Hp)
    packed["fc_w_t"] = jnp.transpose(fc_w).astype(jnp.bfloat16)        # (Hp, Cp)
    packed["fc_b"] = jnp.pad(raw["fc_b"],
                             (0, cp - num_classes)).reshape(1, cp)
    return packed


# -----------------------------------------------------------------------------
# Forward pass
# -----------------------------------------------------------------------------
def encoder_classification_forward(packed, x_tokens):
    """x_tokens: (seq_len, batch) int32 -> logits (batch, num_classes) f32."""
    s, b = x_tokens.shape
    hp, ep, cp = packed["Hp"], packed["Ep"], packed["Cp"]
    bp = _round_up(b, 16)                       # bf16-friendly sublane packing

    cap = _vmem_capacity_bytes()
    budget = cap // 2                           # tile-selection headroom
    vmem_limit = min((cap * 3) // 4, 96 * 1024 * 1024)
    bt, t_chunk = _pick_tiles(s, bp, max(ep, hp), hp, cp, budget)
    n_chunks = pl.cdiv(s, t_chunk)
    s_pad = n_chunks * t_chunk

    # Embedding gather (plain-JAX glue); pad time & batch with zeros; bf16.
    emb = packed["embedding"][x_tokens]                         # (S, B, Ep) bf16
    layer_in = jnp.pad(emb, ((0, s_pad - s), (0, bp - b), (0, 0)))

    n_layers = len(packed["lstm"])
    logits_p = None
    for l, lyr in enumerate(packed["lstm"]):
        last = (l == n_layers - 1)
        out = _lstm_layer_call(
            layer_in, lyr["w_ih_t"], lyr["w_hh_t"], lyr["b"],
            seq_len=s, t_chunk=t_chunk, bt=bt,
            fc_w_t=packed["fc_w_t"] if last else None,
            fc_b=packed["fc_b"] if last else None,
            vmem_limit=vmem_limit)
        if last:
            logits_p = out                                      # (Bp, Cp) f32
        else:
            layer_in = out                                      # (S_pad, Bp, Hp) bf16

    # Strip batch / class padding (padded lanes are exact zeros by construction).
    return logits_p[:b, :packed["num_classes"]]


if __name__ == "__main__":
    # Small, forward-consistent shapes.
    vocab_size = 50
    embedding_size = 16
    hidden_size = 32
    num_layers = 2
    num_classes = 3
    seq_len = 8
    batch = 2

    key = jax.random.PRNGKey(0)
    k_params, k_x = jax.random.split(key)

    raw = init_params(k_params, vocab_size, embedding_size, hidden_size,
                      num_layers, num_classes)
    packed = pack_params(raw, embedding_size, hidden_size, num_classes)
    x_tokens = jax.random.randint(k_x, (seq_len, batch), 0, vocab_size,
                                  dtype=jnp.int32)

    logits = encoder_classification_forward(packed, x_tokens)
    jax.block_until_ready(logits)

    assert logits.shape == (batch, num_classes)
    assert logits.dtype == jnp.float32
    assert bool(jnp.all(jnp.isfinite(logits)))
    print("KERNEL_OK")
</pallas_src>

<mosaic_0001>
module attributes {stable_mosaic.version = 11 : i64} {
  func.func @kernel(%arg0: i32, %arg1: i32, %arg2: memref<8x16x128xbf16, #tpu.memory_space<vmem>>, %arg3: memref<128x512xbf16, #tpu.memory_space<vmem>>, %arg4: memref<128x512xbf16, #tpu.memory_space<vmem>>, %arg5: memref<1x512xf32, #tpu.memory_space<vmem>>, %arg6: memref<8x16x128xbf16, #tpu.memory_space<vmem>>, %arg7: memref<8x16x512xf32, #tpu.memory_space<vmem>>, %arg8: memref<16x128xf32, #tpu.memory_space<vmem>>, %arg9: memref<16x128xf32, #tpu.memory_space<vmem>>) attributes {dimension_semantics = [#tpu.dimension_semantics<parallel>, #tpu.dimension_semantics<arbitrary>], iteration_bounds = array<i64: 1, 1>, scalar_prefetch = 0 : i64, scratch_operands = 3 : i64, tpu.core_type = #tpu.core_type<tc>, window_params = [{transform_indices = @transform_0, window_bounds = array<i64: 8, 16, 128>}, {pipeline_mode = #tpu.pipeline_mode<synchronous>, transform_indices = @transform_1, window_bounds = array<i64: 128, 512>}, {pipeline_mode = #tpu.pipeline_mode<synchronous>, transform_indices = @transform_2, window_bounds = array<i64: 128, 512>}, {pipeline_mode = #tpu.pipeline_mode<synchronous>, transform_indices = @transform_3, window_bounds = array<i64: 1, 512>}, {transform_indices = @transform_4, window_bounds = array<i64: 8, 16, 128>}]} {
    %c0_i32 = arith.constant 0 : i32
    %0 = arith.cmpi eq, %arg1, %c0_i32 : i32
    %1 = arith.extui %0 : i1 to i32
    %c0_i32_0 = arith.constant 0 : i32
    %2 = arith.cmpi ne, %1, %c0_i32_0 : i32
    scf.if %2 {
      %cst_147 = arith.constant 0.000000e+00 : f32
      %360 = vector.broadcast %cst_147 : f32 to vector<16x128xf32>
      %c0_148 = arith.constant 0 : index
      %c0_149 = arith.constant 0 : index
      %361 = vector.load %arg8[%c0_148, %c0_149] : memref<16x128xf32, #tpu.memory_space<vmem>>, vector<16x128xf32>
      tpu.vector_store %arg8[%c0_148, %c0_149], %360 {strides = array<i32>} : memref<16x128xf32, #tpu.memory_space<vmem>>, vector<16x128xf32>,
      %cst_150 = arith.constant 0.000000e+00 : f32
      %362 = vector.broadcast %cst_150 : f32 to vector<16x128xf32>
      %c0_151 = arith.constant 0 : index
      %c0_152 = arith.constant 0 : index
      %363 = vector.load %arg9[%c0_151, %c0_152] : memref<16x128xf32, #tpu.memory_space<vmem>>, vector<16x128xf32>
      tpu.vector_store %arg9[%c0_151, %c0_152], %362 {strides = array<i32>} : memref<16x128xf32, #tpu.memory_space<vmem>>, vector<16x128xf32>,
    } else {
    }
    %c0 = arith.constant 0 : index
    %c0_1 = arith.constant 0 : index
    %c0_2 = arith.constant 0 : index
    %3 = vector.load %arg2[%c0, %c0_1, %c0_2] : memref<8x16x128xbf16, #tpu.memory_space<vmem>>, vector<8x16x128xbf16>
    %4 = vector.shape_cast %3 : vector<8x16x128xbf16> to vector<128x128xbf16>
    %c0_3 = arith.constant 0 : index
    %c0_4 = arith.constant 0 : index
    %5 = vector.load %arg3[%c0_3, %c0_4] : memref<128x512xbf16, #tpu.memory_space<vmem>>, vector<128x512xbf16>
    %cst = arith.constant dense<0.000000e+00> : vector<128x512xf32>
    %6 = tpu.matmul %4, %5, %cst {dimension_numbers = #tpu.dot_dimension_numbers<[1], [0], [0], [1], [0, 0, 1, 1], [], []>} : vector<128x128xbf16>, vector<128x512xbf16>, vector<128x512xf32> -> vector<128x512xf32>
    %c0_5 = arith.constant 0 : index
    %c0_6 = arith.constant 0 : index
    %7 = vector.load %arg5[%c0_5, %c0_6] : memref<1x512xf32, #tpu.memory_space<vmem>>, vector<1x512xf32>
    %8 = vector.broadcast %7 : vector<1x512xf32> to vector<128x512xf32>
    %9 = arith.addf %6, %8 : vector<128x512xf32>
    %10 = vector.shape_cast %9 : vector<128x512xf32> to vector<8x16x512xf32>
    %c0_7 = arith.constant 0 : index
    %c0_8 = arith.constant 0 : index
    %c0_9 = arith.constant 0 : index
    %11 = vector.load %arg7[%c0_7, %c0_8, %c0_9] : memref<8x16x512xf32, #tpu.memory_space<vmem>>, vector<8x16x512xf32>
    tpu.vector_store %arg7[%c0_7, %c0_8, %c0_9], %10 {strides = array<i32>} : memref<8x16x512xf32, #tpu.memory_space<vmem>>, vector<8x16x512xf32>,
    %c0_10 = arith.constant 0 : index
    %c0_11 = arith.constant 0 : index
    %12 = vector.load %arg8[%c0_10, %c0_11] : memref<16x128xf32, #tpu.memory_space<vmem>>, vector<16x128xf32>
    %c0_12 = arith.constant 0 : index
    %c0_13 = arith.constant 0 : index
    %13 = vector.load %arg9[%c0_12, %c0_13] : memref<16x128xf32, #tpu.memory_space<vmem>>, vector<16x128xf32>
    %c0_i32_14 = arith.constant 0 : i32
    %14 = arith.index_cast %c0_i32_14 : i32 to index
    %c0_15 = arith.constant 0 : index
    %c0_16 = arith.constant 0 : index
    %15 = vector.load %arg7[%14, %c0_15, %c0_16] : memref<8x16x512xf32, #tpu.memory_space<vmem>>, vector<1x16x512xf32>
    %16 = vector.shape_cast %15 : vector<1x16x512xf32> to vector<16x512xf32>
    %17 = arith.truncf %12 : vector<16x128xf32> to vector<16x128xbf16>
    %c0_17 = arith.constant 0 : index
    %c0_18 = arith.constant 0 : index
    %18 = vector.load %arg4[%c0_17, %c0_18] : memref<128x512xbf16, #tpu.memory_space<vmem>>, vector<128x512xbf16>
    %cst_19 = arith.constant dense<0.000000e+00> : vector<16x512xf32>
    %19 = tpu.matmul %17, %18, %cst_19 {dimension_numbers = #tpu.dot_dimension_numbers<[1], [0], [0], [1], [0, 0, 1, 1], [], []>} : vector<16x128xbf16>, vector<128x512xbf16>, vector<16x512xf32> -> vector<16x512xf32>
    %20 = arith.addf %16, %19 : vector<16x512xf32>
    %21 = vector.extract_strided_slice %20 {offsets = [0, 0], sizes = [16, 128], strides = [1, 1]} : vector<16x512xf32> to vector<16x128xf32>
    %cst_20 = arith.constant 5.000000e-01 : f32
    %22 = vector.broadcast %cst_20 : f32 to vector<16x128xf32>
    %23 = arith.mulf %22, %21 : vector<16x128xf32>
    %24 = math.tanh %23 : vector<16x128xf32>
    %cst_21 = arith.constant 5.000000e-01 : f32
    %25 = vector.broadcast %cst_21 : f32 to vector<16x128xf32>
    %26 = arith.mulf %25, %24 : vector<16x128xf32>
    %cst_22 = arith.constant 5.000000e-01 : f32
    %27 = vector.broadcast %cst_22 : f32 to vector<16x128xf32>
    %28 = arith.addf %26, %27 : vector<16x128xf32>
    %29 = vector.extract_strided_slice %20 {offsets = [0, 128], sizes = [16, 128], strides = [1, 1]} : vector<16x512xf32> to vector<16x128xf32>
    %cst_23 = arith.constant 5.000000e-01 : f32
    %30 = vector.broadcast %cst_23 : f32 to vector<16x128xf32>
    %31 = arith.mulf %30, %29 : vector<16x128xf32>
    %32 = math.tanh %31 : vector<16x128xf32>
    %cst_24 = arith.constant 5.000000e-01 : f32
    %33 = vector.broadcast %cst_24 : f32 to vector<16x128xf32>
    %34 = arith.mulf %33, %32 : vector<16x128xf32>
    %cst_25 = arith.constant 5.000000e-01 : f32
    %35 = vector.broadcast %cst_25 : f32 to vector<16x128xf32>
    %36 = arith.addf %34, %35 : vector<16x128xf32>
    %37 = vector.extract_strided_slice %20 {offsets = [0, 256], sizes = [16, 128], strides = [1, 1]} : vector<16x512xf32> to vector<16x128xf32>
    %38 = math.tanh %37 : vector<16x128xf32>
    %39 = vector.extract_strided_slice %20 {offsets = [0, 384], sizes = [16, 128], strides = [1, 1]} : vector<16x512xf32> to vector<16x128xf32>
    %cst_26 = arith.constant 5.000000e-01 : f32
    %40 = vector.broadcast %cst_26 : f32 to vector<16x128xf32>
    %41 = arith.mulf %40, %39 : vector<16x128xf32>
    %42 = math.tanh %41 : vector<16x128xf32>
    %cst_27 = arith.constant 5.000000e-01 : f32
    %43 = vector.broadcast %cst_27 : f32 to vector<16x128xf32>
    %44 = arith.mulf %43, %42 : vector<16x128xf32>
    %cst_28 = arith.constant 5.000000e-01 : f32
    %45 = vector.broadcast %cst_28 : f32 to vector<16x128xf32>
    %46 = arith.addf %44, %45 : vector<16x128xf32>
    %47 = arith.mulf %36, %13 : vector<16x128xf32>
    %48 = arith.mulf %28, %38 : vector<16x128xf32>
    %49 = arith.addf %47, %48 : vector<16x128xf32>
    %50 = math.tanh %49 : vector<16x128xf32>
    %51 = arith.mulf %46, %50 : vector<16x128xf32>
    %52 = arith.truncf %51 : vector<16x128xf32> to vector<16x128xbf16>
    %53 = arith.index_cast %c0_i32_14 : i32 to index
    %c0_29 = arith.constant 0 : index
    %c0_30 = arith.constant 0 : index
    %54 = vector.load %arg6[%53, %c0_29, %c0_30] : memref<8x16x128xbf16, #tpu.memory_space<vmem>>, vector<1x16x128xbf16>
    %55 = vector.shape_cast %54 : vector<1x16x128xbf16> to vector<16x128xbf16>
    %56 = vector.shape_cast %52 : vector<16x128xbf16> to vector<1x16x128xbf16>
    tpu.vector_store %arg6[%53, %c0_29, %c0_30], %56 {strides = array<i32>} : memref<8x16x128xbf16, #tpu.memory_space<vmem>>, vector<1x16x128xbf16>,
    %c1_i32 = arith.constant 1 : i32
    %57 = arith.index_cast %c1_i32 : i32 to index
    %c0_31 = arith.constant 0 : index
    %c0_32 = arith.constant 0 : index
    %58 = vector.load %arg7[%57, %c0_31, %c0_32] : memref<8x16x512xf32, #tpu.memory_space<vmem>>, vector<1x16x512xf32>
    %59 = vector.shape_cast %58 : vector<1x16x512xf32> to vector<16x512xf32>
    %60 = arith.truncf %51 : vector<16x128xf32> to vector<16x128xbf16>
    %c0_33 = arith.constant 0 : index
    %c0_34 = arith.constant 0 : index
    %61 = vector.load %arg4[%c0_33, %c0_34] : memref<128x512xbf16, #tpu.memory_space<vmem>>, vector<128x512xbf16>
    %cst_35 = arith.constant dense<0.000000e+00> : vector<16x512xf32>
    %62 = tpu.matmul %60, %61, %cst_35 {dimension_numbers = #tpu.dot_dimension_numbers<[1], [0], [0], [1], [0, 0, 1, 1], [], []>} : vector<16x128xbf16>, vector<128x512xbf16>, vector<16x512xf32> -> vector<16x512xf32>
    %63 = arith.addf %59, %62 : vector<16x512xf32>
    %64 = vector.extract_strided_slice %63 {offsets = [0, 0], sizes = [16, 128], strides = [1, 1]} : vector<16x512xf32> to vector<16x128xf32>
    %cst_36 = arith.constant 5.000000e-01 : f32
    %65 = vector.broadcast %cst_36 : f32 to vector<16x128xf32>
    %66 = arith.mulf %65, %64 : vector<16x128xf32>
    %67 = math.tanh %66 : vector<16x128xf32>
    %cst_37 = arith.constant 5.000000e-01 : f32
    %68 = vector.broadcast %cst_37 : f32 to vector<16x128xf32>
    %69 = arith.mulf %68, %67 : vector<16x128xf32>
    %cst_38 = arith.constant 5.000000e-01 : f32
    %70 = vector.broadcast %cst_38 : f32 to vector<16x128xf32>
    %71 = arith.addf %69, %70 : vector<16x128xf32>
    %72 = vector.extract_strided_slice %63 {offsets = [0, 128], sizes = [16, 128], strides = [1, 1]} : vector<16x512xf32> to vector<16x128xf32>
    %cst_39 = arith.constant 5.000000e-01 : f32
    %73 = vector.broadcast %cst_39 : f32 to vector<16x128xf32>
    %74 = arith.mulf %73, %72 : vector<16x128xf32>
    %75 = math.tanh %74 : vector<16x128xf32>
    %cst_40 = arith.constant 5.000000e-01 : f32
    %76 = vector.broadcast %cst_40 : f32 to vector<16x128xf32>
    %77 = arith.mulf %76, %75 : vector<16x128xf32>
    %cst_41 = arith.constant 5.000000e-01 : f32
    %78 = vector.broadcast %cst_41 : f32 to vector<16x128xf32>
    %79 = arith.addf %77, %78 : vector<16x128xf32>
    %80 = vector.extract_strided_slice %63 {offsets = [0, 256], sizes = [16, 128], strides = [1, 1]} : vector<16x512xf32> to vector<16x128xf32>
    %81 = math.tanh %80 : vector<16x128xf32>
    %82 = vector.extract_strided_slice %63 {offsets = [0, 384], sizes = [16, 128], strides = [1, 1]} : vector<16x512xf32> to vector<16x128xf32>
    %cst_42 = arith.constant 5.000000e-01 : f32
    %83 = vector.broadcast %cst_42 : f32 to vector<16x128xf32>
    %84 = arith.mulf %83, %82 : vector<16x128xf32>
    %85 = math.tanh %84 : vector<16x128xf32>
    %cst_43 = arith.constant 5.000000e-01 : f32
    %86 = vector.broadcast %cst_43 : f32 to vector<16x128xf32>
    %87 = arith.mulf %86, %85 : vector<16x128xf32>
    %cst_44 = arith.constant 5.000000e-01 : f32
    %88 = vector.broadcast %cst_44 : f32 to vector<16x128xf32>
    %89 = arith.addf %87, %88 : vector<16x128xf32>
    %90 = arith.mulf %79, %49 : vector<16x128xf32>
    %91 = arith.mulf %71, %81 : vector<16x128xf32>
    %92 = arith.addf %90, %91 : vector<16x128xf32>
    %93 = math.tanh %92 : vector<16x128xf32>
    %94 = arith.mulf %89, %93 : vector<16x128xf32>
    %95 = arith.truncf %94 : vector<16x128xf32> to vector<16x128xbf16>
    %96 = arith.index_cast %c1_i32 : i32 to index
    %c0_45 = arith.constant 0 : index
    %c0_46 = arith.constant 0 : index
    %97 = vector.load %arg6[%96, %c0_45, %c0_46] : memref<8x16x128xbf16, #tpu.memory_space<vmem>>, vector<1x16x128xbf16>
    %98 = vector.shape_cast %97 : vector<1x16x128xbf16> to vector<16x128xbf16>
    %99 = vector.shape_cast %95 : vector<16x128xbf16> to vector<1x16x128xbf16>
    tpu.vector_store %arg6[%96, %c0_45, %c0_46], %99 {strides = array<i32>} : memref<8x16x128xbf16, #tpu.memory_space<vmem>>, vector<1x16x128xbf16>,
    %c2_i32 = arith.constant 2 : i32
    %100 = arith.index_cast %c2_i32 : i32 to index
    %c0_47 = arith.constant 0 : index
    %c0_48 = arith.constant 0 : index
    %101 = vector.load %arg7[%100, %c0_47, %c0_48] : memref<8x16x512xf32, #tpu.memory_space<vmem>>, vector<1x16x512xf32>
    %102 = vector.shape_cast %101 : vector<1x16x512xf32> to vector<16x512xf32>
    %103 = arith.truncf %94 : vector<16x128xf32> to vector<16x128xbf16>
    %c0_49 = arith.constant 0 : index
    %c0_50 = arith.constant 0 : index
    %104 = vector.load %arg4[%c0_49, %c0_50] : memref<128x512xbf16, #tpu.memory_space<vmem>>, vector<128x512xbf16>
    %cst_51 = arith.constant dense<0.000000e+00> : vector<16x512xf32>
    %105 = tpu.matmul %103, %104, %cst_51 {dimension_numbers = #tpu.dot_dimension_numbers<[1], [0], [0], [1], [0, 0, 1, 1], [], []>} : vector<16x128xbf16>, vector<128x512xbf16>, vector<16x512xf32> -> vector<16x512xf32>
    %106 = arith.addf %102, %105 : vector<16x512xf32>
    %107 = vector.extract_strided_slice %106 {offsets = [0, 0], sizes = [16, 128], strides = [1, 1]} : vector<16x512xf32> to vector<16x128xf32>
    %cst_52 = arith.constant 5.000000e-01 : f32
    %108 = vector.broadcast %cst_52 : f32 to vector<16x128xf32>
    %109 = arith.mulf %108, %107 : vector<16x128xf32>
    %110 = math.tanh %109 : vector<16x128xf32>
    %cst_53 = arith.constant 5.000000e-01 : f32
    %111 = vector.broadcast %cst_53 : f32 to vector<16x128xf32>
    %112 = arith.mulf %111, %110 : vector<16x128xf32>
    %cst_54 = arith.constant 5.000000e-01 : f32
    %113 = vector.broadcast %cst_54 : f32 to vector<16x128xf32>
    %114 = arith.addf %112, %113 : vector<16x128xf32>
    %115 = vector.extract_strided_slice %106 {offsets = [0, 128], sizes = [16, 128], strides = [1, 1]} : vector<16x512xf32> to vector<16x128xf32>
    %cst_55 = arith.constant 5.000000e-01 : f32
    %116 = vector.broadcast %cst_55 : f32 to vector<16x128xf32>
    %117 = arith.mulf %116, %115 : vector<16x128xf32>
    %118 = math.tanh %117 : vector<16x128xf32>
    %cst_56 = arith.constant 5.000000e-01 : f32
    %119 = vector.broadcast %cst_56 : f32 to vector<16x128xf32>
    %120 = arith.mulf %119, %118 : vector<16x128xf32>
    %cst_57 = arith.constant 5.000000e-01 : f32
    %121 = vector.broadcast %cst_57 : f32 to vector<16x128xf32>
    %122 = arith.addf %120, %121 : vector<16x128xf32>
    %123 = vector.extract_strided_slice %106 {offsets = [0, 256], sizes = [16, 128], strides = [1, 1]} : vector<16x512xf32> to vector<16x128xf32>
    %124 = math.tanh %123 : vector<16x128xf32>
    %125 = vector.extract_strided_slice %106 {offsets = [0, 384], sizes = [16, 128], strides = [1, 1]} : vector<16x512xf32> to vector<16x128xf32>
    %cst_58 = arith.constant 5.000000e-01 : f32
    %126 = vector.broadcast %cst_58 : f32 to vector<16x128xf32>
    %127 = arith.mulf %126, %125 : vector<16x128xf32>
    %128 = math.tanh %127 : vector<16x128xf32>
    %cst_59 = arith.constant 5.000000e-01 : f32
    %129 = vector.broadcast %cst_59 : f32 to vector<16x128xf32>
    %130 = arith.mulf %129, %128 : vector<16x128xf32>
    %cst_60 = arith.constant 5.000000e-01 : f32
    %131 = vector.broadcast %cst_60 : f32 to vector<16x128xf32>
    %132 = arith.addf %130, %131 : vector<16x128xf32>
    %133 = arith.mulf %122, %92 : vector<16x128xf32>
    %134 = arith.mulf %114, %124 : vector<16x128xf32>
    %135 = arith.addf %133, %134 : vector<16x128xf32>
    %136 = math.tanh %135 : vector<16x128xf32>
    %137 = arith.mulf %132, %136 : vector<16x128xf32>
    %138 = arith.truncf %137 : vector<16x128xf32> to vector<16x128xbf16>
    %139 = arith.index_cast %c2_i32 : i32 to index
    %c0_61 = arith.constant 0 : index
    %c0_62 = arith.constant 0 : index
    %140 = vector.load %arg6[%139, %c0_61, %c0_62] : memref<8x16x128xbf16, #tpu.memory_space<vmem>>, vector<1x16x128xbf16>
    %141 = vector.shape_cast %140 : vector<1x16x128xbf16> to vector<16x128xbf16>
    %142 = vector.shape_cast %138 : vector<16x128xbf16> to vector<1x16x128xbf16>
    tpu.vector_store %arg6[%139, %c0_61, %c0_62], %142 {strides = array<i32>} : memref<8x16x128xbf16, #tpu.memory_space<vmem>>, vector<1x16x128xbf16>,
    %c3_i32 = arith.constant 3 : i32
    %143 = arith.index_cast %c3_i32 : i32 to index
    %c0_63 = arith.constant 0 : index
    %c0_64 = arith.constant 0 : index
    %144 = vector.load %arg7[%143, %c0_63, %c0_64] : memref<8x16x512xf32, #tpu.memory_space<vmem>>, vector<1x16x512xf32>
    %145 = vector.shape_cast %144 : vector<1x16x512xf32> to vector<16x512xf32>
    %146 = arith.truncf %137 : vector<16x128xf32> to vector<16x128xbf16>
    %c0_65 = arith.constant 0 : index
    %c0_66 = arith.constant 0 : index
    %147 = vector.load %arg4[%c0_65, %c0_66] : memref<128x512xbf16, #tpu.memory_space<vmem>>, vector<128x512xbf16>
    %cst_67 = arith.constant dense<0.000000e+00> : vector<16x512xf32>
    %148 = tpu.matmul %146, %147, %cst_67 {dimension_numbers = #tpu.dot_dimension_numbers<[1], [0], [0], [1], [0, 0, 1, 1], [], []>} : vector<16x128xbf16>, vector<128x512xbf16>, vector<16x512xf32> -> vector<16x512xf32>
    %149 = arith.addf %145, %148 : vector<16x512xf32>
    %150 = vector.extract_strided_slice %149 {offsets = [0, 0], sizes = [16, 128], strides = [1, 1]} : vector<16x512xf32> to vector<16x128xf32>
    %cst_68 = arith.constant 5.000000e-01 : f32
    %151 = vector.broadcast %cst_68 : f32 to vector<16x128xf32>
    %152 = arith.mulf %151, %150 : vector<16x128xf32>
    %153 = math.tanh %152 : vector<16x128xf32>
    %cst_69 = arith.constant 5.000000e-01 : f32
    %154 = vector.broadcast %cst_69 : f32 to vector<16x128xf32>
    %155 = arith.mulf %154, %153 : vector<16x128xf32>
    %cst_70 = arith.constant 5.000000e-01 : f32
    %156 = vector.broadcast %cst_70 : f32 to vector<16x128xf32>
    %157 = arith.addf %155, %156 : vector<16x128xf32>
    %158 = vector.extract_strided_slice %149 {offsets = [0, 128], sizes = [16, 128], strides = [1, 1]} : vector<16x512xf32> to vector<16x128xf32>
    %cst_71 = arith.constant 5.000000e-01 : f32
    %159 = vector.broadcast %cst_71 : f32 to vector<16x128xf32>
    %160 = arith.mulf %159, %158 : vector<16x128xf32>
    %161 = math.tanh %160 : vector<16x128xf32>
    %cst_72 = arith.constant 5.000000e-01 : f32
    %162 = vector.broadcast %cst_72 : f32 to vector<16x128xf32>
    %163 = arith.mulf %162, %161 : vector<16x128xf32>
    %cst_73 = arith.constant 5.000000e-01 : f32
    %164 = vector.broadcast %cst_73 : f32 to vector<16x128xf32>
    %165 = arith.addf %163, %164 : vector<16x128xf32>
    %166 = vector.extract_strided_slice %149 {offsets = [0, 256], sizes = [16, 128], strides = [1, 1]} : vector<16x512xf32> to vector<16x128xf32>
    %167 = math.tanh %166 : vector<16x128xf32>
    %168 = vector.extract_strided_slice %149 {offsets = [0, 384], sizes = [16, 128], strides = [1, 1]} : vector<16x512xf32> to vector<16x128xf32>
    %cst_74 = arith.constant 5.000000e-01 : f32
    %169 = vector.broadcast %cst_74 : f32 to vector<16x128xf32>
    %170 = arith.mulf %169, %168 : vector<16x128xf32>
    %171 = math.tanh %170 : vector<16x128xf32>
    %cst_75 = arith.constant 5.000000e-01 : f32
    %172 = vector.broadcast %cst_75 : f32 to vector<16x128xf32>
    %173 = arith.mulf %172, %171 : vector<16x128xf32>
    %cst_76 = arith.constant 5.000000e-01 : f32
    %174 = vector.broadcast %cst_76 : f32 to vector<16x128xf32>
    %175 = arith.addf %173, %174 : vector<16x128xf32>
    %176 = arith.mulf %165, %135 : vector<16x128xf32>
    %177 = arith.mulf %157, %167 : vector<16x128xf32>
    %178 = arith.addf %176, %177 : vector<16x128xf32>
    %179 = math.tanh %178 : vector<16x128xf32>
    %180 = arith.mulf %175, %179 : vector<16x128xf32>
    %181 = arith.truncf %180 : vector<16x128xf32> to vector<16x128xbf16>
    %182 = arith.index_cast %c3_i32 : i32 to index
    %c0_77 = arith.constant 0 : index
    %c0_78 = arith.constant 0 : index
    %183 = vector.load %arg6[%182, %c0_77, %c0_78] : memref<8x16x128xbf16, #tpu.memory_space<vmem>>, vector<1x16x128xbf16>
    %184 = vector.shape_cast %183 : vector<1x16x128xbf16> to vector<16x128xbf16>
    %185 = vector.shape_cast %181 : vector<16x128xbf16> to vector<1x16x128xbf16>
    tpu.vector_store %arg6[%182, %c0_77, %c0_78], %185 {strides = array<i32>} : memref<8x16x128xbf16, #tpu.memory_space<vmem>>, vector<1x16x128xbf16>,
    %c4_i32 = arith.constant 4 : i32
    %186 = arith.index_cast %c4_i32 : i32 to index
    %c0_79 = arith.constant 0 : index
    %c0_80 = arith.constant 0 : index
    %187 = vector.load %arg7[%186, %c0_79, %c0_80] : memref<8x16x512xf32, #tpu.memory_space<vmem>>, vector<1x16x512xf32>
    %188 = vector.shape_cast %187 : vector<1x16x512xf32> to vector<16x512xf32>
    %189 = arith.truncf %180 : vector<16x128xf32> to vector<16x128xbf16>
    %c0_81 = arith.constant 0 : index
    %c0_82 = arith.constant 0 : index
    %190 = vector.load %arg4[%c0_81, %c0_82] : memref<128x512xbf16, #tpu.memory_space<vmem>>, vector<128x512xbf16>
    %cst_83 = arith.constant dense<0.000000e+00> : vector<16x512xf32>
    %191 = tpu.matmul %189, %190, %cst_83 {dimension_numbers = #tpu.dot_dimension_numbers<[1], [0], [0], [1], [0, 0, 1, 1], [], []>} : vector<16x128xbf16>, vector<128x512xbf16>, vector<16x512xf32> -> vector<16x512xf32>
    %192 = arith.addf %188, %191 : vector<16x512xf32>
    %193 = vector.extract_strided_slice %192 {offsets = [0, 0], sizes = [16, 128], strides = [1, 1]} : vector<16x512xf32> to vector<16x128xf32>
    %cst_84 = arith.constant 5.000000e-01 : f32
    %194 = vector.broadcast %cst_84 : f32 to vector<16x128xf32>
    %195 = arith.mulf %194, %193 : vector<16x128xf32>
    %196 = math.tanh %195 : vector<16x128xf32>
    %cst_85 = arith.constant 5.000000e-01 : f32
    %197 = vector.broadcast %cst_85 : f32 to vector<16x128xf32>
    %198 = arith.mulf %197, %196 : vector<16x128xf32>
    %cst_86 = arith.constant 5.000000e-01 : f32
    %199 = vector.broadcast %cst_86 : f32 to vector<16x128xf32>
    %200 = arith.addf %198, %199 : vector<16x128xf32>
    %201 = vector.extract_strided_slice %192 {offsets = [0, 128], sizes = [16, 128], strides = [1, 1]} : vector<16x512xf32> to vector<16x128xf32>
    %cst_87 = arith.constant 5.000000e-01 : f32
    %202 = vector.broadcast %cst_87 : f32 to vector<16x128xf32>
    %203 = arith.mulf %202, %201 : vector<16x128xf32>
    %204 = math.tanh %203 : vector<16x128xf32>
    %cst_88 = arith.constant 5.000000e-01 : f32
    %205 = vector.broadcast %cst_88 : f32 to vector<16x128xf32>
    %206 = arith.mulf %205, %204 : vector<16x128xf32>
    %cst_89 = arith.constant 5.000000e-01 : f32
    %207 = vector.broadcast %cst_89 : f32 to vector<16x128xf32>
    %208 = arith.addf %206, %207 : vector<16x128xf32>
    %209 = vector.extract_strided_slice %192 {offsets = [0, 256], sizes = [16, 128], strides = [1, 1]} : vector<16x512xf32> to vector<16x128xf32>
    %210 = math.tanh %209 : vector<16x128xf32>
    %211 = vector.extract_strided_slice %192 {offsets = [0, 384], sizes = [16, 128], strides = [1, 1]} : vector<16x512xf32> to vector<16x128xf32>
    %cst_90 = arith.constant 5.000000e-01 : f32
    %212 = vector.broadcast %cst_90 : f32 to vector<16x128xf32>
    %213 = arith.mulf %212, %211 : vector<16x128xf32>
    %214 = math.tanh %213 : vector<16x128xf32>
    %cst_91 = arith.constant 5.000000e-01 : f32
    %215 = vector.broadcast %cst_91 : f32 to vector<16x128xf32>
    %216 = arith.mulf %215, %214 : vector<16x128xf32>
    %cst_92 = arith.constant 5.000000e-01 : f32
    %217 = vector.broadcast %cst_92 : f32 to vector<16x128xf32>
    %218 = arith.addf %216, %217 : vector<16x128xf32>
    %219 = arith.mulf %208, %178 : vector<16x128xf32>
    %220 = arith.mulf %200, %210 : vector<16x128xf32>
    %221 = arith.addf %219, %220 : vector<16x128xf32>
    %222 = math.tanh %221 : vector<16x128xf32>
    %223 = arith.mulf %218, %222 : vector<16x128xf32>
    %224 = arith.truncf %223 : vector<16x128xf32> to vector<16x128xbf16>
    %225 = arith.index_cast %c4_i32 : i32 to index
    %c0_93 = arith.constant 0 : index
    %c0_94 = arith.constant 0 : index
    %226 = vector.load %arg6[%225, %c0_93, %c0_94] : memref<8x16x128xbf16, #tpu.memory_space<vmem>>, vector<1x16x128xbf16>
    %227 = vector.shape_cast %226 : vector<1x16x128xbf16> to vector<16x128xbf16>
    %228 = vector.shape_cast %224 : vector<16x128xbf16> to vector<1x16x128xbf16>
    tpu.vector_store %arg6[%225, %c0_93, %c0_94], %228 {strides = array<i32>} : memref<8x16x128xbf16, #tpu.memory_space<vmem>>, vector<1x16x128xbf16>,
    %c5_i32 = arith.constant 5 : i32
    %229 = arith.index_cast %c5_i32 : i32 to index
    %c0_95 = arith.constant 0 : index
    %c0_96 = arith.constant 0 : index
    %230 = vector.load %arg7[%229, %c0_95, %c0_96] : memref<8x16x512xf32, #tpu.memory_space<vmem>>, vector<1x16x512xf32>
    %231 = vector.shape_cast %230 : vector<1x16x512xf32> to vector<16x512xf32>
    %232 = arith.truncf %223 : vector<16x128xf32> to vector<16x128xbf16>
    %c0_97 = arith.constant 0 : index
    %c0_98 = arith.constant 0 : index
    %233 = vector.load %arg4[%c0_97, %c0_98] : memref<128x512xbf16, #tpu.memory_space<vmem>>, vector<128x512xbf16>
    %cst_99 = arith.constant dense<0.000000e+00> : vector<16x512xf32>
    %234 = tpu.matmul %232, %233, %cst_99 {dimension_numbers = #tpu.dot_dimension_numbers<[1], [0], [0], [1], [0, 0, 1, 1], [], []>} : vector<16x128xbf16>, vector<128x512xbf16>, vector<16x512xf32> -> vector<16x512xf32>
    %235 = arith.addf %231, %234 : vector<16x512xf32>
    %236 = vector.extract_strided_slice %235 {offsets = [0, 0], sizes = [16, 128], strides = [1, 1]} : vector<16x512xf32> to vector<16x128xf32>
    %cst_100 = arith.constant 5.000000e-01 : f32
    %237 = vector.broadcast %cst_100 : f32 to vector<16x128xf32>
    %238 = arith.mulf %237, %236 : vector<16x128xf32>
    %239 = math.tanh %238 : vector<16x128xf32>
    %cst_101 = arith.constant 5.000000e-01 : f32
    %240 = vector.broadcast %cst_101 : f32 to vector<16x128xf32>
    %241 = arith.mulf %240, %239 : vector<16x128xf32>
    %cst_102 = arith.constant 5.000000e-01 : f32
    %242 = vector.broadcast %cst_102 : f32 to vector<16x128xf32>
    %243 = arith.addf %241, %242 : vector<16x128xf32>
    %244 = vector.extract_strided_slice %235 {offsets = [0, 128], sizes = [16, 128], strides = [1, 1]} : vector<16x512xf32> to vector<16x128xf32>
    %cst_103 = arith.constant 5.000000e-01 : f32
    %245 = vector.broadcast %cst_103 : f32 to vector<16x128xf32>
    %246 = arith.mulf %245, %244 : vector<16x128xf32>
    %247 = math.tanh %246 : vector<16x128xf32>
    %cst_104 = arith.constant 5.000000e-01 : f32
    %248 = vector.broadcast %cst_104 : f32 to vector<16x128xf32>
    %249 = arith.mulf %248, %247 : vector<16x128xf32>
    %cst_105 = arith.constant 5.000000e-01 : f32
    %250 = vector.broadcast %cst_105 : f32 to vector<16x128xf32>
    %251 = arith.addf %249, %250 : vector<16x128xf32>
    %252 = vector.extract_strided_slice %235 {offsets = [0, 256], sizes = [16, 128], strides = [1, 1]} : vector<16x512xf32> to vector<16x128xf32>
    %253 = math.tanh %252 : vector<16x128xf32>
    %254 = vector.extract_strided_slice %235 {offsets = [0, 384], sizes = [16, 128], strides = [1, 1]} : vector<16x512xf32> to vector<16x128xf32>
    %cst_106 = arith.constant 5.000000e-01 : f32
    %255 = vector.broadcast %cst_106 : f32 to vector<16x128xf32>
    %256 = arith.mulf %255, %254 : vector<16x128xf32>
    %257 = math.tanh %256 : vector<16x128xf32>
    %cst_107 = arith.constant 5.000000e-01 : f32
    %258 = vector.broadcast %cst_107 : f32 to vector<16x128xf32>
    %259 = arith.mulf %258, %257 : vector<16x128xf32>
    %cst_108 = arith.constant 5.000000e-01 : f32
    %260 = vector.broadcast %cst_108 : f32 to vector<16x128xf32>
    %261 = arith.addf %259, %260 : vector<16x128xf32>
    %262 = arith.mulf %251, %221 : vector<16x128xf32>
    %263 = arith.mulf %243, %253 : vector<16x128xf32>
    %264 = arith.addf %262, %263 : vector<16x128xf32>
    %265 = math.tanh %264 : vector<16x128xf32>
    %266 = arith.mulf %261, %265 : vector<16x128xf32>
    %267 = arith.truncf %266 : vector<16x128xf32> to vector<16x128xbf16>
    %268 = arith.index_cast %c5_i32 : i32 to index
    %c0_109 = arith.constant 0 : index
    %c0_110 = arith.constant 0 : index
    %269 = vector.load %arg6[%268, %c0_109, %c0_110] : memref<8x16x128xbf16, #tpu.memory_space<vmem>>, vector<1x16x128xbf16>
    %270 = vector.shape_cast %269 : vector<1x16x128xbf16> to vector<16x128xbf16>
    %271 = vector.shape_cast %267 : vector<16x128xbf16> to vector<1x16x128xbf16>
    tpu.vector_store %arg6[%268, %c0_109, %c0_110], %271 {strides = array<i32>} : memref<8x16x128xbf16, #tpu.memory_space<vmem>>, vector<1x16x128xbf16>,
    %c6_i32 = arith.constant 6 : i32
    %272 = arith.index_cast %c6_i32 : i32 to index
    %c0_111 = arith.constant 0 : index
    %c0_112 = arith.constant 0 : index
    %273 = vector.load %arg7[%272, %c0_111, %c0_112] : memref<8x16x512xf32, #tpu.memory_space<vmem>>, vector<1x16x512xf32>
    %274 = vector.shape_cast %273 : vector<1x16x512xf32> to vector<16x512xf32>
    %275 = arith.truncf %266 : vector<16x128xf32> to vector<16x128xbf16>
    %c0_113 = arith.constant 0 : index
    %c0_114 = arith.constant 0 : index
    %276 = vector.load %arg4[%c0_113, %c0_114] : memref<128x512xbf16, #tpu.memory_space<vmem>>, vector<128x512xbf16>
    %cst_115 = arith.constant dense<0.000000e+00> : vector<16x512xf32>
    %277 = tpu.matmul %275, %276, %cst_115 {dimension_numbers = #tpu.dot_dimension_numbers<[1], [0], [0], [1], [0, 0, 1, 1], [], []>} : vector<16x128xbf16>, vector<128x512xbf16>, vector<16x512xf32> -> vector<16x512xf32>
    %278 = arith.addf %274, %277 : vector<16x512xf32>
    %279 = vector.extract_strided_slice %278 {offsets = [0, 0], sizes = [16, 128], strides = [1, 1]} : vector<16x512xf32> to vector<16x128xf32>
    %cst_116 = arith.constant 5.000000e-01 : f32
    %280 = vector.broadcast %cst_116 : f32 to vector<16x128xf32>
    %281 = arith.mulf %280, %279 : vector<16x128xf32>
    %282 = math.tanh %281 : vector<16x128xf32>
    %cst_117 = arith.constant 5.000000e-01 : f32
    %283 = vector.broadcast %cst_117 : f32 to vector<16x128xf32>
    %284 = arith.mulf %283, %282 : vector<16x128xf32>
    %cst_118 = arith.constant 5.000000e-01 : f32
    %285 = vector.broadcast %cst_118 : f32 to vector<16x128xf32>
    %286 = arith.addf %284, %285 : vector<16x128xf32>
    %287 = vector.extract_strided_slice %278 {offsets = [0, 128], sizes = [16, 128], strides = [1, 1]} : vector<16x512xf32> to vector<16x128xf32>
    %cst_119 = arith.constant 5.000000e-01 : f32
    %288 = vector.broadcast %cst_119 : f32 to vector<16x128xf32>
    %289 = arith.mulf %288, %287 : vector<16x128xf32>
    %290 = math.tanh %289 : vector<16x128xf32>
    %cst_120 = arith.constant 5.000000e-01 : f32
    %291 = vector.broadcast %cst_120 : f32 to vector<16x128xf32>
    %292 = arith.mulf %291, %290 : vector<16x128xf32>
    %cst_121 = arith.constant 5.000000e-01 : f32
    %293 = vector.broadcast %cst_121 : f32 to vector<16x128xf32>
    %294 = arith.addf %292, %293 : vector<16x128xf32>
    %295 = vector.extract_strided_slice %278 {offsets = [0, 256], sizes = [16, 128], strides = [1, 1]} : vector<16x512xf32> to vector<16x128xf32>
    %296 = math.tanh %295 : vector<16x128xf32>
    %297 = vector.extract_strided_slice %278 {offsets = [0, 384], sizes = [16, 128], strides = [1, 1]} : vector<16x512xf32> to vector<16x128xf32>
    %cst_122 = arith.constant 5.000000e-01 : f32
    %298 = vector.broadcast %cst_122 : f32 to vector<16x128xf32>
    %299 = arith.mulf %298, %297 : vector<16x128xf32>
    %300 = math.tanh %299 : vector<16x128xf32>
    %cst_123 = arith.constant 5.000000e-01 : f32
    %301 = vector.broadcast %cst_123 : f32 to vector<16x128xf32>
    %302 = arith.mulf %301, %300 : vector<16x128xf32>
    %cst_124 = arith.constant 5.000000e-01 : f32
    %303 = vector.broadcast %cst_124 : f32 to vector<16x128xf32>
    %304 = arith.addf %302, %303 : vector<16x128xf32>
    %305 = arith.mulf %294, %264 : vector<16x128xf32>
    %306 = arith.mulf %286, %296 : vector<16x128xf32>
    %307 = arith.addf %305, %306 : vector<16x128xf32>
    %308 = math.tanh %307 : vector<16x128xf32>
    %309 = arith.mulf %304, %308 : vector<16x128xf32>
    %310 = arith.truncf %309 : vector<16x128xf32> to vector<16x128xbf16>
    %311 = arith.index_cast %c6_i32 : i32 to index
    %c0_125 = arith.constant 0 : index
    %c0_126 = arith.constant 0 : index
    %312 = vector.load %arg6[%311, %c0_125, %c0_126] : memref<8x16x128xbf16, #tpu.memory_space<vmem>>, vector<1x16x128xbf16>
    %313 = vector.shape_cast %312 : vector<1x16x128xbf16> to vector<16x128xbf16>
    %314 = vector.shape_cast %310 : vector<16x128xbf16> to vector<1x16x128xbf16>
    tpu.vector_store %arg6[%311, %c0_125, %c0_126], %314 {strides = array<i32>} : memref<8x16x128xbf16, #tpu.memory_space<vmem>>, vector<1x16x128xbf16>,
    %c7_i32 = arith.constant 7 : i32
    %315 = arith.index_cast %c7_i32 : i32 to index
    %c0_127 = arith.constant 0 : index
    %c0_128 = arith.constant 0 : index
    %316 = vector.load %arg7[%315, %c0_127, %c0_128] : memref<8x16x512xf32, #tpu.memory_space<vmem>>, vector<1x16x512xf32>
    %317 = vector.shape_cast %316 : vector<1x16x512xf32> to vector<16x512xf32>
    %318 = arith.truncf %309 : vector<16x128xf32> to vector<16x128xbf16>
    %c0_129 = arith.constant 0 : index
    %c0_130 = arith.constant 0 : index
    %319 = vector.load %arg4[%c0_129, %c0_130] : memref<128x512xbf16, #tpu.memory_space<vmem>>, vector<128x512xbf16>
    %cst_131 = arith.constant dense<0.000000e+00> : vector<16x512xf32>
    %320 = tpu.matmul %318, %319, %cst_131 {dimension_numbers = #tpu.dot_dimension_numbers<[1], [0], [0], [1], [0, 0, 1, 1], [], []>} : vector<16x128xbf16>, vector<128x512xbf16>, vector<16x512xf32> -> vector<16x512xf32>
    %321 = arith.addf %317, %320 : vector<16x512xf32>
    %322 = vector.extract_strided_slice %321 {offsets = [0, 0], sizes = [16, 128], strides = [1, 1]} : vector<16x512xf32> to vector<16x128xf32>
    %cst_132 = arith.constant 5.000000e-01 : f32
    %323 = vector.broadcast %cst_132 : f32 to vector<16x128xf32>
    %324 = arith.mulf %323, %322 : vector<16x128xf32>
    %325 = math.tanh %324 : vector<16x128xf32>
    %cst_133 = arith.constant 5.000000e-01 : f32
    %326 = vector.broadcast %cst_133 : f32 to vector<16x128xf32>
    %327 = arith.mulf %326, %325 : vector<16x128xf32>
    %cst_134 = arith.constant 5.000000e-01 : f32
    %328 = vector.broadcast %cst_134 : f32 to vector<16x128xf32>
    %329 = arith.addf %327, %328 : vector<16x128xf32>
    %330 = vector.extract_strided_slice %321 {offsets = [0, 128], sizes = [16, 128], strides = [1, 1]} : vector<16x512xf32> to vector<16x128xf32>
    %cst_135 = arith.constant 5.000000e-01 : f32
    %331 = vector.broadcast %cst_135 : f32 to vector<16x128xf32>
    %332 = arith.mulf %331, %330 : vector<16x128xf32>
    %333 = math.tanh %332 : vector<16x128xf32>
    %cst_136 = arith.constant 5.000000e-01 : f32
    %334 = vector.broadcast %cst_136 : f32 to vector<16x128xf32>
    %335 = arith.mulf %334, %333 : vector<16x128xf32>
    %cst_137 = arith.constant 5.000000e-01 : f32
    %336 = vector.broadcast %cst_137 : f32 to vector<16x128xf32>
    %337 = arith.addf %335, %336 : vector<16x128xf32>
    %338 = vector.extract_strided_slice %321 {offsets = [0, 256], sizes = [16, 128], strides = [1, 1]} : vector<16x512xf32> to vector<16x128xf32>
    %339 = math.tanh %338 : vector<16x128xf32>
    %340 = vector.extract_strided_slice %321 {offsets = [0, 384], sizes = [16, 128], strides = [1, 1]} : vector<16x512xf32> to vector<16x128xf32>
    %cst_138 = arith.constant 5.000000e-01 : f32
    %341 = vector.broadcast %cst_138 : f32 to vector<16x128xf32>
    %342 = arith.mulf %341, %340 : vector<16x128xf32>
    %343 = math.tanh %342 : vector<16x128xf32>
    %cst_139 = arith.constant 5.000000e-01 : f32
    %344 = vector.broadcast %cst_139 : f32 to vector<16x128xf32>
    %345 = arith.mulf %344, %343 : vector<16x128xf32>
    %cst_140 = arith.constant 5.000000e-01 : f32
    %346 = vector.broadcast %cst_140 : f32 to vector<16x128xf32>
    %347 = arith.addf %345, %346 : vector<16x128xf32>
    %348 = arith.mulf %337, %307 : vector<16x128xf32>
    %349 = arith.mulf %329, %339 : vector<16x128xf32>
    %350 = arith.addf %348, %349 : vector<16x128xf32>
    %351 = math.tanh %350 : vector<16x128xf32>
    %352 = arith.mulf %347, %351 : vector<16x128xf32>
    %353 = arith.truncf %352 : vector<16x128xf32> to vector<16x128xbf16>
    %354 = arith.index_cast %c7_i32 : i32 to index
    %c0_141 = arith.constant 0 : index
    %c0_142 = arith.constant 0 : index
    %355 = vector.load %arg6[%354, %c0_141, %c0_142] : memref<8x16x128xbf16, #tpu.memory_space<vmem>>, vector<1x16x128xbf16>
    %356 = vector.shape_cast %355 : vector<1x16x128xbf16> to vector<16x128xbf16>
    %357 = vector.shape_cast %353 : vector<16x128xbf16> to vector<1x16x128xbf16>
    tpu.vector_store %arg6[%354, %c0_141, %c0_142], %357 {strides = array<i32>} : memref<8x16x128xbf16, #tpu.memory_space<vmem>>, vector<1x16x128xbf16>,
    %c8_i32 = arith.constant 8 : i32
    %c0_143 = arith.constant 0 : index
    %c0_144 = arith.constant 0 : index
    %358 = vector.load %arg8[%c0_143, %c0_144] : memref<16x128xf32, #tpu.memory_space<vmem>>, vector<16x128xf32>
    tpu.vector_store %arg8[%c0_143, %c0_144], %352 {strides = array<i32>} : memref<16x128xf32, #tpu.memory_space<vmem>>, vector<16x128xf32>,
    %c0_145 = arith.constant 0 : index
    %c0_146 = arith.constant 0 : index
    %359 = vector.load %arg9[%c0_145, %c0_146] : memref<16x128xf32, #tpu.memory_space<vmem>>, vector<16x128xf32>
    tpu.vector_store %arg9[%c0_145, %c0_146], %350 {strides = array<i32>} : memref<16x128xf32, #tpu.memory_space<vmem>>, vector<16x128xf32>,
    return
  }
  func.func @transform_0(%arg0: i32, %arg1: i32) -> (i32, i32, i32) {
    %c0_i32 = arith.constant 0 : i32
    %c0_i32_0 = arith.constant 0 : i32
    return %arg1, %arg0, %c0_i32 : i32, i32, i32
  }
  func.func @transform_1(%arg0: i32, %arg1: i32) -> (i32, i32) {
    %c0_i32 = arith.constant 0 : i32
    %c0_i32_0 = arith.constant 0 : i32
    %c0_i32_1 = arith.constant 0 : i32
    return %c0_i32, %c0_i32_0 : i32, i32
  }
  func.func @transform_2(%arg0: i32, %arg1: i32) -> (i32, i32) {
    %c0_i32 = arith.constant 0 : i32
    %c0_i32_0 = arith.constant 0 : i32
    %c0_i32_1 = arith.constant 0 : i32
    return %c0_i32, %c0_i32_0 : i32, i32
  }
  func.func @transform_3(%arg0: i32, %arg1: i32) -> (i32, i32) {
    %c0_i32 = arith.constant 0 : i32
    %c0_i32_0 = arith.constant 0 : i32
    %c0_i32_1 = arith.constant 0 : i32
    return %c0_i32, %c0_i32_0 : i32, i32
  }
  func.func @transform_4(%arg0: i32, %arg1: i32) -> (i32, i32, i32) {
    %c0_i32 = arith.constant 0 : i32
    %c0_i32_0 = arith.constant 0 : i32
    return %arg1, %arg0, %c0_i32 : i32, i32, i32
  }
}

</mosaic_0001>

<llo_original>
// kernel: tpu_custom_call.1
$region0: #{tpu_custom_call.1}
  #allocation0 [shape = 'u32[]', space=smem, size = 0x4, offset = 0x4, fixed_abs, tag = 'smem constant byte address 0x4 - core index']
  #allocation1 [shape = 'u32[144,128]{1,0:T(1,128)}', space=vmem, size = 0x12000, scoped, tag = 'internal scratch']
  #allocation2 [shape = 'f32[8,16,512]{2,1,0:T(8,128)}', space=vmem, size = 0x40000, scoped, tag = 'scratch operand']
  #allocation3 [shape = 'f32[16,128]{1,0:T(8,128)}', space=vmem, size = 0x2000, scoped, tag = 'scratch operand']
  #allocation4 [shape = 'f32[16,128]{1,0:T(8,128)}', space=vmem, size = 0x2000, scoped, tag = 'scratch operand']
  %s0 = inlined_call_operand.hbm [shape: bf16[8,16,128], index: 0, kind: input, shape index: {}]
  %s1 = inlined_call_operand.hbm [shape: bf16[128,512], index: 1, kind: input, shape index: {}]
  %s2 = inlined_call_operand.hbm [shape: bf16[128,512], index: 2, kind: input, shape index: {}]
  %s3 = inlined_call_operand.vmem [shape: f32[1,512], index: 3, kind: input, shape index: {}]
  %s4 = inlined_call_operand.hbm [shape: bf16[8,16,128], index: 4, kind: output, shape index: {}]
  %s5 = sld [smem:[#allocation0]]
  $region42: #{tpu_custom_call.1} parent=0
    _
  %s7 = ssub.s32 1, %s5
  %s8 = scalar_select 0, %s7, %s5
  $region1: #{tpu_custom_call.1} parent=0
    #allocation5 [shape = 'u8[32768]{0}', space=vmem, size = 0x8000, scoped, tag = 'input window, operand 0, single buffered']
    #allocation6 [shape = 's32[1]{0}', space=sflag, size = 0x4, scoped, tag = 'scoped memory for tpu_custom_call.1']
    #allocation7 [shape = 's32[1]{0}', space=sflag, size = 0x4, scoped, tag = 'scoped memory for tpu_custom_call.1']
    #allocation8 [shape = 'u8[131072]{0}', space=vmem, size = 0x20000, scoped, tag = 'input window, operand 1, single buffered']
    #allocation9 [shape = 's32[1]{0}', space=sflag, size = 0x4, scoped, tag = 'scoped memory for tpu_custom_call.1']
    #allocation10 [shape = 'u8[131072]{0}', space=vmem, size = 0x20000, scoped, tag = 'input window, operand 2, single buffered']
    #allocation11 [shape = 'u8[32768]{0}', space=vmem, size = 0x8000, scoped, tag = 'output window, operand 0, single buffered']
    %9 = vsyncpa [#allocation6], 0
    %10 = vsyncpa [#allocation9], 0
    %11 = vsyncpa [#allocation7], 0
    // Predicated region
    $region2: #{tpu_custom_call.1} parent=1 // pred_check
      _
    $region3: #{tpu_custom_call.1} parent=1 // pred_check_branch
      %13 = sbr.rel (0) target = $region5
    $region4: #{tpu_custom_call.1} parent=1 // pred_region
      %s15 = ssub.s32 1024, 1024
      %16 = vsyncadd [#allocation6], %s15
      %s17 = sshll.u32 [#allocation5], 4
      %s18 = int_to_ptr.vmem [resolvable:$true] %s17
      %23 = dma.hbm_to_vmem [thread:$0]  %s0, 1024, %s18, [#allocation6], 64, 64, 4
    $region5: #{tpu_custom_call.1} parent=1 // pred_fallthru
      _
    // Predicated region
    $region6: #{tpu_custom_call.1} parent=1 // pred_check
      _
    $region7: #{tpu_custom_call.1} parent=1 // pred_check_branch
      %25 = sbr.rel (0) target = $region9
    $region8: #{tpu_custom_call.1} parent=1 // pred_region
      %s27 = ssub.s32 4096, 4096
      %28 = vsyncadd [#allocation9], %s27
      %s29 = sshll.u32 [#allocation8], 4
      %s30 = int_to_ptr.vmem [resolvable:$true] %s29
      %35 = dma.hbm_to_vmem [thread:$0]  %s1, 4096, %s30, [#allocation9], 256, 256, 16
    $region9: #{tpu_custom_call.1} parent=1 // pred_fallthru
      _
    // Predicated region
    $region10: #{tpu_custom_call.1} parent=1 // pred_check
      _
    $region11: #{tpu_custom_call.1} parent=1 // pred_check_branch
      %37 = sbr.rel (0) target = $region13
    $region12: #{tpu_custom_call.1} parent=1 // pred_region
      %s39 = ssub.s32 4096, 4096
      %40 = vsyncadd [#allocation9], %s39
      %s41 = sshll.u32 [#allocation10], 4
      %s42 = int_to_ptr.vmem [resolvable:$true] %s41
      %47 = dma.hbm_to_vmem [thread:$0]  %s2, 4096, %s42, [#allocation9], 256, 256, 16
    $region13: #{tpu_custom_call.1} parent=1 // pred_fallthru
      _
    // Predicated region
    $region14: #{tpu_custom_call.1} parent=1 // pred_check
      _
    $region15: #{tpu_custom_call.1} parent=1 // pred_check_branch
      %49 = sbr.rel (0) target = $region17
    $region16: #{tpu_custom_call.1} parent=1 // pred_region
      _
    $region17: #{tpu_custom_call.1} parent=1 // pred_fallthru
      _
    // Predicated region
    $region18: #{tpu_custom_call.1} parent=1 // pred_check
      _
    $region19: #{tpu_custom_call.1} parent=1 // pred_check_branch
      %51 = sbr.rel (0) target = $region21
    $region20: #{tpu_custom_call.1} parent=1 // pred_region
      %52 = dma.done [#allocation6], 1024
    $region21: #{tpu_custom_call.1} parent=1 // pred_fallthru
      _
    // Predicated region
    $region22: #{tpu_custom_call.1} parent=1 // pred_check
      _
    $region23: #{tpu_custom_call.1} parent=1 // pred_check_branch
      %54 = sbr.rel (0) target = $region25
    $region24: #{tpu_custom_call.1} parent=1 // pred_region
      %55 = dma.done [#allocation9], 4096
    $region25: #{tpu_custom_call.1} parent=1 // pred_fallthru
      _
    // Predicated region
    $region26: #{tpu_custom_call.1} parent=1 // pred_check
      _
    $region27: #{tpu_custom_call.1} parent=1 // pred_check_branch
      %57 = sbr.rel (0) target = $region29
    $region28: #{tpu_custom_call.1} parent=1 // pred_region
      %58 = dma.done [#allocation9], 4096
    $region29: #{tpu_custom_call.1} parent=1 // pred_fallthru
      _
    %p60 = scmp.eq.s32.totalorder 0, 0
    // Predicated region
    $region30: #{tpu_custom_call.1} parent=1 // pred_check
      %p61 = pneg %p60
    $region31: #{tpu_custom_call.1} parent=1 // pred_check_branch
      %63 = sbr.rel (%p61) target = $region33
    $region32: #{tpu_custom_call.1} parent=1 // pred_region
      %64 = vst [vmem:[#allocation3] sm:$0xff] 0.0
      %65 = vst [vmem:[#allocation3 + $0x8] sm:$0xff] 0.0
      %66 = vst [vmem:[#allocation4] sm:$0xff] 0.0
      %67 = vst [vmem:[#allocation4 + $0x8] sm:$0xff] 0.0
    $region33: #{tpu_custom_call.1} parent=1 // pred_fallthru
      _
    %v68 = vld [vmem:[#allocation5] sm:$0xf]
    %v69 = vld [vmem:[#allocation5 + $0x4] sm:$0xf]
    %v70 = vld [vmem:[#allocation5 + $0x8] sm:$0xf]
    %v71 = vld [vmem:[#allocation5 + $0xc] sm:$0xf]
    %v72 = vld [vmem:[#allocation5 + $0x10] sm:$0xf]
    %v73 = vld [vmem:[#allocation5 + $0x14] sm:$0xf]
    %v74 = vld [vmem:[#allocation5 + $0x18] sm:$0xf]
    %v75 = vld [vmem:[#allocation5 + $0x1c] sm:$0xf]
    %v76 = vld [vmem:[#allocation5 + $0x20] sm:$0xf]
    %v77 = vld [vmem:[#allocation5 + $0x24] sm:$0xf]
    %v78 = vld [vmem:[#allocation5 + $0x28] sm:$0xf]
    %v79 = vld [vmem:[#allocation5 + $0x2c] sm:$0xf]
    %v80 = vld [vmem:[#allocation5 + $0x30] sm:$0xf]
    %v81 = vld [vmem:[#allocation5 + $0x34] sm:$0xf]
    %v82 = vld [vmem:[#allocation5 + $0x38] sm:$0xf]
    %v83 = vld [vmem:[#allocation5 + $0x3c] sm:$0xf]
    %v84 = vld [vmem:[#allocation8] sm:$0xff]
    %v85 = vld [vmem:[#allocation8 + $0x8] sm:$0xff]
    %v86 = vld [vmem:[#allocation8 + $0x10] sm:$0xff]
    %v87 = vld [vmem:[#allocation8 + $0x18] sm:$0xff]
    %v88 = vld [vmem:[#allocation8 + $0x20] sm:$0xff]
    %v89 = vld [vmem:[#allocation8 + $0x28] sm:$0xff]
    %v90 = vld [vmem:[#allocation8 + $0x30] sm:$0xff]
    %v91 = vld [vmem:[#allocation8 + $0x38] sm:$0xff]
    %v92 = vld [vmem:[#allocation8 + $0x40] sm:$0xff]
    %v93 = vld [vmem:[#allocation8 + $0x48] sm:$0xff]
    %v94 = vld [vmem:[#allocation8 + $0x50] sm:$0xff]
    %v95 = vld [vmem:[#allocation8 + $0x58] sm:$0xff]
    %v96 = vld [vmem:[#allocation8 + $0x60] sm:$0xff]
    %v97 = vld [vmem:[#allocation8 + $0x68] sm:$0xff]
    %v98 = vld [vmem:[#allocation8 + $0x70] sm:$0xff]
    %v99 = vld [vmem:[#allocation8 + $0x78] sm:$0xff]
    %v100 = vld [vmem:[#allocation8 + $0x80] sm:$0xff]
    %v101 = vld [vmem:[#allocation8 + $0x88] sm:$0xff]
    %v102 = vld [vmem:[#allocation8 + $0x90] sm:$0xff]
    %v103 = vld [vmem:[#allocation8 + $0x98] sm:$0xff]
    %v104 = vld [vmem:[#allocation8 + $0xa0] sm:$0xff]
    %v105 = vld [vmem:[#allocation8 + $0xa8] sm:$0xff]
    %v106 = vld [vmem:[#allocation8 + $0xb0] sm:$0xff]
    %v107 = vld [vmem:[#allocation8 + $0xb8] sm:$0xff]
    %v108 = vld [vmem:[#allocation8 + $0xc0] sm:$0xff]
    %v109 = vld [vmem:[#allocation8 + $0xc8] sm:$0xff]
    %v110 = vld [vmem:[#allocation8 + $0xd0] sm:$0xff]
    %v111 = vld [vmem:[#allocation8 + $0xd8] sm:$0xff]
    %v112 = vld [vmem:[#allocation8 + $0xe0] sm:$0xff]
    %v113 = vld [vmem:[#allocation8 + $0xe8] sm:$0xff]
    %v114 = vld [vmem:[#allocation8 + $0xf0] sm:$0xff]
    %v115 = vld [vmem:[#allocation8 + $0xf8] sm:$0xff]
    %v116 = vld [vmem:[%s3] sm:$0xf]
    %v118 = vlaneseq
    %v119 = vshrl.u32 %v118, 7
    %v120 = vsub.s32 0, %v119
    %v121 = vrot.slane %v116, %v120
    %v122 = vlaneseq
    %v123 = vshrl.u32 %v122, 7
    %v124 = vsub.s32 1, %v123
    %v125 = vrot.slane %v116, %v124
    %v126 = vlaneseq
    %v127 = vshrl.u32 %v126, 7
    %v128 = vsub.s32 2, %v127
    %v129 = vrot.slane %v116, %v128
    %v130 = vlaneseq
    %v131 = vshrl.u32 %v130, 7
    %v132 = vsub.s32 3, %v131
    %v133 = vrot.slane %v116, %v132
    %v154 = vunpack.c.l.b16 %v68
    %v155 = vunpack.c.l.b16 %v69
    %v156 = vunpack.c.l.b16 %v70
    %v157 = vunpack.c.l.b16 %v71
    %v158 = vunpack.c.l.b16 %v72
    %v159 = vunpack.c.l.b16 %v73
    %v160 = vunpack.c.l.b16 %v74
    %v161 = vunpack.c.l.b16 %v75
    %v162 = vunpack.c.l.b16 %v76
    %v163 = vunpack.c.l.b16 %v77
    %v164 = vunpack.c.l.b16 %v78
    %v165 = vunpack.c.l.b16 %v79
    %v166 = vunpack.c.l.b16 %v80
    %v167 = vunpack.c.l.b16 %v81
    %v168 = vunpack.c.l.b16 %v82
    %v169 = vunpack.c.l.b16 %v83
    %v170 = vpack.c.b16 %v155, %v154
    %v171 = vpack.c.b16 %v157, %v156
    %v172 = vpack.c.b16 %v159, %v158
    %v173 = vpack.c.b16 %v161, %v160
    %v174 = vpack.c.b16 %v163, %v162
    %v175 = vpack.c.b16 %v165, %v164
    %v176 = vpack.c.b16 %v167, %v166
    %v177 = vpack.c.b16 %v169, %v168
    %v218 = vunpack.c.l.b16 %v84
    %v219 = vunpack.c.h.b16 %v84
    %v220 = vunpack.c.l.b16 %v85
    %v221 = vunpack.c.h.b16 %v85
    %v222 = vunpack.c.l.b16 %v86
    %v223 = vunpack.c.h.b16 %v86
    %v224 = vunpack.c.l.b16 %v87
    %v225 = vunpack.c.h.b16 %v87
    %v226 = vunpack.c.l.b16 %v88
    %v227 = vunpack.c.h.b16 %v88
    %v228 = vunpack.c.l.b16 %v89
    %v229 = vunpack.c.h.b16 %v89
    %v230 = vunpack.c.l.b16 %v90
    %v231 = vunpack.c.h.b16 %v90
    %v232 = vunpack.c.l.b16 %v91
    %v233 = vunpack.c.h.b16 %v91
    %v234 = vunpack.c.l.b16 %v92
    %v235 = vunpack.c.h.b16 %v92
    %v236 = vunpack.c.l.b16 %v93
    %v237 = vunpack.c.h.b16 %v93
    %v238 = vunpack.c.l.b16 %v94
    %v239 = vunpack.c.h.b16 %v94
    %v240 = vunpack.c.l.b16 %v95
    %v241 = vunpack.c.h.b16 %v95
    %v242 = vunpack.c.l.b16 %v96
    %v243 = vunpack.c.h.b16 %v96
    %v244 = vunpack.c.l.b16 %v97
    %v245 = vunpack.c.h.b16 %v97
    %v246 = vunpack.c.l.b16 %v98
    %v247 = vunpack.c.h.b16 %v98
    %v248 = vunpack.c.l.b16 %v99
    %v249 = vunpack.c.h.b16 %v99
    %v250 = vunpack.c.l.b16 %v100
    %v251 = vunpack.c.h.b16 %v100
    %v252 = vunpack.c.l.b16 %v101
    %v253 = vunpack.c.h.b16 %v101
    %v254 = vunpack.c.l.b16 %v102
    %v255 = vunpack.c.h.b16 %v102
    %v256 = vunpack.c.l.b16 %v103
    %v257 = vunpack.c.h.b16 %v103
    %v258 = vunpack.c.l.b16 %v104
    %v259 = vunpack.c.h.b16 %v104
    %v260 = vunpack.c.l.b16 %v105
    %v261 = vunpack.c.h.b16 %v105
    %v262 = vunpack.c.l.b16 %v106
    %v263 = vunpack.c.h.b16 %v106
    %v264 = vunpack.c.l.b16 %v107
    %v265 = vunpack.c.h.b16 %v107
    %v266 = vunpack.c.l.b16 %v108
    %v267 = vunpack.c.h.b16 %v108
    %v268 = vunpack.c.l.b16 %v109
    %v269 = vunpack.c.h.b16 %v109
    %v270 = vunpack.c.l.b16 %v110
    %v271 = vunpack.c.h.b16 %v110
    %v272 = vunpack.c.l.b16 %v111
    %v273 = vunpack.c.h.b16 %v111
    %v274 = vunpack.c.l.b16 %v112
    %v275 = vunpack.c.h.b16 %v112
    %v276 = vunpack.c.l.b16 %v113
    %v277 = vunpack.c.h.b16 %v113
    %v278 = vunpack.c.l.b16 %v114
    %v279 = vunpack.c.h.b16 %v114
    %v280 = vunpack.c.l.b16 %v115
    %v281 = vunpack.c.h.b16 %v115
    %v282 = vpack.c.b16 %v222, %v218
    %v283 = vpack.c.b16 %v223, %v219
    %v284 = vpack.c.b16 %v224, %v220
    %v285 = vpack.c.b16 %v225, %v221
    %v286 = vpack.c.b16 %v230, %v226
    %v287 = vpack.c.b16 %v231, %v227
    %v288 = vpack.c.b16 %v232, %v228
    %v289 = vpack.c.b16 %v233, %v229
    %v290 = vpack.c.b16 %v238, %v234
    %v291 = vpack.c.b16 %v239, %v235
    %v292 = vpack.c.b16 %v240, %v236
    %v293 = vpack.c.b16 %v241, %v237
    %v294 = vpack.c.b16 %v246, %v242
    %v295 = vpack.c.b16 %v247, %v243
    %v296 = vpack.c.b16 %v248, %v244
    %v297 = vpack.c.b16 %v249, %v245
    %v298 = vpack.c.b16 %v254, %v250
    %v299 = vpack.c.b16 %v255, %v251
    %v300 = vpack.c.b16 %v256, %v252
    %v301 = vpack.c.b16 %v257, %v253
    %v302 = vpack.c.b16 %v262, %v258
    %v303 = vpack.c.b16 %v263, %v259
    %v304 = vpack.c.b16 %v264, %v260
    %v305 = vpack.c.b16 %v265, %v261
    %v306 = vpack.c.b16 %v270, %v266
    %v307 = vpack.c.b16 %v271, %v267
    %v308 = vpack.c.b16 %v272, %v268
    %v309 = vpack.c.b16 %v273, %v269
    %v310 = vpack.c.b16 %v278, %v274
    %v311 = vpack.c.b16 %v279, %v275
    %v312 = vpack.c.b16 %v280, %v276
    %v313 = vpack.c.b16 %v281, %v277
    %346 = vmatprep.subr.bf16.mxu0 %v311
    %347 = vmatpush1.bf16.msra.mxu0 %v310
    %348 = vmatprep.subr.bf16.mxu0 %v307
    %349 = vmatpush1.bf16.msra.mxu0 %v306
    %350 = vmatprep.subr.bf16.mxu0 %v303
    %351 = vmatpush1.bf16.msra.mxu0 %v302
    %352 = vmatprep.subr.bf16.mxu0 %v299
    %353 = vmatpush1.bf16.msra.mxu0 %v298
    %354 = vmatprep.subr.bf16.mxu0 %v295
    %355 = vmatpush1.bf16.msra.mxu0 %v294
    %356 = vmatprep.subr.bf16.mxu0 %v291
    %357 = vmatpush1.bf16.msra.mxu0 %v290
    %358 = vmatprep.subr.bf16.mxu0 %v287
    %359 = vmatpush1.bf16.msra.mxu0 %v286
    %360 = vmatprep.subr.bf16.mxu0 %v283
    %361 = vmatpush1.bf16.msra.mxu0 %v282
    %362 = vmatprep.subr.bf16.mxu0 0
    %363 = vmatpush2.bf16.msra.mxu0 0
    %364 = vmatprep.subr.bf16.mxu0 0
    %365 = vmatpush2.bf16.msra.mxu0 0
    %366 = vmatprep.subr.bf16.mxu0 0
    %367 = vmatpush2.bf16.msra.mxu0 0
    %368 = vmatprep.subr.bf16.mxu0 0
    %369 = vmatpush2.bf16.msra.mxu0 0
    %370 = vmatprep.subr.bf16.mxu0 0
    %371 = vmatpush2.bf16.msra.mxu0 0
    %372 = vmatprep.subr.bf16.mxu0 0
    %373 = vmatpush2.bf16.msra.mxu0 0
    %374 = vmatprep.subr.bf16.mxu0 0
    %375 = vmatpush2.bf16.msra.mxu0 0
    %376 = vmatprep.subr.bf16.mxu0 0
    %377 = vmatpush2.bf16.msra.mxu0 0
    %378 = vmatprep.mubr.bf16.mxu0 0
    %379 = vmatmul.mubr.bf16.gmra.mxu0 %v170
    %v380 = vpop.f32.mrf.mxu0
    %v381 = vadd.f32 %v121, %v380
    %v382 = vpop.f32.mrf.mxu0
    %v383 = vadd.f32 %v125, %v382
    %v384 = vpop.f32.mrf.mxu0
    %v385 = vadd.f32 %v121, %v384
    %v386 = vpop.f32.mrf.mxu0
    %v387 = vadd.f32 %v125, %v386
    %388 = vmatprep.mubr.bf16.mxu0 0
    %389 = vmatmul.mubr.bf16.gmra.mxu0 %v171
    %v390 = vpop.f32.mrf.mxu0
    %v391 = vadd.f32 %v121, %v390
    %v392 = vpop.f32.mrf.mxu0
    %v393 = vadd.f32 %v125, %v392
    %v394 = vpop.f32.mrf.mxu0
    %v395 = vadd.f32 %v121, %v394
    %v396 = vpop.f32.mrf.mxu0
    %v397 = vadd.f32 %v125, %v396
    %398 = vmatprep.mubr.bf16.mxu0 0
    %399 = vmatmul.mubr.bf16.gmra.mxu0 %v172
    %v400 = vpop.f32.mrf.mxu0
    %v401 = vadd.f32 %v121, %v400
    %v402 = vpop.f32.mrf.mxu0
    %v403 = vadd.f32 %v125, %v402
    %v404 = vpop.f32.mrf.mxu0
    %v405 = vadd.f32 %v121, %v404
    %v406 = vpop.f32.mrf.mxu0
    %v407 = vadd.f32 %v125, %v406
    %408 = vmatprep.mubr.bf16.mxu0 0
    %409 = vmatmul.mubr.bf16.gmra.mxu0 %v173
    %v410 = vpop.f32.mrf.mxu0
    %v411 = vadd.f32 %v121, %v410
    %v412 = vpop.f32.mrf.mxu0
    %v413 = vadd.f32 %v125, %v412
    %v414 = vpop.f32.mrf.mxu0
    %v415 = vadd.f32 %v121, %v414
    %v416 = vpop.f32.mrf.mxu0
    %v417 = vadd.f32 %v125, %v416
    %418 = vmatprep.mubr.bf16.mxu0 0
    %419 = vmatmul.mubr.bf16.gmra.mxu0 %v174
    %v420 = vpop.f32.mrf.mxu0
    %v421 = vadd.f32 %v121, %v420
    %v422 = vpop.f32.mrf.mxu0
    %v423 = vadd.f32 %v125, %v422
    %v424 = vpop.f32.mrf.mxu0
    %v425 = vadd.f32 %v121, %v424
    %v426 = vpop.f32.mrf.mxu0
    %v427 = vadd.f32 %v125, %v426
    %428 = vmatprep.mubr.bf16.mxu0 0
    %429 = vmatmul.mubr.bf16.gmra.mxu0 %v175
    %v430 = vpop.f32.mrf.mxu0
    %v431 = vadd.f32 %v121, %v430
    %v432 = vpop.f32.mrf.mxu0
    %v433 = vadd.f32 %v125, %v432
    %v434 = vpop.f32.mrf.mxu0
    %v435 = vadd.f32 %v121, %v434
    %v436 = vpop.f32.mrf.mxu0
    %v437 = vadd.f32 %v125, %v436
    %438 = vmatprep.mubr.bf16.mxu0 0
    %439 = vmatmul.mubr.bf16.gmra.mxu0 %v176
    %v440 = vpop.f32.mrf.mxu0
    %v441 = vadd.f32 %v121, %v440
    %v442 = vpop.f32.mrf.mxu0
    %v443 = vadd.f32 %v125, %v442
    %v444 = vpop.f32.mrf.mxu0
    %v445 = vadd.f32 %v121, %v444
    %v446 = vpop.f32.mrf.mxu0
    %v447 = vadd.f32 %v125, %v446
    %448 = vmatprep.mubr.bf16.mxu0 0
    %449 = vmatmul.mubr.bf16.gmra.mxu0 %v177
    %v450 = vpop.f32.mrf.mxu0
    %v451 = vadd.f32 %v121, %v450
    %v452 = vpop.f32.mrf.mxu0
    %v453 = vadd.f32 %v125, %v452
    %v454 = vpop.f32.mrf.mxu0
    %v455 = vadd.f32 %v121, %v454
    %v456 = vpop.f32.mrf.mxu0
    %v457 = vadd.f32 %v125, %v456
    %458 = vdwg.mxu0
    %459 = vmatprep.subr.bf16.mxu0 %v313
    %460 = vmatpush1.bf16.msra.mxu0 %v312
    %461 = vmatprep.subr.bf16.mxu0 %v309
    %462 = vmatpush1.bf16.msra.mxu0 %v308
    %463 = vmatprep.subr.bf16.mxu0 %v305
    %464 = vmatpush1.bf16.msra.mxu0 %v304
    %465 = vmatprep.subr.bf16.mxu0 %v301
    %466 = vmatpush1.bf16.msra.mxu0 %v300
    %467 = vmatprep.subr.bf16.mxu0 %v297
    %468 = vmatpush1.bf16.msra.mxu0 %v296
    %469 = vmatprep.subr.bf16.mxu0 %v293
    %470 = vmatpush1.bf16.msra.mxu0 %v292
    %471 = vmatprep.subr.bf16.mxu0 %v289
    %472 = vmatpush1.bf16.msra.mxu0 %v288
    %473 = vmatprep.subr.bf16.mxu0 %v285
    %474 = vmatpush1.bf16.msra.mxu0 %v284
    %475 = vmatprep.subr.bf16.mxu0 0
    %476 = vmatpush2.bf16.msra.mxu0 0
    %477 = vmatprep.subr.bf16.mxu0 0
    %478 = vmatpush2.bf16.msra.mxu0 0
    %479 = vmatprep.subr.bf16.mxu0 0
    %480 = vmatpush2.bf16.msra.mxu0 0
    %481 = vmatprep.subr.bf16.mxu0 0
    %482 = vmatpush2.bf16.msra.mxu0 0
    %483 = vmatprep.subr.bf16.mxu0 0
    %484 = vmatpush2.bf16.msra.mxu0 0
    %485 = vmatprep.subr.bf16.mxu0 0
    %486 = vmatpush2.bf16.msra.mxu0 0
    %487 = vmatprep.subr.bf16.mxu0 0
    %488 = vmatpush2.bf16.msra.mxu0 0
    %489 = vmatprep.subr.bf16.mxu0 0
    %490 = vmatpush2.bf16.msra.mxu0 0
    %491 = vmatprep.mubr.bf16.mxu0 0
    %492 = vmatmul.mubr.bf16.gmra.mxu0 %v170
    %v493 = vpop.f32.mrf.mxu0
    %v494 = vadd.f32 %v129, %v493
    %v495 = vpop.f32.mrf.mxu0
    %v496 = vadd.f32 %v133, %v495
    %v497 = vpop.f32.mrf.mxu0
    %v498 = vadd.f32 %v129, %v497
    %v499 = vpop.f32.mrf.mxu0
    %v500 = vadd.f32 %v133, %v499
    %501 = vmatprep.mubr.bf16.mxu0 0
    %502 = vmatmul.mubr.bf16.gmra.mxu0 %v171
    %v503 = vpop.f32.mrf.mxu0
    %v504 = vadd.f32 %v129, %v503
    %v505 = vpop.f32.mrf.mxu0
    %v506 = vadd.f32 %v133, %v505
    %v507 = vpop.f32.mrf.mxu0
    %v508 = vadd.f32 %v129, %v507
    %v509 = vpop.f32.mrf.mxu0
    %v510 = vadd.f32 %v133, %v509
    %511 = vmatprep.mubr.bf16.mxu0 0
    %512 = vmatmul.mubr.bf16.gmra.mxu0 %v172
    %v513 = vpop.f32.mrf.mxu0
    %v514 = vadd.f32 %v129, %v513
    %v515 = vpop.f32.mrf.mxu0
    %v516 = vadd.f32 %v133, %v515
    %v517 = vpop.f32.mrf.mxu0
    %v518 = vadd.f32 %v129, %v517
    %v519 = vpop.f32.mrf.mxu0
    %v520 = vadd.f32 %v133, %v519
    %521 = vmatprep.mubr.bf16.mxu0 0
    %522 = vmatmul.mubr.bf16.gmra.mxu0 %v173
    %v523 = vpop.f32.mrf.mxu0
    %v524 = vadd.f32 %v129, %v523
    %v525 = vpop.f32.mrf.mxu0
    %v526 = vadd.f32 %v133, %v525
    %v527 = vpop.f32.mrf.mxu0
    %v528 = vadd.f32 %v129, %v527
    %v529 = vpop.f32.mrf.mxu0
    %v530 = vadd.f32 %v133, %v529
    %531 = vmatprep.mubr.bf16.mxu0 0
    %532 = vmatmul.mubr.bf16.gmra.mxu0 %v174
    %v533 = vpop.f32.mrf.mxu0
    %v534 = vadd.f32 %v129, %v533
    %v535 = vpop.f32.mrf.mxu0
    %v536 = vadd.f32 %v133, %v535
    %v537 = vpop.f32.mrf.mxu0
    %v538 = vadd.f32 %v129, %v537
    %v539 = vpop.f32.mrf.mxu0
    %v540 = vadd.f32 %v133, %v539
    %541 = vmatprep.mubr.bf16.mxu0 0
    %542 = vmatmul.mubr.bf16.gmra.mxu0 %v175
    %v543 = vpop.f32.mrf.mxu0
    %v544 = vadd.f32 %v129, %v543
    %v545 = vpop.f32.mrf.mxu0
    %v546 = vadd.f32 %v133, %v545
    %v547 = vpop.f32.mrf.mxu0
    %v548 = vadd.f32 %v129, %v547
    %v549 = vpop.f32.mrf.mxu0
    %v550 = vadd.f32 %v133, %v549
    %551 = vmatprep.mubr.bf16.mxu0 0
    %552 = vmatmul.mubr.bf16.gmra.mxu0 %v176
    %v553 = vpop.f32.mrf.mxu0
    %v554 = vadd.f32 %v129, %v553
    %v555 = vpop.f32.mrf.mxu0
    %v556 = vadd.f32 %v133, %v555
    %v557 = vpop.f32.mrf.mxu0
    %v558 = vadd.f32 %v129, %v557
    %v559 = vpop.f32.mrf.mxu0
    %v560 = vadd.f32 %v133, %v559
    %561 = vmatprep.mubr.bf16.mxu0 0
    %562 = vmatmul.mubr.bf16.gmra.mxu0 %v177
    %v563 = vpop.f32.mrf.mxu0
    %v564 = vadd.f32 %v129, %v563
    %v565 = vpop.f32.mrf.mxu0
    %v566 = vadd.f32 %v133, %v565
    %v567 = vpop.f32.mrf.mxu0
    %v568 = vadd.f32 %v129, %v567
    %v569 = vpop.f32.mrf.mxu0
    %v570 = vadd.f32 %v133, %v569
    %571 = vdwg.mxu0
    %572 = vst [vmem:[#allocation2] sm:$0xff] %v381
    %573 = vst [vmem:[#allocation2 + $0x8] sm:$0xff] %v383
    %574 = vst [vmem:[#allocation2 + $0x10] sm:$0xff] %v494
    %575 = vst [vmem:[#allocation2 + $0x18] sm:$0xff] %v496
    %576 = vst [vmem:[#allocation2 + $0x20] sm:$0xff] %v385
    %577 = vst [vmem:[#allocation2 + $0x28] sm:$0xff] %v387
    %578 = vst [vmem:[#allocation2 + $0x30] sm:$0xff] %v498
    %579 = vst [vmem:[#allocation2 + $0x38] sm:$0xff] %v500
    %580 = vst [vmem:[#allocation2 + $0x40] sm:$0xff] %v391
    %581 = vst [vmem:[#allocation2 + $0x48] sm:$0xff] %v393
    %582 = vst [vmem:[#allocation2 + $0x50] sm:$0xff] %v504
    %583 = vst [vmem:[#allocation2 + $0x58] sm:$0xff] %v506
    %584 = vst [vmem:[#allocation2 + $0x60] sm:$0xff] %v395
    %585 = vst [vmem:[#allocation2 + $0x68] sm:$0xff] %v397
    %586 = vst [vmem:[#allocation2 + $0x70] sm:$0xff] %v508
    %587 = vst [vmem:[#allocation2 + $0x78] sm:$0xff] %v510
    %588 = vst [vmem:[#allocation2 + $0x80] sm:$0xff] %v401
    %589 = vst [vmem:[#allocation2 + $0x88] sm:$0xff] %v403
    %590 = vst [vmem:[#allocation2 + $0x90] sm:$0xff] %v514
    %591 = vst [vmem:[#allocation2 + $0x98] sm:$0xff] %v516
    %592 = vst [vmem:[#allocation2 + $0xa0] sm:$0xff] %v405
    %593 = vst [vmem:[#allocation2 + $0xa8] sm:$0xff] %v407
    %594 = vst [vmem:[#allocation2 + $0xb0] sm:$0xff] %v518
    %595 = vst [vmem:[#allocation2 + $0xb8] sm:$0xff] %v520
    %596 = vst [vmem:[#allocation2 + $0xc0] sm:$0xff] %v411
    %597 = vst [vmem:[#allocation2 + $0xc8] sm:$0xff] %v413
    %598 = vst [vmem:[#allocation2 + $0xd0] sm:$0xff] %v524
    %599 = vst [vmem:[#allocation2 + $0xd8] sm:$0xff] %v526
    %600 = vst [vmem:[#allocation2 + $0xe0] sm:$0xff] %v415
    %601 = vst [vmem:[#allocation2 + $0xe8] sm:$0xff] %v417
    %602 = vst [vmem:[#allocation2 + $0xf0] sm:$0xff] %v528
    %603 = vst [vmem:[#allocation2 + $0xf8] sm:$0xff] %v530
    %604 = vst [vmem:[#allocation2 + $0x100] sm:$0xff] %v421
    %605 = vst [vmem:[#allocation2 + $0x108] sm:$0xff] %v423
    %606 = vst [vmem:[#allocation2 + $0x110] sm:$0xff] %v534
    %607 = vst [vmem:[#allocation2 + $0x118] sm:$0xff] %v536
    %608 = vst [vmem:[#allocation2 + $0x120] sm:$0xff] %v425
    %609 = vst [vmem:[#allocation2 + $0x128] sm:$0xff] %v427
    %610 = vst [vmem:[#allocation2 + $0x130] sm:$0xff] %v538
    %611 = vst [vmem:[#allocation2 + $0x138] sm:$0xff] %v540
    %612 = vst [vmem:[#allocation2 + $0x140] sm:$0xff] %v431
    %613 = vst [vmem:[#allocation2 + $0x148] sm:$0xff] %v433
    %614 = vst [vmem:[#allocation2 + $0x150] sm:$0xff] %v544
    %615 = vst [vmem:[#allocation2 + $0x158] sm:$0xff] %v546
    %616 = vst [vmem:[#allocation2 + $0x160] sm:$0xff] %v435
    %617 = vst [vmem:[#allocation2 + $0x168] sm:$0xff] %v437
    %618 = vst [vmem:[#allocation2 + $0x170] sm:$0xff] %v548
    %619 = vst [vmem:[#allocation2 + $0x178] sm:$0xff] %v550
    %620 = vst [vmem:[#allocation2 + $0x180] sm:$0xff] %v441
    %621 = vst [vmem:[#allocation2 + $0x188] sm:$0xff] %v443
    %622 = vst [vmem:[#allocation2 + $0x190] sm:$0xff] %v554
    %623 = vst [vmem:[#allocation2 + $0x198] sm:$0xff] %v556
    %624 = vst [vmem:[#allocation2 + $0x1a0] sm:$0xff] %v445
    %625 = vst [vmem:[#allocation2 + $0x1a8] sm:$0xff] %v447
    %626 = vst [vmem:[#allocation2 + $0x1b0] sm:$0xff] %v558
    %627 = vst [vmem:[#allocation2 + $0x1b8] sm:$0xff] %v560
    %628 = vst [vmem:[#allocation2 + $0x1c0] sm:$0xff] %v451
    %629 = vst [vmem:[#allocation2 + $0x1c8] sm:$0xff] %v453
    %630 = vst [vmem:[#allocation2 + $0x1d0] sm:$0xff] %v564
    %631 = vst [vmem:[#allocation2 + $0x1d8] sm:$0xff] %v566
    %632 = vst [vmem:[#allocation2 + $0x1e0] sm:$0xff] %v455
    %633 = vst [vmem:[#allocation2 + $0x1e8] sm:$0xff] %v457
    %634 = vst [vmem:[#allocation2 + $0x1f0] sm:$0xff] %v568
    %635 = vst [vmem:[#allocation2 + $0x1f8] sm:$0xff] %v570
    %v636 = vld [vmem:[#allocation3] sm:$0xff]
    %v637 = vld [vmem:[#allocation3 + $0x8] sm:$0xff]
    %v638 = vld [vmem:[#allocation4] sm:$0xff]
    %v639 = vld [vmem:[#allocation4 + $0x8] sm:$0xff]
    %v640 = vld [vmem:[#allocation2] sm:$0xff]
    %v641 = vld [vmem:[#allocation2 + $0x8] sm:$0xff]
    %v642 = vld [vmem:[#allocation2 + $0x10] sm:$0xff]
    %v643 = vld [vmem:[#allocation2 + $0x18] sm:$0xff]
    %v644 = vld [vmem:[#allocation2 + $0x20] sm:$0xff]
    %v645 = vld [vmem:[#allocation2 + $0x28] sm:$0xff]
    %v646 = vld [vmem:[#allocation2 + $0x30] sm:$0xff]
    %v647 = vld [vmem:[#allocation2 + $0x38] sm:$0xff]
    %v648 = vpack.c.bf16 %v637, %v636
    %v649 = vld [vmem:[#allocation10] sm:$0xff]
    %v650 = vld [vmem:[#allocation10 + $0x8] sm:$0xff]
    %v651 = vld [vmem:[#allocation10 + $0x10] sm:$0xff]
    %v652 = vld [vmem:[#allocation10 + $0x18] sm:$0xff]
    %v653 = vld [vmem:[#allocation10 + $0x20] sm:$0xff]
    %v654 = vld [vmem:[#allocation10 + $0x28] sm:$0xff]
    %v655 = vld [vmem:[#allocation10 + $0x30] sm:$0xff]
    %v656 = vld [vmem:[#allocation10 + $0x38] sm:$0xff]
    %v657 = vld [vmem:[#allocation10 + $0x40] sm:$0xff]
    %v658 = vld [vmem:[#allocation10 + $0x48] sm:$0xff]
    %v659 = vld [vmem:[#allocation10 + $0x50] sm:$0xff]
    %v660 = vld [vmem:[#allocation10 + $0x58] sm:$0xff]
    %v661 = vld [vmem:[#allocation10 + $0x60] sm:$0xff]
    %v662 = vld [vmem:[#allocation10 + $0x68] sm:$0xff]
    %v663 = vld [vmem:[#allocation10 + $0x70] sm:$0xff]
    %v664 = vld [vmem:[#allocation10 + $0x78] sm:$0xff]
    %v665 = vld [vmem:[#allocation10 + $0x80] sm:$0xff]
    %v666 = vld [vmem:[#allocation10 + $0x88] sm:$0xff]
    %v667 = vld [vmem:[#allocation10 + $0x90] sm:$0xff]
    %v668 = vld [vmem:[#allocation10 + $0x98] sm:$0xff]
    %v669 = vld [vmem:[#allocation10 + $0xa0] sm:$0xff]
    %v670 = vld [vmem:[#allocation10 + $0xa8] sm:$0xff]
    %v671 = vld [vmem:[#allocation10 + $0xb0] sm:$0xff]
    %v672 = vld [vmem:[#allocation10 + $0xb8] sm:$0xff]
    %v673 = vld [vmem:[#allocation10 + $0xc0] sm:$0xff]
    %v674 = vld [vmem:[#allocation10 + $0xc8] sm:$0xff]
    %v675 = vld [vmem:[#allocation10 + $0xd0] sm:$0xff]
    %v676 = vld [vmem:[#allocation10 + $0xd8] sm:$0xff]
    %v677 = vld [vmem:[#allocation10 + $0xe0] sm:$0xff]
    %v678 = vld [vmem:[#allocation10 + $0xe8] sm:$0xff]
    %v679 = vld [vmem:[#allocation10 + $0xf0] sm:$0xff]
    %v680 = vld [vmem:[#allocation10 + $0xf8] sm:$0xff]
    %v713 = vunpack.c.l.b16 %v649
    %v714 = vunpack.c.h.b16 %v649
    %v715 = vunpack.c.l.b16 %v650
    %v716 = vunpack.c.h.b16 %v650
    %v717 = vunpack.c.l.b16 %v651
    %v718 = vunpack.c.h.b16 %v651
    %v719 = vunpack.c.l.b16 %v652
    %v720 = vunpack.c.h.b16 %v652
    %v721 = vunpack.c.l.b16 %v653
    %v722 = vunpack.c.h.b16 %v653
    %v723 = vunpack.c.l.b16 %v654
    %v724 = vunpack.c.h.b16 %v654
    %v725 = vunpack.c.l.b16 %v655
    %v726 = vunpack.c.h.b16 %v655
    %v727 = vunpack.c.l.b16 %v656
    %v728 = vunpack.c.h.b16 %v656
    %v729 = vunpack.c.l.b16 %v657
    %v730 = vunpack.c.h.b16 %v657
    %v731 = vunpack.c.l.b16 %v658
    %v732 = vunpack.c.h.b16 %v658
    %v733 = vunpack.c.l.b16 %v659
    %v734 = vunpack.c.h.b16 %v659
    %v735 = vunpack.c.l.b16 %v660
    %v736 = vunpack.c.h.b16 %v660
    %v737 = vunpack.c.l.b16 %v661
    %v738 = vunpack.c.h.b16 %v661
    %v739 = vunpack.c.l.b16 %v662
    %v740 = vunpack.c.h.b16 %v662
    %v741 = vunpack.c.l.b16 %v663
    %v742 = vunpack.c.h.b16 %v663
    %v743 = vunpack.c.l.b16 %v664
    %v744 = vunpack.c.h.b16 %v664
    %v745 = vunpack.c.l.b16 %v665
    %v746 = vunpack.c.h.b16 %v665
    %v747 = vunpack.c.l.b16 %v666
    %v748 = vunpack.c.h.b16 %v666
    %v749 = vunpack.c.l.b16 %v667
    %v750 = vunpack.c.h.b16 %v667
    %v751 = vunpack.c.l.b16 %v668
    %v752 = vunpack.c.h.b16 %v668
    %v753 = vunpack.c.l.b16 %v669
    %v754 = vunpack.c.h.b16 %v669
    %v755 = vunpack.c.l.b16 %v670
    %v756 = vunpack.c.h.b16 %v670
    %v757 = vunpack.c.l.b16 %v671
    %v758 = vunpack.c.h.b16 %v671
    %v759 = vunpack.c.l.b16 %v672
    %v760 = vunpack.c.h.b16 %v672
    %v761 = vunpack.c.l.b16 %v673
    %v762 = vunpack.c.h.b16 %v673
    %v763 = vunpack.c.l.b16 %v674
    %v764 = vunpack.c.h.b16 %v674
    %v765 = vunpack.c.l.b16 %v675
    %v766 = vunpack.c.h.b16 %v675
    %v767 = vunpack.c.l.b16 %v676
    %v768 = vunpack.c.h.b16 %v676
    %v769 = vunpack.c.l.b16 %v677
    %v770 = vunpack.c.h.b16 %v677
    %v771 = vunpack.c.l.b16 %v678
    %v772 = vunpack.c.h.b16 %v678
    %v773 = vunpack.c.l.b16 %v679
    %v774 = vunpack.c.h.b16 %v679
    %v775 = vunpack.c.l.b16 %v680
    %v776 = vunpack.c.h.b16 %v680
    %v777 = vpack.c.b16 %v717, %v713
    %v778 = vpack.c.b16 %v718, %v714
    %v779 = vpack.c.b16 %v719, %v715
    %v780 = vpack.c.b16 %v720, %v716
    %v781 = vpack.c.b16 %v725, %v721
    %v782 = vpack.c.b16 %v726, %v722
    %v783 = vpack.c.b16 %v727, %v723
    %v784 = vpack.c.b16 %v728, %v724
    %v785 = vpack.c.b16 %v733, %v729
    %v786 = vpack.c.b16 %v734, %v730
    %v787 = vpack.c.b16 %v735, %v731
    %v788 = vpack.c.b16 %v736, %v732
    %v789 = vpack.c.b16 %v741, %v737
    %v790 = vpack.c.b16 %v742, %v738
    %v791 = vpack.c.b16 %v743, %v739
    %v792 = vpack.c.b16 %v744, %v740
    %v793 = vpack.c.b16 %v749, %v745
    %v794 = vpack.c.b16 %v750, %v746
    %v795 = vpack.c.b16 %v751, %v747
    %v796 = vpack.c.b16 %v752, %v748
    %v797 = vpack.c.b16 %v757, %v753
    %v798 = vpack.c.b16 %v758, %v754
    %v799 = vpack.c.b16 %v759, %v755
    %v800 = vpack.c.b16 %v760, %v756
    %v801 = vpack.c.b16 %v765, %v761
    %v802 = vpack.c.b16 %v766, %v762
    %v803 = vpack.c.b16 %v767, %v763
    %v804 = vpack.c.b16 %v768, %v764
    %v805 = vpack.c.b16 %v773, %v769
    %v806 = vpack.c.b16 %v774, %v770
    %v807 = vpack.c.b16 %v775, %v771
    %v808 = vpack.c.b16 %v776, %v772
    %841 = vmatprep.subr.bf16.mxu0 %v806
    %842 = vmatpush1.bf16.msra.mxu0 %v805
    %843 = vmatprep.subr.bf16.mxu0 %v802
    %844 = vmatpush1.bf16.msra.mxu0 %v801
    %845 = vmatprep.subr.bf16.mxu0 %v798
    %846 = vmatpush1.bf16.msra.mxu0 %v797
    %847 = vmatprep.subr.bf16.mxu0 %v794
    %848 = vmatpush1.bf16.msra.mxu0 %v793
    %849 = vmatprep.subr.bf16.mxu0 %v790
    %850 = vmatpush1.bf16.msra.mxu0 %v789
    %851 = vmatprep.subr.bf16.mxu0 %v786
    %852 = vmatpush1.bf16.msra.mxu0 %v785
    %853 = vmatprep.subr.bf16.mxu0 %v782
    %854 = vmatpush1.bf16.msra.mxu0 %v781
    %855 = vmatprep.subr.bf16.mxu0 %v778
    %856 = vmatpush1.bf16.msra.mxu0 %v777
    %857 = vmatprep.subr.bf16.mxu0 0
    %858 = vmatpush2.bf16.msra.mxu0 0
    %859 = vmatprep.subr.bf16.mxu0 0
    %860 = vmatpush2.bf16.msra.mxu0 0
    %861 = vmatprep.subr.bf16.mxu0 0
    %862 = vmatpush2.bf16.msra.mxu0 0
    %863 = vmatprep.subr.bf16.mxu0 0
    %864 = vmatpush2.bf16.msra.mxu0 0
    %865 = vmatprep.subr.bf16.mxu0 0
    %866 = vmatpush2.bf16.msra.mxu0 0
    %867 = vmatprep.subr.bf16.mxu0 0
    %868 = vmatpush2.bf16.msra.mxu0 0
    %869 = vmatprep.subr.bf16.mxu0 0
    %870 = vmatpush2.bf16.msra.mxu0 0
    %871 = vmatprep.subr.bf16.mxu0 0
    %872 = vmatpush2.bf16.msra.mxu0 0
    %873 = vmatprep.mubr.bf16.mxu0 0
    %874 = vmatmul.mubr.bf16.gmra.mxu0 %v648
    %v875 = vpop.f32.mrf.mxu0
    %v876 = vadd.f32 0.0, %v875
    %v877 = vpop.f32.mrf.mxu0
    %v878 = vadd.f32 0.0, %v877
    %v879 = vpop.f32.mrf.mxu0
    %v880 = vadd.f32 0.0, %v879
    %v881 = vpop.f32.mrf.mxu0
    %v882 = vadd.f32 0.0, %v881
    %883 = vdwg.mxu0
    %884 = vmatprep.subr.bf16.mxu0 %v808
    %885 = vmatpush1.bf16.msra.mxu0 %v807
    %886 = vmatprep.subr.bf16.mxu0 %v804
    %887 = vmatpush1.bf16.msra.mxu0 %v803
    %888 = vmatprep.subr.bf16.mxu0 %v800
    %889 = vmatpush1.bf16.msra.mxu0 %v799
    %890 = vmatprep.subr.bf16.mxu0 %v796
    %891 = vmatpush1.bf16.msra.mxu0 %v795
    %892 = vmatprep.subr.bf16.mxu0 %v792
    %893 = vmatpush1.bf16.msra.mxu0 %v791
    %894 = vmatprep.subr.bf16.mxu0 %v788
    %895 = vmatpush1.bf16.msra.mxu0 %v787
    %896 = vmatprep.subr.bf16.mxu0 %v784
    %897 = vmatpush1.bf16.msra.mxu0 %v783
    %898 = vmatprep.subr.bf16.mxu0 %v780
    %899 = vmatpush1.bf16.msra.mxu0 %v779
    %900 = vmatprep.subr.bf16.mxu0 0
    %901 = vmatpush2.bf16.msra.mxu0 0
    %902 = vmatprep.subr.bf16.mxu0 0
    %903 = vmatpush2.bf16.msra.mxu0 0
    %904 = vmatprep.subr.bf16.mxu0 0
    %905 = vmatpush2.bf16.msra.mxu0 0
    %906 = vmatprep.subr.bf16.mxu0 0
    %907 = vmatpush2.bf16.msra.mxu0 0
    %908 = vmatprep.subr.bf16.mxu0 0
    %909 = vmatpush2.bf16.msra.mxu0 0
    %910 = vmatprep.subr.bf16.mxu0 0
    %911 = vmatpush2.bf16.msra.mxu0 0
    %912 = vmatprep.subr.bf16.mxu0 0
    %913 = vmatpush2.bf16.msra.mxu0 0
    %914 = vmatprep.subr.bf16.mxu0 0
    %915 = vmatpush2.bf16.msra.mxu0 0
    %916 = vmatprep.mubr.bf16.mxu0 0
    %917 = vmatmul.mubr.bf16.gmra.mxu0 %v648
    %v918 = vpop.f32.mrf.mxu0
    %v919 = vadd.f32 0.0, %v918
    %v920 = vpop.f32.mrf.mxu0
    %v921 = vadd.f32 0.0, %v920
    %v922 = vpop.f32.mrf.mxu0
    %v923 = vadd.f32 0.0, %v922
    %v924 = vpop.f32.mrf.mxu0
    %v925 = vadd.f32 0.0, %v924
    %926 = vdwg.mxu0
    %v927 = vadd.f32 %v640, %v876
    %v928 = vadd.f32 %v641, %v878
    %v929 = vadd.f32 %v642, %v919
    %v930 = vadd.f32 %v643, %v921
    %v931 = vadd.f32 %v644, %v880
    %v932 = vadd.f32 %v645, %v882
    %v933 = vadd.f32 %v646, %v923
    %v934 = vadd.f32 %v647, %v925
    %v935 = vmul.f32 %v927, 0.5
    %v936 = vmul.f32 %v931, 0.5
    %v937 = vtanh.pop %v935
    %v938 = vtanh.pop %v936
    %v939 = vmul.f32 %v937, 0.5
    %v940 = vmul.f32 %v938, 0.5
    %v941 = vadd.f32 %v939, 0.5
    %v942 = vadd.f32 %v940, 0.5
    %v943 = vmul.f32 %v928, 0.5
    %v944 = vmul.f32 %v932, 0.5
    %v945 = vtanh.pop %v943
    %v946 = vtanh.pop %v944
    %v947 = vmul.f32 %v945, 0.5
    %v948 = vmul.f32 %v946, 0.5
    %v949 = vadd.f32 %v947, 0.5
    %v950 = vadd.f32 %v948, 0.5
    %v951 = vtanh.pop %v929
    %v952 = vtanh.pop %v933
    %v953 = vmul.f32 %v930, 0.5
    %v954 = vmul.f32 %v934, 0.5
    %v955 = vtanh.pop %v953
    %v956 = vtanh.pop %v954
    %v957 = vmul.f32 %v955, 0.5
    %v958 = vmul.f32 %v956, 0.5
    %v959 = vadd.f32 %v957, 0.5
    %v960 = vadd.f32 %v958, 0.5
    %v961 = vmul.f32 %v949, %v638
    %v962 = vmul.f32 %v950, %v639
    %v963 = vmul.f32 %v941, %v951
    %v964 = vmul.f32 %v942, %v952
    %v965 = vadd.f32 %v961, %v963
    %v966 = vadd.f32 %v962, %v964
    %v967 = vtanh.pop %v965
    %v968 = vtanh.pop %v966
    %v969 = vmul.f32 %v959, %v967
    %v970 = vmul.f32 %v960, %v968
    %v971 = vpack.c.bf16 %v970, %v969
    %v973 = vunpack.c.l.b16 %v971
    %v974 = vunpack.c.h.b16 %v971
    %v975 = vpack.c.b16 %v973, %v973
    %v976 = vpack.c.b16 %v974, %v974
    %979 = vst [vmem:[#allocation11] sm:$0xf] %v975
    %980 = vst [vmem:[#allocation11 + $0x4] sm:$0xf] %v976
    %s981 = scalar_lea.vmem [#allocation2], 64
    %v982 = vld [vmem:[%s981] sm:$0xff]
    %v983 = vld [vmem:[%s981 + $0x8] sm:$0xff]
    %v984 = vld [vmem:[%s981 + $0x10] sm:$0xff]
    %v985 = vld [vmem:[%s981 + $0x18] sm:$0xff]
    %v986 = vld [vmem:[%s981 + $0x20] sm:$0xff]
    %v987 = vld [vmem:[%s981 + $0x28] sm:$0xff]
    %v988 = vld [vmem:[%s981 + $0x30] sm:$0xff]
    %v989 = vld [vmem:[%s981 + $0x38] sm:$0xff]
    %v990 = vld [vmem:[#allocation10] sm:$0xff]
    %v991 = vld [vmem:[#allocation10 + $0x8] sm:$0xff]
    %v992 = vld [vmem:[#allocation10 + $0x10] sm:$0xff]
    %v993 = vld [vmem:[#allocation10 + $0x18] sm:$0xff]
    %v994 = vld [vmem:[#allocation10 + $0x20] sm:$0xff]
    %v995 = vld [vmem:[#allocation10 + $0x28] sm:$0xff]
    %v996 = vld [vmem:[#allocation10 + $0x30] sm:$0xff]
    %v997 = vld [vmem:[#allocation10 + $0x38] sm:$0xff]
    %v998 = vld [vmem:[#allocation10 + $0x40] sm:$0xff]
    %v999 = vld [vmem:[#allocation10 + $0x48] sm:$0xff]
    %v1000 = vld [vmem:[#allocation10 + $0x50] sm:$0xff]
    %v1001 = vld [vmem:[#allocation10 + $0x58] sm:$0xff]
    %v1002 = vld [vmem:[#allocation10 + $0x60] sm:$0xff]
    %v1003 = vld [vmem:[#allocation10 + $0x68] sm:$0xff]
    %v1004 = vld [vmem:[#allocation10 + $0x70] sm:$0xff]
    %v1005 = vld [vmem:[#allocation10 + $0x78] sm:$0xff]
    %v1006 = vld [vmem:[#allocation10 + $0x80] sm:$0xff]
    %v1007 = vld [vmem:[#allocation10 + $0x88] sm:$0xff]
    %v1008 = vld [vmem:[#allocation10 + $0x90] sm:$0xff]
    %v1009 = vld [vmem:[#allocation10 + $0x98] sm:$0xff]
    %v1010 = vld [vmem:[#allocation10 + $0xa0] sm:$0xff]
    %v1011 = vld [vmem:[#allocation10 + $0xa8] sm:$0xff]
    %v1012 = vld [vmem:[#allocation10 + $0xb0] sm:$0xff]
    %v1013 = vld [vmem:[#allocation10 + $0xb8] sm:$0xff]
    %v1014 = vld [vmem:[#allocation10 + $0xc0] sm:$0xff]
    %v1015 = vld [vmem:[#allocation10 + $0xc8] sm:$0xff]
    %v1016 = vld [vmem:[#allocation10 + $0xd0] sm:$0xff]
    %v1017 = vld [vmem:[#allocation10 + $0xd8] sm:$0xff]
    %v1018 = vld [vmem:[#allocation10 + $0xe0] sm:$0xff]
    %v1019 = vld [vmem:[#allocation10 + $0xe8] sm:$0xff]
    %v1020 = vld [vmem:[#allocation10 + $0xf0] sm:$0xff]
    %v1021 = vld [vmem:[#allocation10 + $0xf8] sm:$0xff]
    %v1054 = vunpack.c.l.b16 %v990
    %v1055 = vunpack.c.h.b16 %v990
    %v1056 = vunpack.c.l.b16 %v991
    %v1057 = vunpack.c.h.b16 %v991
    %v1058 = vunpack.c.l.b16 %v992
    %v1059 = vunpack.c.h.b16 %v992
    %v1060 = vunpack.c.l.b16 %v993
    %v1061 = vunpack.c.h.b16 %v993
    %v1062 = vunpack.c.l.b16 %v994
    %v1063 = vunpack.c.h.b16 %v994
    %v1064 = vunpack.c.l.b16 %v995
    %v1065 = vunpack.c.h.b16 %v995
    %v1066 = vunpack.c.l.b16 %v996
    %v1067 = vunpack.c.h.b16 %v996
    %v1068 = vunpack.c.l.b16 %v997
    %v1069 = vunpack.c.h.b16 %v997
    %v1070 = vunpack.c.l.b16 %v998
    %v1071 = vunpack.c.h.b16 %v998
    %v1072 = vunpack.c.l.b16 %v999
    %v1073 = vunpack.c.h.b16 %v999
    %v1074 = vunpack.c.l.b16 %v1000
    %v1075 = vunpack.c.h.b16 %v1000
    %v1076 = vunpack.c.l.b16 %v1001
    %v1077 = vunpack.c.h.b16 %v1001
    %v1078 = vunpack.c.l.b16 %v1002
    %v1079 = vunpack.c.h.b16 %v1002
    %v1080 = vunpack.c.l.b16 %v1003
    %v1081 = vunpack.c.h.b16 %v1003
    %v1082 = vunpack.c.l.b16 %v1004
    %v1083 = vunpack.c.h.b16 %v1004
    %v1084 = vunpack.c.l.b16 %v1005
    %v1085 = vunpack.c.h.b16 %v1005
    %v1086 = vunpack.c.l.b16 %v1006
    %v1087 = vunpack.c.h.b16 %v1006
    %v1088 = vunpack.c.l.b16 %v1007
    %v1089 = vunpack.c.h.b16 %v1007
    %v1090 = vunpack.c.l.b16 %v1008
    %v1091 = vunpack.c.h.b16 %v1008
    %v1092 = vunpack.c.l.b16 %v1009
    %v1093 = vunpack.c.h.b16 %v1009
    %v1094 = vunpack.c.l.b16 %v1010
    %v1095 = vunpack.c.h.b16 %v1010
    %v1096 = vunpack.c.l.b16 %v1011
    %v1097 = vunpack.c.h.b16 %v1011
    %v1098 = vunpack.c.l.b16 %v1012
    %v1099 = vunpack.c.h.b16 %v1012
    %v1100 = vunpack.c.l.b16 %v1013
    %v1101 = vunpack.c.h.b16 %v1013
    %v1102 = vunpack.c.l.b16 %v1014
    %v1103 = vunpack.c.h.b16 %v1014
    %v1104 = vunpack.c.l.b16 %v1015
    %v1105 = vunpack.c.h.b16 %v1015
    %v1106 = vunpack.c.l.b16 %v1016
    %v1107 = vunpack.c.h.b16 %v1016
    %v1108 = vunpack.c.l.b16 %v1017
    %v1109 = vunpack.c.h.b16 %v1017
    %v1110 = vunpack.c.l.b16 %v1018
    %v1111 = vunpack.c.h.b16 %v1018
    %v1112 = vunpack.c.l.b16 %v1019
    %v1113 = vunpack.c.h.b16 %v1019
    %v1114 = vunpack.c.l.b16 %v1020
    %v1115 = vunpack.c.h.b16 %v1020
    %v1116 = vunpack.c.l.b16 %v1021
    %v1117 = vunpack.c.h.b16 %v1021
    %v1118 = vpack.c.b16 %v1058, %v1054
    %v1119 = vpack.c.b16 %v1059, %v1055
    %v1120 = vpack.c.b16 %v1060, %v1056
    %v1121 = vpack.c.b16 %v1061, %v1057
    %v1122 = vpack.c.b16 %v1066, %v1062
    %v1123 = vpack.c.b16 %v1067, %v1063
    %v1124 = vpack.c.b16 %v1068, %v1064
    %v1125 = vpack.c.b16 %v1069, %v1065
    %v1126 = vpack.c.b16 %v1074, %v1070
    %v1127 = vpack.c.b16 %v1075, %v1071
    %v1128 = vpack.c.b16 %v1076, %v1072
    %v1129 = vpack.c.b16 %v1077, %v1073
    %v1130 = vpack.c.b16 %v1082, %v1078
    %v1131 = vpack.c.b16 %v1083, %v1079
    %v1132 = vpack.c.b16 %v1084, %v1080
    %v1133 = vpack.c.b16 %v1085, %v1081
    %v1134 = vpack.c.b16 %v1090, %v1086
    %v1135 = vpack.c.b16 %v1091, %v1087
    %v1136 = vpack.c.b16 %v1092, %v1088
    %v1137 = vpack.c.b16 %v1093, %v1089
    %v1138 = vpack.c.b16 %v1098, %v1094
    %v1139 = vpack.c.b16 %v1099, %v1095
    %v1140 = vpack.c.b16 %v1100, %v1096
    %v1141 = vpack.c.b16 %v1101, %v1097
    %v1142 = vpack.c.b16 %v1106, %v1102
    %v1143 = vpack.c.b16 %v1107, %v1103
    %v1144 = vpack.c.b16 %v1108, %v1104
    %v1145 = vpack.c.b16 %v1109, %v1105
    %v1146 = vpack.c.b16 %v1114, %v1110
    %v1147 = vpack.c.b16 %v1115, %v1111
    %v1148 = vpack.c.b16 %v1116, %v1112
    %v1149 = vpack.c.b16 %v1117, %v1113
    %1182 = vmatprep.subr.bf16.mxu0 %v1147
    %1183 = vmatpush1.bf16.msra.mxu0 %v1146
    %1184 = vmatprep.subr.bf16.mxu0 %v1143
    %1185 = vmatpush1.bf16.msra.mxu0 %v1142
    %1186 = vmatprep.subr.bf16.mxu0 %v1139
    %1187 = vmatpush1.bf16.msra.mxu0 %v1138
    %1188 = vmatprep.subr.bf16.mxu0 %v1135
    %1189 = vmatpush1.bf16.msra.mxu0 %v1134
    %1190 = vmatprep.subr.bf16.mxu0 %v1131
    %1191 = vmatpush1.bf16.msra.mxu0 %v1130
    %1192 = vmatprep.subr.bf16.mxu0 %v1127
    %1193 = vmatpush1.bf16.msra.mxu0 %v1126
    %1194 = vmatprep.subr.bf16.mxu0 %v1123
    %1195 = vmatpush1.bf16.msra.mxu0 %v1122
    %1196 = vmatprep.subr.bf16.mxu0 %v1119
    %1197 = vmatpush1.bf16.msra.mxu0 %v1118
    %1198 = vmatprep.subr.bf16.mxu0 0
    %1199 = vmatpush2.bf16.msra.mxu0 0
    %1200 = vmatprep.subr.bf16.mxu0 0
    %1201 = vmatpush2.bf16.msra.mxu0 0
    %1202 = vmatprep.subr.bf16.mxu0 0
    %1203 = vmatpush2.bf16.msra.mxu0 0
    %1204 = vmatprep.subr.bf16.mxu0 0
    %1205 = vmatpush2.bf16.msra.mxu0 0
    %1206 = vmatprep.subr.bf16.mxu0 0
    %1207 = vmatpush2.bf16.msra.mxu0 0
    %1208 = vmatprep.subr.bf16.mxu0 0
    %1209 = vmatpush2.bf16.msra.mxu0 0
    %1210 = vmatprep.subr.bf16.mxu0 0
    %1211 = vmatpush2.bf16.msra.mxu0 0
    %1212 = vmatprep.subr.bf16.mxu0 0
    %1213 = vmatpush2.bf16.msra.mxu0 0
    %1214 = vmatprep.mubr.bf16.mxu0 0
    %1215 = vmatmul.mubr.bf16.gmra.mxu0 %v971
    %v1216 = vpop.f32.mrf.mxu0
    %v1217 = vadd.f32 0.0, %v1216
    %v1218 = vpop.f32.mrf.mxu0
    %v1219 = vadd.f32 0.0, %v1218
    %v1220 = vpop.f32.mrf.mxu0
    %v1221 = vadd.f32 0.0, %v1220
    %v1222 = vpop.f32.mrf.mxu0
    %v1223 = vadd.f32 0.0, %v1222
    %1224 = vdwg.mxu0
    %1225 = vmatprep.subr.bf16.mxu0 %v1149
    %1226 = vmatpush1.bf16.msra.mxu0 %v1148
    %1227 = vmatprep.subr.bf16.mxu0 %v1145
    %1228 = vmatpush1.bf16.msra.mxu0 %v1144
    %1229 = vmatprep.subr.bf16.mxu0 %v1141
    %1230 = vmatpush1.bf16.msra.mxu0 %v1140
    %1231 = vmatprep.subr.bf16.mxu0 %v1137
    %1232 = vmatpush1.bf16.msra.mxu0 %v1136
    %1233 = vmatprep.subr.bf16.mxu0 %v1133
    %1234 = vmatpush1.bf16.msra.mxu0 %v1132
    %1235 = vmatprep.subr.bf16.mxu0 %v1129
    %1236 = vmatpush1.bf16.msra.mxu0 %v1128
    %1237 = vmatprep.subr.bf16.mxu0 %v1125
    %1238 = vmatpush1.bf16.msra.mxu0 %v1124
    %1239 = vmatprep.subr.bf16.mxu0 %v1121
    %1240 = vmatpush1.bf16.msra.mxu0 %v1120
    %1241 = vmatprep.subr.bf16.mxu0 0
    %1242 = vmatpush2.bf16.msra.mxu0 0
    %1243 = vmatprep.subr.bf16.mxu0 0
    %1244 = vmatpush2.bf16.msra.mxu0 0
    %1245 = vmatprep.subr.bf16.mxu0 0
    %1246 = vmatpush2.bf16.msra.mxu0 0
    %1247 = vmatprep.subr.bf16.mxu0 0
    %1248 = vmatpush2.bf16.msra.mxu0 0
    %1249 = vmatprep.subr.bf16.mxu0 0
    %1250 = vmatpush2.bf16.msra.mxu0 0
    %1251 = vmatprep.subr.bf16.mxu0 0
    %1252 = vmatpush2.bf16.msra.mxu0 0
    %1253 = vmatprep.subr.bf16.mxu0 0
    %1254 = vmatpush2.bf16.msra.mxu0 0
    %1255 = vmatprep.subr.bf16.mxu0 0
    %1256 = vmatpush2.bf16.msra.mxu0 0
    %1257 = vmatprep.mubr.bf16.mxu0 0
    %1258 = vmatmul.mubr.bf16.gmra.mxu0 %v971
    %v1259 = vpop.f32.mrf.mxu0
    %v1260 = vadd.f32 0.0, %v1259
    %v1261 = vpop.f32.mrf.mxu0
    %v1262 = vadd.f32 0.0, %v1261
    %v1263 = vpop.f32.mrf.mxu0
    %v1264 = vadd.f32 0.0, %v1263
    %v1265 = vpop.f32.mrf.mxu0
    %v1266 = vadd.f32 0.0, %v1265
    %1267 = vdwg.mxu0
    %v1268 = vadd.f32 %v982, %v1217
    %v1269 = vadd.f32 %v983, %v1219
    %v1270 = vadd.f32 %v984, %v1260
    %v1271 = vadd.f32 %v985, %v1262
    %v1272 = vadd.f32 %v986, %v1221
    %v1273 = vadd.f32 %v987, %v1223
    %v1274 = vadd.f32 %v988, %v1264
    %v1275 = vadd.f32 %v989, %v1266
    %v1276 = vmul.f32 %v1268, 0.5
    %v1277 = vmul.f32 %v1272, 0.5
    %v1278 = vtanh.pop %v1276
    %v1279 = vtanh.pop %v1277
    %v1280 = vmul.f32 %v1278, 0.5
    %v1281 = vmul.f32 %v1279, 0.5
    %v1282 = vadd.f32 %v1280, 0.5
    %v1283 = vadd.f32 %v1281, 0.5
    %v1284 = vmul.f32 %v1269, 0.5
    %v1285 = vmul.f32 %v1273, 0.5
    %v1286 = vtanh.pop %v1284
    %v1287 = vtanh.pop %v1285
    %v1288 = vmul.f32 %v1286, 0.5
    %v1289 = vmul.f32 %v1287, 0.5
    %v1290 = vadd.f32 %v1288, 0.5
    %v1291 = vadd.f32 %v1289, 0.5
    %v1292 = vtanh.pop %v1270
    %v1293 = vtanh.pop %v1274
    %v1294 = vmul.f32 %v1271, 0.5
    %v1295 = vmul.f32 %v1275, 0.5
    %v1296 = vtanh.pop %v1294
    %v1297 = vtanh.pop %v1295
    %v1298 = vmul.f32 %v1296, 0.5
    %v1299 = vmul.f32 %v1297, 0.5
    %v1300 = vadd.f32 %v1298, 0.5
    %v1301 = vadd.f32 %v1299, 0.5
    %v1302 = vmul.f32 %v1290, %v965
    %v1303 = vmul.f32 %v1291, %v966
    %v1304 = vmul.f32 %v1282, %v1292
    %v1305 = vmul.f32 %v1283, %v1293
    %v1306 = vadd.f32 %v1302, %v1304
    %v1307 = vadd.f32 %v1303, %v1305
    %v1308 = vtanh.pop %v1306
    %v1309 = vtanh.pop %v1307
    %v1310 = vmul.f32 %v1300, %v1308
    %v1311 = vmul.f32 %v1301, %v1309
    %v1312 = vpack.c.bf16 %v1311, %v1310
    %v1314 = vunpack.c.l.b16 %v1312
    %v1315 = vunpack.c.h.b16 %v1312
    %v1316 = vpack.c.b16 %v1314, %v1314
    %v1317 = vpack.c.b16 %v1315, %v1315
    %s1320 = scalar_lea.vmem [#allocation11], 8
    %1321 = vst [vmem:[%s1320] sm:$0xf] %v1316
    %1322 = vst [vmem:[%s1320 + $0x4] sm:$0xf] %v1317
    %s1323 = scalar_lea.vmem [#allocation2], 128
    %v1324 = vld [vmem:[%s1323] sm:$0xff]
    %v1325 = vld [vmem:[%s1323 + $0x8] sm:$0xff]
    %v1326 = vld [vmem:[%s1323 + $0x10] sm:$0xff]
    %v1327 = vld [vmem:[%s1323 + $0x18] sm:$0xff]
    %v1328 = vld [vmem:[%s1323 + $0x20] sm:$0xff]
    %v1329 = vld [vmem:[%s1323 + $0x28] sm:$0xff]
    %v1330 = vld [vmem:[%s1323 + $0x30] sm:$0xff]
    %v1331 = vld [vmem:[%s1323 + $0x38] sm:$0xff]
    %v1332 = vld [vmem:[#allocation10] sm:$0xff]
    %v1333 = vld [vmem:[#allocation10 + $0x8] sm:$0xff]
    %v1334 = vld [vmem:[#allocation10 + $0x10] sm:$0xff]
    %v1335 = vld [vmem:[#allocation10 + $0x18] sm:$0xff]
    %v1336 = vld [vmem:[#allocation10 + $0x20] sm:$0xff]
    %v1337 = vld [vmem:[#allocation10 + $0x28] sm:$0xff]
    %v1338 = vld [vmem:[#allocation10 + $0x30] sm:$0xff]
    %v1339 = vld [vmem:[#allocation10 + $0x38] sm:$0xff]
    %v1340 = vld [vmem:[#allocation10 + $0x40] sm:$0xff]
    %v1341 = vld [vmem:[#allocation10 + $0x48] sm:$0xff]
    %v1342 = vld [vmem:[#allocation10 + $0x50] sm:$0xff]
    %v1343 = vld [vmem:[#allocation10 + $0x58] sm:$0xff]
    %v1344 = vld [vmem:[#allocation10 + $0x60] sm:$0xff]
    %v1345 = vld [vmem:[#allocation10 + $0x68] sm:$0xff]
    %v1346 = vld [vmem:[#allocation10 + $0x70] sm:$0xff]
    %v1347 = vld [vmem:[#allocation10 + $0x78] sm:$0xff]
    %v1348 = vld [vmem:[#allocation10 + $0x80] sm:$0xff]
    %v1349 = vld [vmem:[#allocation10 + $0x88] sm:$0xff]
    %v1350 = vld [vmem:[#allocation10 + $0x90] sm:$0xff]
    %v1351 = vld [vmem:[#allocation10 + $0x98] sm:$0xff]
    %v1352 = vld [vmem:[#allocation10 + $0xa0] sm:$0xff]
    %v1353 = vld [vmem:[#allocation10 + $0xa8] sm:$0xff]
    %v1354 = vld [vmem:[#allocation10 + $0xb0] sm:$0xff]
    %v1355 = vld [vmem:[#allocation10 + $0xb8] sm:$0xff]
    %v1356 = vld [vmem:[#allocation10 + $0xc0] sm:$0xff]
    %v1357 = vld [vmem:[#allocation10 + $0xc8] sm:$0xff]
    %v1358 = vld [vmem:[#allocation10 + $0xd0] sm:$0xff]
    %v1359 = vld [vmem:[#allocation10 + $0xd8] sm:$0xff]
    %v1360 = vld [vmem:[#allocation10 + $0xe0] sm:$0xff]
    %v1361 = vld [vmem:[#allocation10 + $0xe8] sm:$0xff]
    %v1362 = vld [vmem:[#allocation10 + $0xf0] sm:$0xff]
    %v1363 = vld [vmem:[#allocation10 + $0xf8] sm:$0xff]
    %v1396 = vunpack.c.l.b16 %v1332
    %v1397 = vunpack.c.h.b16 %v1332
    %v1398 = vunpack.c.l.b16 %v1333
    %v1399 = vunpack.c.h.b16 %v1333
    %v1400 = vunpack.c.l.b16 %v1334
    %v1401 = vunpack.c.h.b16 %v1334
    %v1402 = vunpack.c.l.b16 %v1335
    %v1403 = vunpack.c.h.b16 %v1335
    %v1404 = vunpack.c.l.b16 %v1336
    %v1405 = vunpack.c.h.b16 %v1336
    %v1406 = vunpack.c.l.b16 %v1337
    %v1407 = vunpack.c.h.b16 %v1337
    %v1408 = vunpack.c.l.b16 %v1338
    %v1409 = vunpack.c.h.b16 %v1338
    %v1410 = vunpack.c.l.b16 %v1339
    %v1411 = vunpack.c.h.b16 %v1339
    %v1412 = vunpack.c.l.b16 %v1340
    %v1413 = vunpack.c.h.b16 %v1340
    %v1414 = vunpack.c.l.b16 %v1341
    %v1415 = vunpack.c.h.b16 %v1341
    %v1416 = vunpack.c.l.b16 %v1342
    %v1417 = vunpack.c.h.b16 %v1342
    %v1418 = vunpack.c.l.b16 %v1343
    %v1419 = vunpack.c.h.b16 %v1343
    %v1420 = vunpack.c.l.b16 %v1344
    %v1421 = vunpack.c.h.b16 %v1344
    %v1422 = vunpack.c.l.b16 %v1345
    %v1423 = vunpack.c.h.b16 %v1345
    %v1424 = vunpack.c.l.b16 %v1346
    %v1425 = vunpack.c.h.b16 %v1346
    %v1426 = vunpack.c.l.b16 %v1347
    %v1427 = vunpack.c.h.b16 %v1347
    %v1428 = vunpack.c.l.b16 %v1348
    %v1429 = vunpack.c.h.b16 %v1348
    %v1430 = vunpack.c.l.b16 %v1349
    %v1431 = vunpack.c.h.b16 %v1349
    %v1432 = vunpack.c.l.b16 %v1350
    %v1433 = vunpack.c.h.b16 %v1350
    %v1434 = vunpack.c.l.b16 %v1351
    %v1435 = vunpack.c.h.b16 %v1351
    %v1436 = vunpack.c.l.b16 %v1352
    %v1437 = vunpack.c.h.b16 %v1352
    %v1438 = vunpack.c.l.b16 %v1353
    %v1439 = vunpack.c.h.b16 %v1353
    %v1440 = vunpack.c.l.b16 %v1354
    %v1441 = vunpack.c.h.b16 %v1354
    %v1442 = vunpack.c.l.b16 %v1355
    %v1443 = vunpack.c.h.b16 %v1355
    %v1444 = vunpack.c.l.b16 %v1356
    %v1445 = vunpack.c.h.b16 %v1356
    %v1446 = vunpack.c.l.b16 %v1357
    %v1447 = vunpack.c.h.b16 %v1357
    %v1448 = vunpack.c.l.b16 %v1358
    %v1449 = vunpack.c.h.b16 %v1358
    %v1450 = vunpack.c.l.b16 %v1359
    %v1451 = vunpack.c.h.b16 %v1359
    %v1452 = vunpack.c.l.b16 %v1360
    %v1453 = vunpack.c.h.b16 %v1360
    %v1454 = vunpack.c.l.b16 %v1361
    %v1455 = vunpack.c.h.b16 %v1361
    %v1456 = vunpack.c.l.b16 %v1362
    %v1457 = vunpack.c.h.b16 %v1362
    %v1458 = vunpack.c.l.b16 %v1363
    %v1459 = vunpack.c.h.b16 %v1363
    %v1460 = vpack.c.b16 %v1400, %v1396
    %v1461 = vpack.c.b16 %v1401, %v1397
    %v1462 = vpack.c.b16 %v1402, %v1398
    %v1463 = vpack.c.b16 %v1403, %v1399
    %v1464 = vpack.c.b16 %v1408, %v1404
    %v1465 = vpack.c.b16 %v1409, %v1405
    %v1466 = vpack.c.b16 %v1410, %v1406
    %v1467 = vpack.c.b16 %v1411, %v1407
    %v1468 = vpack.c.b16 %v1416, %v1412
    %v1469 = vpack.c.b16 %v1417, %v1413
    %v1470 = vpack.c.b16 %v1418, %v1414
    %v1471 = vpack.c.b16 %v1419, %v1415
    %v1472 = vpack.c.b16 %v1424, %v1420
    %v1473 = vpack.c.b16 %v1425, %v1421
    %v1474 = vpack.c.b16 %v1426, %v1422
    %v1475 = vpack.c.b16 %v1427, %v1423
    %v1476 = vpack.c.b16 %v1432, %v1428
    %v1477 = vpack.c.b16 %v1433, %v1429
    %v1478 = vpack.c.b16 %v1434, %v1430
    %v1479 = vpack.c.b16 %v1435, %v1431
    %v1480 = vpack.c.b16 %v1440, %v1436
    %v1481 = vpack.c.b16 %v1441, %v1437
    %v1482 = vpack.c.b16 %v1442, %v1438
    %v1483 = vpack.c.b16 %v1443, %v1439
    %v1484 = vpack.c.b16 %v1448, %v1444
    %v1485 = vpack.c.b16 %v1449, %v1445
    %v1486 = vpack.c.b16 %v1450, %v1446
    %v1487 = vpack.c.b16 %v1451, %v1447
    %v1488 = vpack.c.b16 %v1456, %v1452
    %v1489 = vpack.c.b16 %v1457, %v1453
    %v1490 = vpack.c.b16 %v1458, %v1454
    %v1491 = vpack.c.b16 %v1459, %v1455
    %1524 = vmatprep.subr.bf16.mxu0 %v1489
    %1525 = vmatpush1.bf16.msra.mxu0 %v1488
    %1526 = vmatprep.subr.bf16.mxu0 %v1485
    %1527 = vmatpush1.bf16.msra.mxu0 %v1484
    %1528 = vmatprep.subr.bf16.mxu0 %v1481
    %1529 = vmatpush1.bf16.msra.mxu0 %v1480
    %1530 = vmatprep.subr.bf16.mxu0 %v1477
    %1531 = vmatpush1.bf16.msra.mxu0 %v1476
    %1532 = vmatprep.subr.bf16.mxu0 %v1473
    %1533 = vmatpush1.bf16.msra.mxu0 %v1472
    %1534 = vmatprep.subr.bf16.mxu0 %v1469
    %1535 = vmatpush1.bf16.msra.mxu0 %v1468
    %1536 = vmatprep.subr.bf16.mxu0 %v1465
    %1537 = vmatpush1.bf16.msra.mxu0 %v1464
    %1538 = vmatprep.subr.bf16.mxu0 %v1461
    %1539 = vmatpush1.bf16.msra.mxu0 %v1460
    %1540 = vmatprep.subr.bf16.mxu0 0
    %1541 = vmatpush2.bf16.msra.mxu0 0
    %1542 = vmatprep.subr.bf16.mxu0 0
    %1543 = vmatpush2.bf16.msra.mxu0 0
    %1544 = vmatprep.subr.bf16.mxu0 0
    %1545 = vmatpush2.bf16.msra.mxu0 0
    %1546 = vmatprep.subr.bf16.mxu0 0
    %1547 = vmatpush2.bf16.msra.mxu0 0
    %1548 = vmatprep.subr.bf16.mxu0 0
    %1549 = vmatpush2.bf16.msra.mxu0 0
    %1550 = vmatprep.subr.bf16.mxu0 0
    %1551 = vmatpush2.bf16.msra.mxu0 0
    %1552 = vmatprep.subr.bf16.mxu0 0
    %1553 = vmatpush2.bf16.msra.mxu0 0
    %1554 = vmatprep.subr.bf16.mxu0 0
    %1555 = vmatpush2.bf16.msra.mxu0 0
    %1556 = vmatprep.mubr.bf16.mxu0 0
    %1557 = vmatmul.mubr.bf16.gmra.mxu0 %v1312
    %v1558 = vpop.f32.mrf.mxu0
    %v1559 = vadd.f32 0.0, %v1558
    %v1560 = vpop.f32.mrf.mxu0
    %v1561 = vadd.f32 0.0, %v1560
    %v1562 = vpop.f32.mrf.mxu0
    %v1563 = vadd.f32 0.0, %v1562
    %v1564 = vpop.f32.mrf.mxu0
    %v1565 = vadd.f32 0.0, %v1564
    %1566 = vdwg.mxu0
    %1567 = vmatprep.subr.bf16.mxu0 %v1491
    %1568 = vmatpush1.bf16.msra.mxu0 %v1490
    %1569 = vmatprep.subr.bf16.mxu0 %v1487
    %1570 = vmatpush1.bf16.msra.mxu0 %v1486
    %1571 = vmatprep.subr.bf16.mxu0 %v1483
    %1572 = vmatpush1.bf16.msra.mxu0 %v1482
    %1573 = vmatprep.subr.bf16.mxu0 %v1479
    %1574 = vmatpush1.bf16.msra.mxu0 %v1478
    %1575 = vmatprep.subr.bf16.mxu0 %v1475
    %1576 = vmatpush1.bf16.msra.mxu0 %v1474
    %1577 = vmatprep.subr.bf16.mxu0 %v1471
    %1578 = vmatpush1.bf16.msra.mxu0 %v1470
    %1579 = vmatprep.subr.bf16.mxu0 %v1467
    %1580 = vmatpush1.bf16.msra.mxu0 %v1466
    %1581 = vmatprep.subr.bf16.mxu0 %v1463
    %1582 = vmatpush1.bf16.msra.mxu0 %v1462
    %1583 = vmatprep.subr.bf16.mxu0 0
    %1584 = vmatpush2.bf16.msra.mxu0 0
    %1585 = vmatprep.subr.bf16.mxu0 0
    %1586 = vmatpush2.bf16.msra.mxu0 0
    %1587 = vmatprep.subr.bf16.mxu0 0
    %1588 = vmatpush2.bf16.msra.mxu0 0
    %1589 = vmatprep.subr.bf16.mxu0 0
    %1590 = vmatpush2.bf16.msra.mxu0 0
    %1591 = vmatprep.subr.bf16.mxu0 0
    %1592 = vmatpush2.bf16.msra.mxu0 0
    %1593 = vmatprep.subr.bf16.mxu0 0
    %1594 = vmatpush2.bf16.msra.mxu0 0
    %1595 = vmatprep.subr.bf16.mxu0 0
    %1596 = vmatpush2.bf16.msra.mxu0 0
    %1597 = vmatprep.subr.bf16.mxu0 0
    %1598 = vmatpush2.bf16.msra.mxu0 0
    %1599 = vmatprep.mubr.bf16.mxu0 0
    %1600 = vmatmul.mubr.bf16.gmra.mxu0 %v1312
    %v1601 = vpop.f32.mrf.mxu0
    %v1602 = vadd.f32 0.0, %v1601
    %v1603 = vpop.f32.mrf.mxu0
    %v1604 = vadd.f32 0.0, %v1603
    %v1605 = vpop.f32.mrf.mxu0
    %v1606 = vadd.f32 0.0, %v1605
    %v1607 = vpop.f32.mrf.mxu0
    %v1608 = vadd.f32 0.0, %v1607
    %1609 = vdwg.mxu0
    %v1610 = vadd.f32 %v1324, %v1559
    %v1611 = vadd.f32 %v1325, %v1561
    %v1612 = vadd.f32 %v1326, %v1602
    %v1613 = vadd.f32 %v1327, %v1604
    %v1614 = vadd.f32 %v1328, %v1563
    %v1615 = vadd.f32 %v1329, %v1565
    %v1616 = vadd.f32 %v1330, %v1606
    %v1617 = vadd.f32 %v1331, %v1608
    %v1618 = vmul.f32 %v1610, 0.5
    %v1619 = vmul.f32 %v1614, 0.5
    %v1620 = vtanh.pop %v1618
    %v1621 = vtanh.pop %v1619
    %v1622 = vmul.f32 %v1620, 0.5
    %v1623 = vmul.f32 %v1621, 0.5
    %v1624 = vadd.f32 %v1622, 0.5
    %v1625 = vadd.f32 %v1623, 0.5
    %v1626 = vmul.f32 %v1611, 0.5
    %v1627 = vmul.f32 %v1615, 0.5
    %v1628 = vtanh.pop %v1626
    %v1629 = vtanh.pop %v1627
    %v1630 = vmul.f32 %v1628, 0.5
    %v1631 = vmul.f32 %v1629, 0.5
    %v1632 = vadd.f32 %v1630, 0.5
    %v1633 = vadd.f32 %v1631, 0.5
    %v1634 = vtanh.pop %v1612
    %v1635 = vtanh.pop %v1616
    %v1636 = vmul.f32 %v1613, 0.5
    %v1637 = vmul.f32 %v1617, 0.5
    %v1638 = vtanh.pop %v1636
    %v1639 = vtanh.pop %v1637
    %v1640 = vmul.f32 %v1638, 0.5
    %v1641 = vmul.f32 %v1639, 0.5
    %v1642 = vadd.f32 %v1640, 0.5
    %v1643 = vadd.f32 %v1641, 0.5
    %v1644 = vmul.f32 %v1632, %v1306
    %v1645 = vmul.f32 %v1633, %v1307
    %v1646 = vmul.f32 %v1624, %v1634
    %v1647 = vmul.f32 %v1625, %v1635
    %v1648 = vadd.f32 %v1644, %v1646
    %v1649 = vadd.f32 %v1645, %v1647
    %v1650 = vtanh.pop %v1648
    %v1651 = vtanh.pop %v1649
    %v1652 = vmul.f32 %v1642, %v1650
    %v1653 = vmul.f32 %v1643, %v1651
    %v1654 = vpack.c.bf16 %v1653, %v1652
    %v1656 = vunpack.c.l.b16 %v1654
    %v1657 = vunpack.c.h.b16 %v1654
    %v1658 = vpack.c.b16 %v1656, %v1656
    %v1659 = vpack.c.b16 %v1657, %v1657
    %s1662 = scalar_lea.vmem [#allocation11], 16
    %1663 = vst [vmem:[%s1662] sm:$0xf] %v1658
    %1664 = vst [vmem:[%s1662 + $0x4] sm:$0xf] %v1659
    %s1665 = scalar_lea.vmem [#allocation2], 192
    %v1666 = vld [vmem:[%s1665] sm:$0xff]
    %v1667 = vld [vmem:[%s1665 + $0x8] sm:$0xff]
    %v1668 = vld [vmem:[%s1665 + $0x10] sm:$0xff]
    %v1669 = vld [vmem:[%s1665 + $0x18] sm:$0xff]
    %v1670 = vld [vmem:[%s1665 + $0x20] sm:$0xff]
    %v1671 = vld [vmem:[%s1665 + $0x28] sm:$0xff]
    %v1672 = vld [vmem:[%s1665 + $0x30] sm:$0xff]
    %v1673 = vld [vmem:[%s1665 + $0x38] sm:$0xff]
    %v1674 = vld [vmem:[#allocation10] sm:$0xff]
    %v1675 = vld [vmem:[#allocation10 + $0x8] sm:$0xff]
    %v1676 = vld [vmem:[#allocation10 + $0x10] sm:$0xff]
    %v1677 = vld [vmem:[#allocation10 + $0x18] sm:$0xff]
    %v1678 = vld [vmem:[#allocation10 + $0x20] sm:$0xff]
    %v1679 = vld [vmem:[#allocation10 + $0x28] sm:$0xff]
    %v1680 = vld [vmem:[#allocation10 + $0x30] sm:$0xff]
    %v1681 = vld [vmem:[#allocation10 + $0x38] sm:$0xff]
    %v1682 = vld [vmem:[#allocation10 + $0x40] sm:$0xff]
    %v1683 = vld [vmem:[#allocation10 + $0x48] sm:$0xff]
    %v1684 = vld [vmem:[#allocation10 + $0x50] sm:$0xff]
    %v1685 = vld [vmem:[#allocation10 + $0x58] sm:$0xff]
    %v1686 = vld [vmem:[#allocation10 + $0x60] sm:$0xff]
    %v1687 = vld [vmem:[#allocation10 + $0x68] sm:$0xff]
    %v1688 = vld [vmem:[#allocation10 + $0x70] sm:$0xff]
    %v1689 = vld [vmem:[#allocation10 + $0x78] sm:$0xff]
    %v1690 = vld [vmem:[#allocation10 + $0x80] sm:$0xff]
    %v1691 = vld [vmem:[#allocation10 + $0x88] sm:$0xff]
    %v1692 = vld [vmem:[#allocation10 + $0x90] sm:$0xff]
    %v1693 = vld [vmem:[#allocation10 + $0x98] sm:$0xff]
    %v1694 = vld [vmem:[#allocation10 + $0xa0] sm:$0xff]
    %v1695 = vld [vmem:[#allocation10 + $0xa8] sm:$0xff]
    %v1696 = vld [vmem:[#allocation10 + $0xb0] sm:$0xff]
    %v1697 = vld [vmem:[#allocation10 + $0xb8] sm:$0xff]
    %v1698 = vld [vmem:[#allocation10 + $0xc0] sm:$0xff]
    %v1699 = vld [vmem:[#allocation10 + $0xc8] sm:$0xff]
    %v1700 = vld [vmem:[#allocation10 + $0xd0] sm:$0xff]
    %v1701 = vld [vmem:[#allocation10 + $0xd8] sm:$0xff]
    %v1702 = vld [vmem:[#allocation10 + $0xe0] sm:$0xff]
    %v1703 = vld [vmem:[#allocation10 + $0xe8] sm:$0xff]
    %v1704 = vld [vmem:[#allocation10 + $0xf0] sm:$0xff]
    %v1705 = vld [vmem:[#allocation10 + $0xf8] sm:$0xff]
    %v1738 = vunpack.c.l.b16 %v1674
    %v1739 = vunpack.c.h.b16 %v1674
    %v1740 = vunpack.c.l.b16 %v1675
    %v1741 = vunpack.c.h.b16 %v1675
    %v1742 = vunpack.c.l.b16 %v1676
    %v1743 = vunpack.c.h.b16 %v1676
    %v1744 = vunpack.c.l.b16 %v1677
    %v1745 = vunpack.c.h.b16 %v1677
    %v1746 = vunpack.c.l.b16 %v1678
    %v1747 = vunpack.c.h.b16 %v1678
    %v1748 = vunpack.c.l.b16 %v1679
    %v1749 = vunpack.c.h.b16 %v1679
    %v1750 = vunpack.c.l.b16 %v1680
    %v1751 = vunpack.c.h.b16 %v1680
    %v1752 = vunpack.c.l.b16 %v1681
    %v1753 = vunpack.c.h.b16 %v1681
    %v1754 = vunpack.c.l.b16 %v1682
    %v1755 = vunpack.c.h.b16 %v1682
    %v1756 = vunpack.c.l.b16 %v1683
    %v1757 = vunpack.c.h.b16 %v1683
    %v1758 = vunpack.c.l.b16 %v1684
    %v1759 = vunpack.c.h.b16 %v1684
    %v1760 = vunpack.c.l.b16 %v1685
    %v1761 = vunpack.c.h.b16 %v1685
    %v1762 = vunpack.c.l.b16 %v1686
    %v1763 = vunpack.c.h.b16 %v1686
    %v1764 = vunpack.c.l.b16 %v1687
    %v1765 = vunpack.c.h.b16 %v1687
    %v1766 = vunpack.c.l.b16 %v1688
    %v1767 = vunpack.c.h.b16 %v1688
    %v1768 = vunpack.c.l.b16 %v1689
    %v1769 = vunpack.c.h.b16 %v1689
    %v1770 = vunpack.c.l.b16 %v1690
    %v1771 = vunpack.c.h.b16 %v1690
    %v1772 = vunpack.c.l.b16 %v1691
    %v1773 = vunpack.c.h.b16 %v1691
    %v1774 = vunpack.c.l.b16 %v1692
    %v1775 = vunpack.c.h.b16 %v1692
    %v1776 = vunpack.c.l.b16 %v1693
    %v1777 = vunpack.c.h.b16 %v1693
    %v1778 = vunpack.c.l.b16 %v1694
    %v1779 = vunpack.c.h.b16 %v1694
    %v1780 = vunpack.c.l.b16 %v1695
    %v1781 = vunpack.c.h.b16 %v1695
    %v1782 = vunpack.c.l.b16 %v1696
    %v1783 = vunpack.c.h.b16 %v1696
    %v1784 = vunpack.c.l.b16 %v1697
    %v1785 = vunpack.c.h.b16 %v1697
    %v1786 = vunpack.c.l.b16 %v1698
    %v1787 = vunpack.c.h.b16 %v1698
    %v1788 = vunpack.c.l.b16 %v1699
    %v1789 = vunpack.c.h.b16 %v1699
    %v1790 = vunpack.c.l.b16 %v1700
    %v1791 = vunpack.c.h.b16 %v1700
    %v1792 = vunpack.c.l.b16 %v1701
    %v1793 = vunpack.c.h.b16 %v1701
    %v1794 = vunpack.c.l.b16 %v1702
    %v1795 = vunpack.c.h.b16 %v1702
    %v1796 = vunpack.c.l.b16 %v1703
    %v1797 = vunpack.c.h.b16 %v1703
    %v1798 = vunpack.c.l.b16 %v1704
    %v1799 = vunpack.c.h.b16 %v1704
    %v1800 = vunpack.c.l.b16 %v1705
    %v1801 = vunpack.c.h.b16 %v1705
    %v1802 = vpack.c.b16 %v1742, %v1738
    %v1803 = vpack.c.b16 %v1743, %v1739
    %v1804 = vpack.c.b16 %v1744, %v1740
    %v1805 = vpack.c.b16 %v1745, %v1741
    %v1806 = vpack.c.b16 %v1750, %v1746
    %v1807 = vpack.c.b16 %v1751, %v1747
    %v1808 = vpack.c.b16 %v1752, %v1748
    %v1809 = vpack.c.b16 %v1753, %v1749
    %v1810 = vpack.c.b16 %v1758, %v1754
    %v1811 = vpack.c.b16 %v1759, %v1755
    %v1812 = vpack.c.b16 %v1760, %v1756
    %v1813 = vpack.c.b16 %v1761, %v1757
    %v1814 = vpack.c.b16 %v1766, %v1762
    %v1815 = vpack.c.b16 %v1767, %v1763
    %v1816 = vpack.c.b16 %v1768, %v1764
    %v1817 = vpack.c.b16 %v1769, %v1765
    %v1818 = vpack.c.b16 %v1774, %v1770
    %v1819 = vpack.c.b16 %v1775, %v1771
    %v1820 = vpack.c.b16 %v1776, %v1772
    %v1821 = vpack.c.b16 %v1777, %v1773
    %v1822 = vpack.c.b16 %v1782, %v1778
    %v1823 = vpack.c.b16 %v1783, %v1779
    %v1824 = vpack.c.b16 %v1784, %v1780
    %v1825 = vpack.c.b16 %v1785, %v1781
    %v1826 = vpack.c.b16 %v1790, %v1786
    %v1827 = vpack.c.b16 %v1791, %v1787
    %v1828 = vpack.c.b16 %v1792, %v1788
    %v1829 = vpack.c.b16 %v1793, %v1789
    %v1830 = vpack.c.b16 %v1798, %v1794
    %v1831 = vpack.c.b16 %v1799, %v1795
    %v1832 = vpack.c.b16 %v1800, %v1796
    %v1833 = vpack.c.b16 %v1801, %v1797
    %1866 = vmatprep.subr.bf16.mxu0 %v1831
    %1867 = vmatpush1.bf16.msra.mxu0 %v1830
    %1868 = vmatprep.subr.bf16.mxu0 %v1827
    %1869 = vmatpush1.bf16.msra.mxu0 %v1826
    %1870 = vmatprep.subr.bf16.mxu0 %v1823
    %1871 = vmatpush1.bf16.msra.mxu0 %v1822
    %1872 = vmatprep.subr.bf16.mxu0 %v1819
    %1873 = vmatpush1.bf16.msra.mxu0 %v1818
    %1874 = vmatprep.subr.bf16.mxu0 %v1815
    %1875 = vmatpush1.bf16.msra.mxu0 %v1814
    %1876 = vmatprep.subr.bf16.mxu0 %v1811
    %1877 = vmatpush1.bf16.msra.mxu0 %v1810
    %1878 = vmatprep.subr.bf16.mxu0 %v1807
    %1879 = vmatpush1.bf16.msra.mxu0 %v1806
    %1880 = vmatprep.subr.bf16.mxu0 %v1803
    %1881 = vmatpush1.bf16.msra.mxu0 %v1802
    %1882 = vmatprep.subr.bf16.mxu0 0
    %1883 = vmatpush2.bf16.msra.mxu0 0
    %1884 = vmatprep.subr.bf16.mxu0 0
    %1885 = vmatpush2.bf16.msra.mxu0 0
    %1886 = vmatprep.subr.bf16.mxu0 0
    %1887 = vmatpush2.bf16.msra.mxu0 0
    %1888 = vmatprep.subr.bf16.mxu0 0
    %1889 = vmatpush2.bf16.msra.mxu0 0
    %1890 = vmatprep.subr.bf16.mxu0 0
    %1891 = vmatpush2.bf16.msra.mxu0 0
    %1892 = vmatprep.subr.bf16.mxu0 0
    %1893 = vmatpush2.bf16.msra.mxu0 0
    %1894 = vmatprep.subr.bf16.mxu0 0
    %1895 = vmatpush2.bf16.msra.mxu0 0
    %1896 = vmatprep.subr.bf16.mxu0 0
    %1897 = vmatpush2.bf16.msra.mxu0 0
    %1898 = vmatprep.mubr.bf16.mxu0 0
    %1899 = vmatmul.mubr.bf16.gmra.mxu0 %v1654
    %v1900 = vpop.f32.mrf.mxu0
    %v1901 = vadd.f32 0.0, %v1900
    %v1902 = vpop.f32.mrf.mxu0
    %v1903 = vadd.f32 0.0, %v1902
    %v1904 = vpop.f32.mrf.mxu0
    %v1905 = vadd.f32 0.0, %v1904
    %v1906 = vpop.f32.mrf.mxu0
    %v1907 = vadd.f32 0.0, %v1906
    %1908 = vdwg.mxu0
    %1909 = vmatprep.subr.bf16.mxu0 %v1833
    %1910 = vmatpush1.bf16.msra.mxu0 %v1832
    %1911 = vmatprep.subr.bf16.mxu0 %v1829
    %1912 = vmatpush1.bf16.msra.mxu0 %v1828
    %1913 = vmatprep.subr.bf16.mxu0 %v1825
    %1914 = vmatpush1.bf16.msra.mxu0 %v1824
    %1915 = vmatprep.subr.bf16.mxu0 %v1821
    %1916 = vmatpush1.bf16.msra.mxu0 %v1820
    %1917 = vmatprep.subr.bf16.mxu0 %v1817
    %1918 = vmatpush1.bf16.msra.mxu0 %v1816
    %1919 = vmatprep.subr.bf16.mxu0 %v1813
    %1920 = vmatpush1.bf16.msra.mxu0 %v1812
    %1921 = vmatprep.subr.bf16.mxu0 %v1809
    %1922 = vmatpush1.bf16.msra.mxu0 %v1808
    %1923 = vmatprep.subr.bf16.mxu0 %v1805
    %1924 = vmatpush1.bf16.msra.mxu0 %v1804
    %1925 = vmatprep.subr.bf16.mxu0 0
    %1926 = vmatpush2.bf16.msra.mxu0 0
    %1927 = vmatprep.subr.bf16.mxu0 0
    %1928 = vmatpush2.bf16.msra.mxu0 0
    %1929 = vmatprep.subr.bf16.mxu0 0
    %1930 = vmatpush2.bf16.msra.mxu0 0
    %1931 = vmatprep.subr.bf16.mxu0 0
    %1932 = vmatpush2.bf16.msra.mxu0 0
    %1933 = vmatprep.subr.bf16.mxu0 0
    %1934 = vmatpush2.bf16.msra.mxu0 0
    %1935 = vmatprep.subr.bf16.mxu0 0
    %1936 = vmatpush2.bf16.msra.mxu0 0
    %1937 = vmatprep.subr.bf16.mxu0 0
    %1938 = vmatpush2.bf16.msra.mxu0 0
    %1939 = vmatprep.subr.bf16.mxu0 0
    %1940 = vmatpush2.bf16.msra.mxu0 0
    %1941 = vmatprep.mubr.bf16.mxu0 0
    %1942 = vmatmul.mubr.bf16.gmra.mxu0 %v1654
    %v1943 = vpop.f32.mrf.mxu0
    %v1944 = vadd.f32 0.0, %v1943
    %v1945 = vpop.f32.mrf.mxu0
    %v1946 = vadd.f32 0.0, %v1945
    %v1947 = vpop.f32.mrf.mxu0
    %v1948 = vadd.f32 0.0, %v1947
    %v1949 = vpop.f32.mrf.mxu0
    %v1950 = vadd.f32 0.0, %v1949
    %1951 = vdwg.mxu0
    %v1952 = vadd.f32 %v1666, %v1901
    %v1953 = vadd.f32 %v1667, %v1903
    %v1954 = vadd.f32 %v1668, %v1944
    %v1955 = vadd.f32 %v1669, %v1946
    %v1956 = vadd.f32 %v1670, %v1905
    %v1957 = vadd.f32 %v1671, %v1907
    %v1958 = vadd.f32 %v1672, %v1948
    %v1959 = vadd.f32 %v1673, %v1950
    %v1960 = vmul.f32 %v1952, 0.5
    %v1961 = vmul.f32 %v1956, 0.5
    %v1962 = vtanh.pop %v1960
    %v1963 = vtanh.pop %v1961
    %v1964 = vmul.f32 %v1962, 0.5
    %v1965 = vmul.f32 %v1963, 0.5
    %v1966 = vadd.f32 %v1964, 0.5
    %v1967 = vadd.f32 %v1965, 0.5
    %v1968 = vmul.f32 %v1953, 0.5
    %v1969 = vmul.f32 %v1957, 0.5
    %v1970 = vtanh.pop %v1968
    %v1971 = vtanh.pop %v1969
    %v1972 = vmul.f32 %v1970, 0.5
    %v1973 = vmul.f32 %v1971, 0.5
    %v1974 = vadd.f32 %v1972, 0.5
    %v1975 = vadd.f32 %v1973, 0.5
    %v1976 = vtanh.pop %v1954
    %v1977 = vtanh.pop %v1958
    %v1978 = vmul.f32 %v1955, 0.5
    %v1979 = vmul.f32 %v1959, 0.5
    %v1980 = vtanh.pop %v1978
    %v1981 = vtanh.pop %v1979
    %v1982 = vmul.f32 %v1980, 0.5
    %v1983 = vmul.f32 %v1981, 0.5
    %v1984 = vadd.f32 %v1982, 0.5
    %v1985 = vadd.f32 %v1983, 0.5
    %v1986 = vmul.f32 %v1974, %v1648
    %v1987 = vmul.f32 %v1975, %v1649
    %v1988 = vmul.f32 %v1966, %v1976
    %v1989 = vmul.f32 %v1967, %v1977
    %v1990 = vadd.f32 %v1986, %v1988
    %v1991 = vadd.f32 %v1987, %v1989
    %v1992 = vtanh.pop %v1990
    %v1993 = vtanh.pop %v1991
    %v1994 = vmul.f32 %v1984, %v1992
    %v1995 = vmul.f32 %v1985, %v1993
    %v1996 = vpack.c.bf16 %v1995, %v1994
    %v1998 = vunpack.c.l.b16 %v1996
    %v1999 = vunpack.c.h.b16 %v1996
    %v2000 = vpack.c.b16 %v1998, %v1998
    %v2001 = vpack.c.b16 %v1999, %v1999
    %s2004 = scalar_lea.vmem [#allocation11], 24
    %2005 = vst [vmem:[%s2004] sm:$0xf] %v2000
    %2006 = vst [vmem:[%s2004 + $0x4] sm:$0xf] %v2001
    %s2007 = scalar_lea.vmem [#allocation2], 256
    %v2008 = vld [vmem:[%s2007] sm:$0xff]
    %v2009 = vld [vmem:[%s2007 + $0x8] sm:$0xff]
    %v2010 = vld [vmem:[%s2007 + $0x10] sm:$0xff]
    %v2011 = vld [vmem:[%s2007 + $0x18] sm:$0xff]
    %v2012 = vld [vmem:[%s2007 + $0x20] sm:$0xff]
    %v2013 = vld [vmem:[%s2007 + $0x28] sm:$0xff]
    %v2014 = vld [vmem:[%s2007 + $0x30] sm:$0xff]
    %v2015 = vld [vmem:[%s2007 + $0x38] sm:$0xff]
    %v2016 = vld [vmem:[#allocation10] sm:$0xff]
    %v2017 = vld [vmem:[#allocation10 + $0x8] sm:$0xff]
    %v2018 = vld [vmem:[#allocation10 + $0x10] sm:$0xff]
    %v2019 = vld [vmem:[#allocation10 + $0x18] sm:$0xff]
    %v2020 = vld [vmem:[#allocation10 + $0x20] sm:$0xff]
    %v2021 = vld [vmem:[#allocation10 + $0x28] sm:$0xff]
    %v2022 = vld [vmem:[#allocation10 + $0x30] sm:$0xff]
    %v2023 = vld [vmem:[#allocation10 + $0x38] sm:$0xff]
    %v2024 = vld [vmem:[#allocation10 + $0x40] sm:$0xff]
    %v2025 = vld [vmem:[#allocation10 + $0x48] sm:$0xff]
    %v2026 = vld [vmem:[#allocation10 + $0x50] sm:$0xff]
    %v2027 = vld [vmem:[#allocation10 + $0x58] sm:$0xff]
    %v2028 = vld [vmem:[#allocation10 + $0x60] sm:$0xff]
    %v2029 = vld [vmem:[#allocation10 + $0x68] sm:$0xff]
    %v2030 = vld [vmem:[#allocation10 + $0x70] sm:$0xff]
    %v2031 = vld [vmem:[#allocation10 + $0x78] sm:$0xff]
    %v2032 = vld [vmem:[#allocation10 + $0x80] sm:$0xff]
    %v2033 = vld [vmem:[#allocation10 + $0x88] sm:$0xff]
    %v2034 = vld [vmem:[#allocation10 + $0x90] sm:$0xff]
    %v2035 = vld [vmem:[#allocation10 + $0x98] sm:$0xff]
    %v2036 = vld [vmem:[#allocation10 + $0xa0] sm:$0xff]
    %v2037 = vld [vmem:[#allocation10 + $0xa8] sm:$0xff]
    %v2038 = vld [vmem:[#allocation10 + $0xb0] sm:$0xff]
    %v2039 = vld [vmem:[#allocation10 + $0xb8] sm:$0xff]
    %v2040 = vld [vmem:[#allocation10 + $0xc0] sm:$0xff]
    %v2041 = vld [vmem:[#allocation10 + $0xc8] sm:$0xff]
    %v2042 = vld [vmem:[#allocation10 + $0xd0] sm:$0xff]
    %v2043 = vld [vmem:[#allocation10 + $0xd8] sm:$0xff]
    %v2044 = vld [vmem:[#allocation10 + $0xe0] sm:$0xff]
    %v2045 = vld [vmem:[#allocation10 + $0xe8] sm:$0xff]
    %v2046 = vld [vmem:[#allocation10 + $0xf0] sm:$0xff]
    %v2047 = vld [vmem:[#allocation10 + $0xf8] sm:$0xff]
    %v2080 = vunpack.c.l.b16 %v2016
    %v2081 = vunpack.c.h.b16 %v2016
    %v2082 = vunpack.c.l.b16 %v2017
    %v2083 = vunpack.c.h.b16 %v2017
    %v2084 = vunpack.c.l.b16 %v2018
    %v2085 = vunpack.c.h.b16 %v2018
    %v2086 = vunpack.c.l.b16 %v2019
    %v2087 = vunpack.c.h.b16 %v2019
    %v2088 = vunpack.c.l.b16 %v2020
    %v2089 = vunpack.c.h.b16 %v2020
    %v2090 = vunpack.c.l.b16 %v2021
    %v2091 = vunpack.c.h.b16 %v2021
    %v2092 = vunpack.c.l.b16 %v2022
    %v2093 = vunpack.c.h.b16 %v2022
    %v2094 = vunpack.c.l.b16 %v2023
    %v2095 = vunpack.c.h.b16 %v2023
    %v2096 = vunpack.c.l.b16 %v2024
    %v2097 = vunpack.c.h.b16 %v2024
    %v2098 = vunpack.c.l.b16 %v2025
    %v2099 = vunpack.c.h.b16 %v2025
    %v2100 = vunpack.c.l.b16 %v2026
    %v2101 = vunpack.c.h.b16 %v2026
    %v2102 = vunpack.c.l.b16 %v2027
    %v2103 = vunpack.c.h.b16 %v2027
    %v2104 = vunpack.c.l.b16 %v2028
    %v2105 = vunpack.c.h.b16 %v2028
    %v2106 = vunpack.c.l.b16 %v2029
    %v2107 = vunpack.c.h.b16 %v2029
    %v2108 = vunpack.c.l.b16 %v2030
    %v2109 = vunpack.c.h.b16 %v2030
    %v2110 = vunpack.c.l.b16 %v2031
    %v2111 = vunpack.c.h.b16 %v2031
    %v2112 = vunpack.c.l.b16 %v2032
    %v2113 = vunpack.c.h.b16 %v2032
    %v2114 = vunpack.c.l.b16 %v2033
    %v2115 = vunpack.c.h.b16 %v2033
    %v2116 = vunpack.c.l.b16 %v2034
    %v2117 = vunpack.c.h.b16 %v2034
    %v2118 = vunpack.c.l.b16 %v2035
    %v2119 = vunpack.c.h.b16 %v2035
    %v2120 = vunpack.c.l.b16 %v2036
    %v2121 = vunpack.c.h.b16 %v2036
    %v2122 = vunpack.c.l.b16 %v2037
    %v2123 = vunpack.c.h.b16 %v2037
    %v2124 = vunpack.c.l.b16 %v2038
    %v2125 = vunpack.c.h.b16 %v2038
    %v2126 = vunpack.c.l.b16 %v2039
    %v2127 = vunpack.c.h.b16 %v2039
    %v2128 = vunpack.c.l.b16 %v2040
    %v2129 = vunpack.c.h.b16 %v2040
    %v2130 = vunpack.c.l.b16 %v2041
    %v2131 = vunpack.c.h.b16 %v2041
    %v2132 = vunpack.c.l.b16 %v2042
    %v2133 = vunpack.c.h.b16 %v2042
    %v2134 = vunpack.c.l.b16 %v2043
    %v2135 = vunpack.c.h.b16 %v2043
    %v2136 = vunpack.c.l.b16 %v2044
    %v2137 = vunpack.c.h.b16 %v2044
    %v2138 = vunpack.c.l.b16 %v2045
    %v2139 = vunpack.c.h.b16 %v2045
    %v2140 = vunpack.c.l.b16 %v2046
    %v2141 = vunpack.c.h.b16 %v2046
    %v2142 = vunpack.c.l.b16 %v2047
    %v2143 = vunpack.c.h.b16 %v2047
    %v2144 = vpack.c.b16 %v2084, %v2080
    %v2145 = vpack.c.b16 %v2085, %v2081
    %v2146 = vpack.c.b16 %v2086, %v2082
    %v2147 = vpack.c.b16 %v2087, %v2083
    %v2148 = vpack.c.b16 %v2092, %v2088
    %v2149 = vpack.c.b16 %v2093, %v2089
    %v2150 = vpack.c.b16 %v2094, %v2090
    %v2151 = vpack.c.b16 %v2095, %v2091
    %v2152 = vpack.c.b16 %v2100, %v2096
    %v2153 = vpack.c.b16 %v2101, %v2097
    %v2154 = vpack.c.b16 %v2102, %v2098
    %v2155 = vpack.c.b16 %v2103, %v2099
    %v2156 = vpack.c.b16 %v2108, %v2104
    %v2157 = vpack.c.b16 %v2109, %v2105
    %v2158 = vpack.c.b16 %v2110, %v2106
    %v2159 = vpack.c.b16 %v2111, %v2107
    %v2160 = vpack.c.b16 %v2116, %v2112
    %v2161 = vpack.c.b16 %v2117, %v2113
    %v2162 = vpack.c.b16 %v2118, %v2114
    %v2163 = vpack.c.b16 %v2119, %v2115
    %v2164 = vpack.c.b16 %v2124, %v2120
    %v2165 = vpack.c.b16 %v2125, %v2121
    %v2166 = vpack.c.b16 %v2126, %v2122
    %v2167 = vpack.c.b16 %v2127, %v2123
    %v2168 = vpack.c.b16 %v2132, %v2128
    %v2169 = vpack.c.b16 %v2133, %v2129
    %v2170 = vpack.c.b16 %v2134, %v2130
    %v2171 = vpack.c.b16 %v2135, %v2131
    %v2172 = vpack.c.b16 %v2140, %v2136
    %v2173 = vpack.c.b16 %v2141, %v2137
    %v2174 = vpack.c.b16 %v2142, %v2138
    %v2175 = vpack.c.b16 %v2143, %v2139
    %2208 = vmatprep.subr.bf16.mxu0 %v2173
    %2209 = vmatpush1.bf16.msra.mxu0 %v2172
    %2210 = vmatprep.subr.bf16.mxu0 %v2169
    %2211 = vmatpush1.bf16.msra.mxu0 %v2168
    %2212 = vmatprep.subr.bf16.mxu0 %v2165
    %2213 = vmatpush1.bf16.msra.mxu0 %v2164
    %2214 = vmatprep.subr.bf16.mxu0 %v2161
    %2215 = vmatpush1.bf16.msra.mxu0 %v2160
    %2216 = vmatprep.subr.bf16.mxu0 %v2157
    %2217 = vmatpush1.bf16.msra.mxu0 %v2156
    %2218 = vmatprep.subr.bf16.mxu0 %v2153
    %2219 = vmatpush1.bf16.msra.mxu0 %v2152
    %2220 = vmatprep.subr.bf16.mxu0 %v2149
    %2221 = vmatpush1.bf16.msra.mxu0 %v2148
    %2222 = vmatprep.subr.bf16.mxu0 %v2145
    %2223 = vmatpush1.bf16.msra.mxu0 %v2144
    %2224 = vmatprep.subr.bf16.mxu0 0
    %2225 = vmatpush2.bf16.msra.mxu0 0
    %2226 = vmatprep.subr.bf16.mxu0 0
    %2227 = vmatpush2.bf16.msra.mxu0 0
    %2228 = vmatprep.subr.bf16.mxu0 0
    %2229 = vmatpush2.bf16.msra.mxu0 0
    %2230 = vmatprep.subr.bf16.mxu0 0
    %2231 = vmatpush2.bf16.msra.mxu0 0
    %2232 = vmatprep.subr.bf16.mxu0 0
    %2233 = vmatpush2.bf16.msra.mxu0 0
    %2234 = vmatprep.subr.bf16.mxu0 0
    %2235 = vmatpush2.bf16.msra.mxu0 0
    %2236 = vmatprep.subr.bf16.mxu0 0
    %2237 = vmatpush2.bf16.msra.mxu0 0
    %2238 = vmatprep.subr.bf16.mxu0 0
    %2239 = vmatpush2.bf16.msra.mxu0 0
    %2240 = vmatprep.mubr.bf16.mxu0 0
    %2241 = vmatmul.mubr.bf16.gmra.mxu0 %v1996
    %v2242 = vpop.f32.mrf.mxu0
    %v2243 = vadd.f32 0.0, %v2242
    %v2244 = vpop.f32.mrf.mxu0
    %v2245 = vadd.f32 0.0, %v2244
    %v2246 = vpop.f32.mrf.mxu0
    %v2247 = vadd.f32 0.0, %v2246
    %v2248 = vpop.f32.mrf.mxu0
    %v2249 = vadd.f32 0.0, %v2248
    %2250 = vdwg.mxu0
    %2251 = vmatprep.subr.bf16.mxu0 %v2175
    %2252 = vmatpush1.bf16.msra.mxu0 %v2174
    %2253 = vmatprep.subr.bf16.mxu0 %v2171
    %2254 = vmatpush1.bf16.msra.mxu0 %v2170
    %2255 = vmatprep.subr.bf16.mxu0 %v2167
    %2256 = vmatpush1.bf16.msra.mxu0 %v2166
    %2257 = vmatprep.subr.bf16.mxu0 %v2163
    %2258 = vmatpush1.bf16.msra.mxu0 %v2162
    %2259 = vmatprep.subr.bf16.mxu0 %v2159
    %2260 = vmatpush1.bf16.msra.mxu0 %v2158
    %2261 = vmatprep.subr.bf16.mxu0 %v2155
    %2262 = vmatpush1.bf16.msra.mxu0 %v2154
    %2263 = vmatprep.subr.bf16.mxu0 %v2151
    %2264 = vmatpush1.bf16.msra.mxu0 %v2150
    %2265 = vmatprep.subr.bf16.mxu0 %v2147
    %2266 = vmatpush1.bf16.msra.mxu0 %v2146
    %2267 = vmatprep.subr.bf16.mxu0 0
    %2268 = vmatpush2.bf16.msra.mxu0 0
    %2269 = vmatprep.subr.bf16.mxu0 0
    %2270 = vmatpush2.bf16.msra.mxu0 0
    %2271 = vmatprep.subr.bf16.mxu0 0
    %2272 = vmatpush2.bf16.msra.mxu0 0
    %2273 = vmatprep.subr.bf16.mxu0 0
    %2274 = vmatpush2.bf16.msra.mxu0 0
    %2275 = vmatprep.subr.bf16.mxu0 0
    %2276 = vmatpush2.bf16.msra.mxu0 0
    %2277 = vmatprep.subr.bf16.mxu0 0
    %2278 = vmatpush2.bf16.msra.mxu0 0
    %2279 = vmatprep.subr.bf16.mxu0 0
    %2280 = vmatpush2.bf16.msra.mxu0 0
    %2281 = vmatprep.subr.bf16.mxu0 0
    %2282 = vmatpush2.bf16.msra.mxu0 0
    %2283 = vmatprep.mubr.bf16.mxu0 0
    %2284 = vmatmul.mubr.bf16.gmra.mxu0 %v1996
    %v2285 = vpop.f32.mrf.mxu0
    %v2286 = vadd.f32 0.0, %v2285
    %v2287 = vpop.f32.mrf.mxu0
    %v2288 = vadd.f32 0.0, %v2287
    %v2289 = vpop.f32.mrf.mxu0
    %v2290 = vadd.f32 0.0, %v2289
    %v2291 = vpop.f32.mrf.mxu0
    %v2292 = vadd.f32 0.0, %v2291
    %2293 = vdwg.mxu0
    %v2294 = vadd.f32 %v2008, %v2243
    %v2295 = vadd.f32 %v2009, %v2245
    %v2296 = vadd.f32 %v2010, %v2286
    %v2297 = vadd.f32 %v2011, %v2288
    %v2298 = vadd.f32 %v2012, %v2247
    %v2299 = vadd.f32 %v2013, %v2249
    %v2300 = vadd.f32 %v2014, %v2290
    %v2301 = vadd.f32 %v2015, %v2292
    %v2302 = vmul.f32 %v2294, 0.5
    %v2303 = vmul.f32 %v2298, 0.5
    %v2304 = vtanh.pop %v2302
    %v2305 = vtanh.pop %v2303
    %v2306 = vmul.f32 %v2304, 0.5
    %v2307 = vmul.f32 %v2305, 0.5
    %v2308 = vadd.f32 %v2306, 0.5
    %v2309 = vadd.f32 %v2307, 0.5
    %v2310 = vmul.f32 %v2295, 0.5
    %v2311 = vmul.f32 %v2299, 0.5
    %v2312 = vtanh.pop %v2310
    %v2313 = vtanh.pop %v2311
    %v2314 = vmul.f32 %v2312, 0.5
    %v2315 = vmul.f32 %v2313, 0.5
    %v2316 = vadd.f32 %v2314, 0.5
    %v2317 = vadd.f32 %v2315, 0.5
    %v2318 = vtanh.pop %v2296
    %v2319 = vtanh.pop %v2300
    %v2320 = vmul.f32 %v2297, 0.5
    %v2321 = vmul.f32 %v2301, 0.5
    %v2322 = vtanh.pop %v2320
    %v2323 = vtanh.pop %v2321
    %v2324 = vmul.f32 %v2322, 0.5
    %v2325 = vmul.f32 %v2323, 0.5
    %v2326 = vadd.f32 %v2324, 0.5
    %v2327 = vadd.f32 %v2325, 0.5
    %v2328 = vmul.f32 %v2316, %v1990
    %v2329 = vmul.f32 %v2317, %v1991
    %v2330 = vmul.f32 %v2308, %v2318
    %v2331 = vmul.f32 %v2309, %v2319
    %v2332 = vadd.f32 %v2328, %v2330
    %v2333 = vadd.f32 %v2329, %v2331
    %v2334 = vtanh.pop %v2332
    %v2335 = vtanh.pop %v2333
    %v2336 = vmul.f32 %v2326, %v2334
    %v2337 = vmul.f32 %v2327, %v2335
    %v2338 = vpack.c.bf16 %v2337, %v2336
    %v2340 = vunpack.c.l.b16 %v2338
    %v2341 = vunpack.c.h.b16 %v2338
    %v2342 = vpack.c.b16 %v2340, %v2340
    %v2343 = vpack.c.b16 %v2341, %v2341
    %s2346 = scalar_lea.vmem [#allocation11], 32
    %2347 = vst [vmem:[%s2346] sm:$0xf] %v2342
    %2348 = vst [vmem:[%s2346 + $0x4] sm:$0xf] %v2343
    %s2349 = scalar_lea.vmem [#allocation2], 320
    %v2350 = vld [vmem:[%s2349] sm:$0xff]
    %v2351 = vld [vmem:[%s2349 + $0x8] sm:$0xff]
    %v2352 = vld [vmem:[%s2349 + $0x10] sm:$0xff]
    %v2353 = vld [vmem:[%s2349 + $0x18] sm:$0xff]
    %v2354 = vld [vmem:[%s2349 + $0x20] sm:$0xff]
    %v2355 = vld [vmem:[%s2349 + $0x28] sm:$0xff]
    %v2356 = vld [vmem:[%s2349 + $0x30] sm:$0xff]
    %v2357 = vld [vmem:[%s2349 + $0x38] sm:$0xff]
    %v2358 = vld [vmem:[#allocation10] sm:$0xff]
    %v2359 = vld [vmem:[#allocation10 + $0x8] sm:$0xff]
    %v2360 = vld [vmem:[#allocation10 + $0x10] sm:$0xff]
    %v2361 = vld [vmem:[#allocation10 + $0x18] sm:$0xff]
    %v2362 = vld [vmem:[#allocation10 + $0x20] sm:$0xff]
    %v2363 = vld [vmem:[#allocation10 + $0x28] sm:$0xff]
    %v2364 = vld [vmem:[#allocation10 + $0x30] sm:$0xff]
    %v2365 = vld [vmem:[#allocation10 + $0x38] sm:$0xff]
    %v2366 = vld [vmem:[#allocation10 + $0x40] sm:$0xff]
    %v2367 = vld [vmem:[#allocation10 + $0x48] sm:$0xff]
    %v2368 = vld [vmem:[#allocation10 + $0x50] sm:$0xff]
    %v2369 = vld [vmem:[#allocation10 + $0x58] sm:$0xff]
    %v2370 = vld [vmem:[#allocation10 + $0x60] sm:$0xff]
    %v2371 = vld [vmem:[#allocation10 + $0x68] sm:$0xff]
    %v2372 = vld [vmem:[#allocation10 + $0x70] sm:$0xff]
    %v2373 = vld [vmem:[#allocation10 + $0x78] sm:$0xff]
    %v2374 = vld [vmem:[#allocation10 + $0x80] sm:$0xff]
    %v2375 = vld [vmem:[#allocation10 + $0x88] sm:$0xff]
    %v2376 = vld [vmem:[#allocation10 + $0x90] sm:$0xff]
    %v2377 = vld [vmem:[#allocation10 + $0x98] sm:$0xff]
    %v2378 = vld [vmem:[#allocation10 + $0xa0] sm:$0xff]
    %v2379 = vld [vmem:[#allocation10 + $0xa8] sm:$0xff]
    %v2380 = vld [vmem:[#allocation10 + $0xb0] sm:$0xff]
    %v2381 = vld [vmem:[#allocation10 + $0xb8] sm:$0xff]
    %v2382 = vld [vmem:[#allocation10 + $0xc0] sm:$0xff]
    %v2383 = vld [vmem:[#allocation10 + $0xc8] sm:$0xff]
    %v2384 = vld [vmem:[#allocation10 + $0xd0] sm:$0xff]
    %v2385 = vld [vmem:[#allocation10 + $0xd8] sm:$0xff]
    %v2386 = vld [vmem:[#allocation10 + $0xe0] sm:$0xff]
    %v2387 = vld [vmem:[#allocation10 + $0xe8] sm:$0xff]
    %v2388 = vld [vmem:[#allocation10 + $0xf0] sm:$0xff]
    %v2389 = vld [vmem:[#allocation10 + $0xf8] sm:$0xff]
    %v2422 = vunpack.c.l.b16 %v2358
    %v2423 = vunpack.c.h.b16 %v2358
    %v2424 = vunpack.c.l.b16 %v2359
    %v2425 = vunpack.c.h.b16 %v2359
    %v2426 = vunpack.c.l.b16 %v2360
    %v2427 = vunpack.c.h.b16 %v2360
    %v2428 = vunpack.c.l.b16 %v2361
    %v2429 = vunpack.c.h.b16 %v2361
    %v2430 = vunpack.c.l.b16 %v2362
    %v2431 = vunpack.c.h.b16 %v2362
    %v2432 = vunpack.c.l.b16 %v2363
    %v2433 = vunpack.c.h.b16 %v2363
    %v2434 = vunpack.c.l.b16 %v2364
    %v2435 = vunpack.c.h.b16 %v2364
    %v2436 = vunpack.c.l.b16 %v2365
    %v2437 = vunpack.c.h.b16 %v2365
    %v2438 = vunpack.c.l.b16 %v2366
    %v2439 = vunpack.c.h.b16 %v2366
    %v2440 = vunpack.c.l.b16 %v2367
    %v2441 = vunpack.c.h.b16 %v2367
    %v2442 = vunpack.c.l.b16 %v2368
    %v2443 = vunpack.c.h.b16 %v2368
    %v2444 = vunpack.c.l.b16 %v2369
    %v2445 = vunpack.c.h.b16 %v2369
    %v2446 = vunpack.c.l.b16 %v2370
    %v2447 = vunpack.c.h.b16 %v2370
    %v2448 = vunpack.c.l.b16 %v2371
    %v2449 = vunpack.c.h.b16 %v2371
    %v2450 = vunpack.c.l.b16 %v2372
    %v2451 = vunpack.c.h.b16 %v2372
    %v2452 = vunpack.c.l.b16 %v2373
    %v2453 = vunpack.c.h.b16 %v2373
    %v2454 = vunpack.c.l.b16 %v2374
    %v2455 = vunpack.c.h.b16 %v2374
    %v2456 = vunpack.c.l.b16 %v2375
    %v2457 = vunpack.c.h.b16 %v2375
    %v2458 = vunpack.c.l.b16 %v2376
    %v2459 = vunpack.c.h.b16 %v2376
    %v2460 = vunpack.c.l.b16 %v2377
    %v2461 = vunpack.c.h.b16 %v2377
    %v2462 = vunpack.c.l.b16 %v2378
    %v2463 = vunpack.c.h.b16 %v2378
    %v2464 = vunpack.c.l.b16 %v2379
    %v2465 = vunpack.c.h.b16 %v2379
    %v2466 = vunpack.c.l.b16 %v2380
    %v2467 = vunpack.c.h.b16 %v2380
    %v2468 = vunpack.c.l.b16 %v2381
    %v2469 = vunpack.c.h.b16 %v2381
    %v2470 = vunpack.c.l.b16 %v2382
    %v2471 = vunpack.c.h.b16 %v2382
    %v2472 = vunpack.c.l.b16 %v2383
    %v2473 = vunpack.c.h.b16 %v2383
    %v2474 = vunpack.c.l.b16 %v2384
    %v2475 = vunpack.c.h.b16 %v2384
    %v2476 = vunpack.c.l.b16 %v2385
    %v2477 = vunpack.c.h.b16 %v2385
    %v2478 = vunpack.c.l.b16 %v2386
    %v2479 = vunpack.c.h.b16 %v2386
    %v2480 = vunpack.c.l.b16 %v2387
    %v2481 = vunpack.c.h.b16 %v2387
    %v2482 = vunpack.c.l.b16 %v2388
    %v2483 = vunpack.c.h.b16 %v2388
    %v2484 = vunpack.c.l.b16 %v2389
    %v2485 = vunpack.c.h.b16 %v2389
    %v2486 = vpack.c.b16 %v2426, %v2422
    %v2487 = vpack.c.b16 %v2427, %v2423
    %v2488 = vpack.c.b16 %v2428, %v2424
    %v2489 = vpack.c.b16 %v2429, %v2425
    %v2490 = vpack.c.b16 %v2434, %v2430
    %v2491 = vpack.c.b16 %v2435, %v2431
    %v2492 = vpack.c.b16 %v2436, %v2432
    %v2493 = vpack.c.b16 %v2437, %v2433
    %v2494 = vpack.c.b16 %v2442, %v2438
    %v2495 = vpack.c.b16 %v2443, %v2439
    %v2496 = vpack.c.b16 %v2444, %v2440
    %v2497 = vpack.c.b16 %v2445, %v2441
    %v2498 = vpack.c.b16 %v2450, %v2446
    %v2499 = vpack.c.b16 %v2451, %v2447
    %v2500 = vpack.c.b16 %v2452, %v2448
    %v2501 = vpack.c.b16 %v2453, %v2449
    %v2502 = vpack.c.b16 %v2458, %v2454
    %v2503 = vpack.c.b16 %v2459, %v2455
    %v2504 = vpack.c.b16 %v2460, %v2456
    %v2505 = vpack.c.b16 %v2461, %v2457
    %v2506 = vpack.c.b16 %v2466, %v2462
    %v2507 = vpack.c.b16 %v2467, %v2463
    %v2508 = vpack.c.b16 %v2468, %v2464
    %v2509 = vpack.c.b16 %v2469, %v2465
    %v2510 = vpack.c.b16 %v2474, %v2470
    %v2511 = vpack.c.b16 %v2475, %v2471
    %v2512 = vpack.c.b16 %v2476, %v2472
    %v2513 = vpack.c.b16 %v2477, %v2473
    %v2514 = vpack.c.b16 %v2482, %v2478
    %v2515 = vpack.c.b16 %v2483, %v2479
    %v2516 = vpack.c.b16 %v2484, %v2480
    %v2517 = vpack.c.b16 %v2485, %v2481
    %2550 = vmatprep.subr.bf16.mxu0 %v2515
    %2551 = vmatpush1.bf16.msra.mxu0 %v2514
    %2552 = vmatprep.subr.bf16.mxu0 %v2511
    %2553 = vmatpush1.bf16.msra.mxu0 %v2510
    %2554 = vmatprep.subr.bf16.mxu0 %v2507
    %2555 = vmatpush1.bf16.msra.mxu0 %v2506
    %2556 = vmatprep.subr.bf16.mxu0 %v2503
    %2557 = vmatpush1.bf16.msra.mxu0 %v2502
    %2558 = vmatprep.subr.bf16.mxu0 %v2499
    %2559 = vmatpush1.bf16.msra.mxu0 %v2498
    %2560 = vmatprep.subr.bf16.mxu0 %v2495
    %2561 = vmatpush1.bf16.msra.mxu0 %v2494
    %2562 = vmatprep.subr.bf16.mxu0 %v2491
    %2563 = vmatpush1.bf16.msra.mxu0 %v2490
    %2564 = vmatprep.subr.bf16.mxu0 %v2487
    %2565 = vmatpush1.bf16.msra.mxu0 %v2486
    %2566 = vmatprep.subr.bf16.mxu0 0
    %2567 = vmatpush2.bf16.msra.mxu0 0
    %2568 = vmatprep.subr.bf16.mxu0 0
    %2569 = vmatpush2.bf16.msra.mxu0 0
    %2570 = vmatprep.subr.bf16.mxu0 0
    %2571 = vmatpush2.bf16.msra.mxu0 0
    %2572 = vmatprep.subr.bf16.mxu0 0
    %2573 = vmatpush2.bf16.msra.mxu0 0
    %2574 = vmatprep.subr.bf16.mxu0 0
    %2575 = vmatpush2.bf16.msra.mxu0 0
    %2576 = vmatprep.subr.bf16.mxu0 0
    %2577 = vmatpush2.bf16.msra.mxu0 0
    %2578 = vmatprep.subr.bf16.mxu0 0
    %2579 = vmatpush2.bf16.msra.mxu0 0
    %2580 = vmatprep.subr.bf16.mxu0 0
    %2581 = vmatpush2.bf16.msra.mxu0 0
    %2582 = vmatprep.mubr.bf16.mxu0 0
    %2583 = vmatmul.mubr.bf16.gmra.mxu0 %v2338
    %v2584 = vpop.f32.mrf.mxu0
    %v2585 = vadd.f32 0.0, %v2584
    %v2586 = vpop.f32.mrf.mxu0
    %v2587 = vadd.f32 0.0, %v2586
    %v2588 = vpop.f32.mrf.mxu0
    %v2589 = vadd.f32 0.0, %v2588
    %v2590 = vpop.f32.mrf.mxu0
    %v2591 = vadd.f32 0.0, %v2590
    %2592 = vdwg.mxu0
    %2593 = vmatprep.subr.bf16.mxu0 %v2517
    %2594 = vmatpush1.bf16.msra.mxu0 %v2516
    %2595 = vmatprep.subr.bf16.mxu0 %v2513
    %2596 = vmatpush1.bf16.msra.mxu0 %v2512
    %2597 = vmatprep.subr.bf16.mxu0 %v2509
    %2598 = vmatpush1.bf16.msra.mxu0 %v2508
    %2599 = vmatprep.subr.bf16.mxu0 %v2505
    %2600 = vmatpush1.bf16.msra.mxu0 %v2504
    %2601 = vmatprep.subr.bf16.mxu0 %v2501
    %2602 = vmatpush1.bf16.msra.mxu0 %v2500
    %2603 = vmatprep.subr.bf16.mxu0 %v2497
    %2604 = vmatpush1.bf16.msra.mxu0 %v2496
    %2605 = vmatprep.subr.bf16.mxu0 %v2493
    %2606 = vmatpush1.bf16.msra.mxu0 %v2492
    %2607 = vmatprep.subr.bf16.mxu0 %v2489
    %2608 = vmatpush1.bf16.msra.mxu0 %v2488
    %2609 = vmatprep.subr.bf16.mxu0 0
    %2610 = vmatpush2.bf16.msra.mxu0 0
    %2611 = vmatprep.subr.bf16.mxu0 0
    %2612 = vmatpush2.bf16.msra.mxu0 0
    %2613 = vmatprep.subr.bf16.mxu0 0
    %2614 = vmatpush2.bf16.msra.mxu0 0
    %2615 = vmatprep.subr.bf16.mxu0 0
    %2616 = vmatpush2.bf16.msra.mxu0 0
    %2617 = vmatprep.subr.bf16.mxu0 0
    %2618 = vmatpush2.bf16.msra.mxu0 0
    %2619 = vmatprep.subr.bf16.mxu0 0
    %2620 = vmatpush2.bf16.msra.mxu0 0
    %2621 = vmatprep.subr.bf16.mxu0 0
    %2622 = vmatpush2.bf16.msra.mxu0 0
    %2623 = vmatprep.subr.bf16.mxu0 0
    %2624 = vmatpush2.bf16.msra.mxu0 0
    %2625 = vmatprep.mubr.bf16.mxu0 0
    %2626 = vmatmul.mubr.bf16.gmra.mxu0 %v2338
    %v2627 = vpop.f32.mrf.mxu0
    %v2628 = vadd.f32 0.0, %v2627
    %v2629 = vpop.f32.mrf.mxu0
    %v2630 = vadd.f32 0.0, %v2629
    %v2631 = vpop.f32.mrf.mxu0
    %v2632 = vadd.f32 0.0, %v2631
    %v2633 = vpop.f32.mrf.mxu0
    %v2634 = vadd.f32 0.0, %v2633
    %2635 = vdwg.mxu0
    %v2636 = vadd.f32 %v2350, %v2585
    %v2637 = vadd.f32 %v2351, %v2587
    %v2638 = vadd.f32 %v2352, %v2628
    %v2639 = vadd.f32 %v2353, %v2630
    %v2640 = vadd.f32 %v2354, %v2589
    %v2641 = vadd.f32 %v2355, %v2591
    %v2642 = vadd.f32 %v2356, %v2632
    %v2643 = vadd.f32 %v2357, %v2634
    %v2644 = vmul.f32 %v2636, 0.5
    %v2645 = vmul.f32 %v2640, 0.5
    %v2646 = vtanh.pop %v2644
    %v2647 = vtanh.pop %v2645
    %v2648 = vmul.f32 %v2646, 0.5
    %v2649 = vmul.f32 %v2647, 0.5
    %v2650 = vadd.f32 %v2648, 0.5
    %v2651 = vadd.f32 %v2649, 0.5
    %v2652 = vmul.f32 %v2637, 0.5
    %v2653 = vmul.f32 %v2641, 0.5
    %v2654 = vtanh.pop %v2652
    %v2655 = vtanh.pop %v2653
    %v2656 = vmul.f32 %v2654, 0.5
    %v2657 = vmul.f32 %v2655, 0.5
    %v2658 = vadd.f32 %v2656, 0.5
    %v2659 = vadd.f32 %v2657, 0.5
    %v2660 = vtanh.pop %v2638
    %v2661 = vtanh.pop %v2642
    %v2662 = vmul.f32 %v2639, 0.5
    %v2663 = vmul.f32 %v2643, 0.5
    %v2664 = vtanh.pop %v2662
    %v2665 = vtanh.pop %v2663
    %v2666 = vmul.f32 %v2664, 0.5
    %v2667 = vmul.f32 %v2665, 0.5
    %v2668 = vadd.f32 %v2666, 0.5
    %v2669 = vadd.f32 %v2667, 0.5
    %v2670 = vmul.f32 %v2658, %v2332
    %v2671 = vmul.f32 %v2659, %v2333
    %v2672 = vmul.f32 %v2650, %v2660
    %v2673 = vmul.f32 %v2651, %v2661
    %v2674 = vadd.f32 %v2670, %v2672
    %v2675 = vadd.f32 %v2671, %v2673
    %v2676 = vtanh.pop %v2674
    %v2677 = vtanh.pop %v2675
    %v2678 = vmul.f32 %v2668, %v2676
    %v2679 = vmul.f32 %v2669, %v2677
    %v2680 = vpack.c.bf16 %v2679, %v2678
    %v2682 = vunpack.c.l.b16 %v2680
    %v2683 = vunpack.c.h.b16 %v2680
    %v2684 = vpack.c.b16 %v2682, %v2682
    %v2685 = vpack.c.b16 %v2683, %v2683
    %s2688 = scalar_lea.vmem [#allocation11], 40
    %2689 = vst [vmem:[%s2688] sm:$0xf] %v2684
    %2690 = vst [vmem:[%s2688 + $0x4] sm:$0xf] %v2685
    %s2691 = scalar_lea.vmem [#allocation2], 384
    %v2692 = vld [vmem:[%s2691] sm:$0xff]
    %v2693 = vld [vmem:[%s2691 + $0x8] sm:$0xff]
    %v2694 = vld [vmem:[%s2691 + $0x10] sm:$0xff]
    %v2695 = vld [vmem:[%s2691 + $0x18] sm:$0xff]
    %v2696 = vld [vmem:[%s2691 + $0x20] sm:$0xff]
    %v2697 = vld [vmem:[%s2691 + $0x28] sm:$0xff]
    %v2698 = vld [vmem:[%s2691 + $0x30] sm:$0xff]
    %v2699 = vld [vmem:[%s2691 + $0x38] sm:$0xff]
    %v2700 = vld [vmem:[#allocation10] sm:$0xff]
    %v2701 = vld [vmem:[#allocation10 + $0x8] sm:$0xff]
    %v2702 = vld [vmem:[#allocation10 + $0x10] sm:$0xff]
    %v2703 = vld [vmem:[#allocation10 + $0x18] sm:$0xff]
    %v2704 = vld [vmem:[#allocation10 + $0x20] sm:$0xff]
    %v2705 = vld [vmem:[#allocation10 + $0x28] sm:$0xff]
    %v2706 = vld [vmem:[#allocation10 + $0x30] sm:$0xff]
    %v2707 = vld [vmem:[#allocation10 + $0x38] sm:$0xff]
    %v2708 = vld [vmem:[#allocation10 + $0x40] sm:$0xff]
    %v2709 = vld [vmem:[#allocation10 + $0x48] sm:$0xff]
    %v2710 = vld [vmem:[#allocation10 + $0x50] sm:$0xff]
    %v2711 = vld [vmem:[#allocation10 + $0x58] sm:$0xff]
    %v2712 = vld [vmem:[#allocation10 + $0x60] sm:$0xff]
    %v2713 = vld [vmem:[#allocation10 + $0x68] sm:$0xff]
    %v2714 = vld [vmem:[#allocation10 + $0x70] sm:$0xff]
    %v2715 = vld [vmem:[#allocation10 + $0x78] sm:$0xff]
    %v2716 = vld [vmem:[#allocation10 + $0x80] sm:$0xff]
    %v2717 = vld [vmem:[#allocation10 + $0x88] sm:$0xff]
    %v2718 = vld [vmem:[#allocation10 + $0x90] sm:$0xff]
    %v2719 = vld [vmem:[#allocation10 + $0x98] sm:$0xff]
    %v2720 = vld [vmem:[#allocation10 + $0xa0] sm:$0xff]
    %v2721 = vld [vmem:[#allocation10 + $0xa8] sm:$0xff]
    %v2722 = vld [vmem:[#allocation10 + $0xb0] sm:$0xff]
    %v2723 = vld [vmem:[#allocation10 + $0xb8] sm:$0xff]
    %v2724 = vld [vmem:[#allocation10 + $0xc0] sm:$0xff]
    %v2725 = vld [vmem:[#allocation10 + $0xc8] sm:$0xff]
    %v2726 = vld [vmem:[#allocation10 + $0xd0] sm:$0xff]
    %v2727 = vld [vmem:[#allocation10 + $0xd8] sm:$0xff]
    %v2728 = vld [vmem:[#allocation10 + $0xe0] sm:$0xff]
    %v2729 = vld [vmem:[#allocation10 + $0xe8] sm:$0xff]
    %v2730 = vld [vmem:[#allocation10 + $0xf0] sm:$0xff]
    %v2731 = vld [vmem:[#allocation10 + $0xf8] sm:$0xff]
    %v2764 = vunpack.c.l.b16 %v2700
    %v2765 = vunpack.c.h.b16 %v2700
    %v2766 = vunpack.c.l.b16 %v2701
    %v2767 = vunpack.c.h.b16 %v2701
    %v2768 = vunpack.c.l.b16 %v2702
    %v2769 = vunpack.c.h.b16 %v2702
    %v2770 = vunpack.c.l.b16 %v2703
    %v2771 = vunpack.c.h.b16 %v2703
    %v2772 = vunpack.c.l.b16 %v2704
    %v2773 = vunpack.c.h.b16 %v2704
    %v2774 = vunpack.c.l.b16 %v2705
    %v2775 = vunpack.c.h.b16 %v2705
    %v2776 = vunpack.c.l.b16 %v2706
    %v2777 = vunpack.c.h.b16 %v2706
    %v2778 = vunpack.c.l.b16 %v2707
    %v2779 = vunpack.c.h.b16 %v2707
    %v2780 = vunpack.c.l.b16 %v2708
    %v2781 = vunpack.c.h.b16 %v2708
    %v2782 = vunpack.c.l.b16 %v2709
    %v2783 = vunpack.c.h.b16 %v2709
    %v2784 = vunpack.c.l.b16 %v2710
    %v2785 = vunpack.c.h.b16 %v2710
    %v2786 = vunpack.c.l.b16 %v2711
    %v2787 = vunpack.c.h.b16 %v2711
    %v2788 = vunpack.c.l.b16 %v2712
    %v2789 = vunpack.c.h.b16 %v2712
    %v2790 = vunpack.c.l.b16 %v2713
    %v2791 = vunpack.c.h.b16 %v2713
    %v2792 = vunpack.c.l.b16 %v2714
    %v2793 = vunpack.c.h.b16 %v2714
    %v2794 = vunpack.c.l.b16 %v2715
    %v2795 = vunpack.c.h.b16 %v2715
    %v2796 = vunpack.c.l.b16 %v2716
    %v2797 = vunpack.c.h.b16 %v2716
    %v2798 = vunpack.c.l.b16 %v2717
    %v2799 = vunpack.c.h.b16 %v2717
    %v2800 = vunpack.c.l.b16 %v2718
    %v2801 = vunpack.c.h.b16 %v2718
    %v2802 = vunpack.c.l.b16 %v2719
    %v2803 = vunpack.c.h.b16 %v2719
    %v2804 = vunpack.c.l.b16 %v2720
    %v2805 = vunpack.c.h.b16 %v2720
    %v2806 = vunpack.c.l.b16 %v2721
    %v2807 = vunpack.c.h.b16 %v2721
    %v2808 = vunpack.c.l.b16 %v2722
    %v2809 = vunpack.c.h.b16 %v2722
    %v2810 = vunpack.c.l.b16 %v2723
    %v2811 = vunpack.c.h.b16 %v2723
    %v2812 = vunpack.c.l.b16 %v2724
    %v2813 = vunpack.c.h.b16 %v2724
    %v2814 = vunpack.c.l.b16 %v2725
    %v2815 = vunpack.c.h.b16 %v2725
    %v2816 = vunpack.c.l.b16 %v2726
    %v2817 = vunpack.c.h.b16 %v2726
    %v2818 = vunpack.c.l.b16 %v2727
    %v2819 = vunpack.c.h.b16 %v2727
    %v2820 = vunpack.c.l.b16 %v2728
    %v2821 = vunpack.c.h.b16 %v2728
    %v2822 = vunpack.c.l.b16 %v2729
    %v2823 = vunpack.c.h.b16 %v2729
    %v2824 = vunpack.c.l.b16 %v2730
    %v2825 = vunpack.c.h.b16 %v2730
    %v2826 = vunpack.c.l.b16 %v2731
    %v2827 = vunpack.c.h.b16 %v2731
    %v2828 = vpack.c.b16 %v2768, %v2764
    %v2829 = vpack.c.b16 %v2769, %v2765
    %v2830 = vpack.c.b16 %v2770, %v2766
    %v2831 = vpack.c.b16 %v2771, %v2767
    %v2832 = vpack.c.b16 %v2776, %v2772
    %v2833 = vpack.c.b16 %v2777, %v2773
    %v2834 = vpack.c.b16 %v2778, %v2774
    %v2835 = vpack.c.b16 %v2779, %v2775
    %v2836 = vpack.c.b16 %v2784, %v2780
    %v2837 = vpack.c.b16 %v2785, %v2781
    %v2838 = vpack.c.b16 %v2786, %v2782
    %v2839 = vpack.c.b16 %v2787, %v2783
    %v2840 = vpack.c.b16 %v2792, %v2788
    %v2841 = vpack.c.b16 %v2793, %v2789
    %v2842 = vpack.c.b16 %v2794, %v2790
    %v2843 = vpack.c.b16 %v2795, %v2791
    %v2844 = vpack.c.b16 %v2800, %v2796
    %v2845 = vpack.c.b16 %v2801, %v2797
    %v2846 = vpack.c.b16 %v2802, %v2798
    %v2847 = vpack.c.b16 %v2803, %v2799
    %v2848 = vpack.c.b16 %v2808, %v2804
    %v2849 = vpack.c.b16 %v2809, %v2805
    %v2850 = vpack.c.b16 %v2810, %v2806
    %v2851 = vpack.c.b16 %v2811, %v2807
    %v2852 = vpack.c.b16 %v2816, %v2812
    %v2853 = vpack.c.b16 %v2817, %v2813
    %v2854 = vpack.c.b16 %v2818, %v2814
    %v2855 = vpack.c.b16 %v2819, %v2815
    %v2856 = vpack.c.b16 %v2824, %v2820
    %v2857 = vpack.c.b16 %v2825, %v2821
    %v2858 = vpack.c.b16 %v2826, %v2822
    %v2859 = vpack.c.b16 %v2827, %v2823
    %2892 = vmatprep.subr.bf16.mxu0 %v2857
    %2893 = vmatpush1.bf16.msra.mxu0 %v2856
    %2894 = vmatprep.subr.bf16.mxu0 %v2853
    %2895 = vmatpush1.bf16.msra.mxu0 %v2852
    %2896 = vmatprep.subr.bf16.mxu0 %v2849
    %2897 = vmatpush1.bf16.msra.mxu0 %v2848
    %2898 = vmatprep.subr.bf16.mxu0 %v2845
    %2899 = vmatpush1.bf16.msra.mxu0 %v2844
    %2900 = vmatprep.subr.bf16.mxu0 %v2841
    %2901 = vmatpush1.bf16.msra.mxu0 %v2840
    %2902 = vmatprep.subr.bf16.mxu0 %v2837
    %2903 = vmatpush1.bf16.msra.mxu0 %v2836
    %2904 = vmatprep.subr.bf16.mxu0 %v2833
    %2905 = vmatpush1.bf16.msra.mxu0 %v2832
    %2906 = vmatprep.subr.bf16.mxu0 %v2829
    %2907 = vmatpush1.bf16.msra.mxu0 %v2828
    %2908 = vmatprep.subr.bf16.mxu0 0
    %2909 = vmatpush2.bf16.msra.mxu0 0
    %2910 = vmatprep.subr.bf16.mxu0 0
    %2911 = vmatpush2.bf16.msra.mxu0 0
    %2912 = vmatprep.subr.bf16.mxu0 0
    %2913 = vmatpush2.bf16.msra.mxu0 0
    %2914 = vmatprep.subr.bf16.mxu0 0
    %2915 = vmatpush2.bf16.msra.mxu0 0
    %2916 = vmatprep.subr.bf16.mxu0 0
    %2917 = vmatpush2.bf16.msra.mxu0 0
    %2918 = vmatprep.subr.bf16.mxu0 0
    %2919 = vmatpush2.bf16.msra.mxu0 0
    %2920 = vmatprep.subr.bf16.mxu0 0
    %2921 = vmatpush2.bf16.msra.mxu0 0
    %2922 = vmatprep.subr.bf16.mxu0 0
    %2923 = vmatpush2.bf16.msra.mxu0 0
    %2924 = vmatprep.mubr.bf16.mxu0 0
    %2925 = vmatmul.mubr.bf16.gmra.mxu0 %v2680
    %v2926 = vpop.f32.mrf.mxu0
    %v2927 = vadd.f32 0.0, %v2926
    %v2928 = vpop.f32.mrf.mxu0
    %v2929 = vadd.f32 0.0, %v2928
    %v2930 = vpop.f32.mrf.mxu0
    %v2931 = vadd.f32 0.0, %v2930
    %v2932 = vpop.f32.mrf.mxu0
    %v2933 = vadd.f32 0.0, %v2932
    %2934 = vdwg.mxu0
    %2935 = vmatprep.subr.bf16.mxu0 %v2859
    %2936 = vmatpush1.bf16.msra.mxu0 %v2858
    %2937 = vmatprep.subr.bf16.mxu0 %v2855
    %2938 = vmatpush1.bf16.msra.mxu0 %v2854
    %2939 = vmatprep.subr.bf16.mxu0 %v2851
    %2940 = vmatpush1.bf16.msra.mxu0 %v2850
    %2941 = vmatprep.subr.bf16.mxu0 %v2847
    %2942 = vmatpush1.bf16.msra.mxu0 %v2846
    %2943 = vmatprep.subr.bf16.mxu0 %v2843
    %2944 = vmatpush1.bf16.msra.mxu0 %v2842
    %2945 = vmatprep.subr.bf16.mxu0 %v2839
    %2946 = vmatpush1.bf16.msra.mxu0 %v2838
    %2947 = vmatprep.subr.bf16.mxu0 %v2835
    %2948 = vmatpush1.bf16.msra.mxu0 %v2834
    %2949 = vmatprep.subr.bf16.mxu0 %v2831
    %2950 = vmatpush1.bf16.msra.mxu0 %v2830
    %2951 = vmatprep.subr.bf16.mxu0 0
    %2952 = vmatpush2.bf16.msra.mxu0 0
    %2953 = vmatprep.subr.bf16.mxu0 0
    %2954 = vmatpush2.bf16.msra.mxu0 0
    %2955 = vmatprep.subr.bf16.mxu0 0
    %2956 = vmatpush2.bf16.msra.mxu0 0
    %2957 = vmatprep.subr.bf16.mxu0 0
    %2958 = vmatpush2.bf16.msra.mxu0 0
    %2959 = vmatprep.subr.bf16.mxu0 0
    %2960 = vmatpush2.bf16.msra.mxu0 0
    %2961 = vmatprep.subr.bf16.mxu0 0
    %2962 = vmatpush2.bf16.msra.mxu0 0
    %2963 = vmatprep.subr.bf16.mxu0 0
    %2964 = vmatpush2.bf16.msra.mxu0 0
    %2965 = vmatprep.subr.bf16.mxu0 0
    %2966 = vmatpush2.bf16.msra.mxu0 0
    %2967 = vmatprep.mubr.bf16.mxu0 0
    %2968 = vmatmul.mubr.bf16.gmra.mxu0 %v2680
    %v2969 = vpop.f32.mrf.mxu0
    %v2970 = vadd.f32 0.0, %v2969
    %v2971 = vpop.f32.mrf.mxu0
    %v2972 = vadd.f32 0.0, %v2971
    %v2973 = vpop.f32.mrf.mxu0
    %v2974 = vadd.f32 0.0, %v2973
    %v2975 = vpop.f32.mrf.mxu0
    %v2976 = vadd.f32 0.0, %v2975
    %2977 = vdwg.mxu0
    %v2978 = vadd.f32 %v2692, %v2927
    %v2979 = vadd.f32 %v2693, %v2929
    %v2980 = vadd.f32 %v2694, %v2970
    %v2981 = vadd.f32 %v2695, %v2972
    %v2982 = vadd.f32 %v2696, %v2931
    %v2983 = vadd.f32 %v2697, %v2933
    %v2984 = vadd.f32 %v2698, %v2974
    %v2985 = vadd.f32 %v2699, %v2976
    %v2986 = vmul.f32 %v2978, 0.5
    %v2987 = vmul.f32 %v2982, 0.5
    %v2988 = vtanh.pop %v2986
    %v2989 = vtanh.pop %v2987
    %v2990 = vmul.f32 %v2988, 0.5
    %v2991 = vmul.f32 %v2989, 0.5
    %v2992 = vadd.f32 %v2990, 0.5
    %v2993 = vadd.f32 %v2991, 0.5
    %v2994 = vmul.f32 %v2979, 0.5
    %v2995 = vmul.f32 %v2983, 0.5
    %v2996 = vtanh.pop %v2994
    %v2997 = vtanh.pop %v2995
    %v2998 = vmul.f32 %v2996, 0.5
    %v2999 = vmul.f32 %v2997, 0.5
    %v3000 = vadd.f32 %v2998, 0.5
    %v3001 = vadd.f32 %v2999, 0.5
    %v3002 = vtanh.pop %v2980
    %v3003 = vtanh.pop %v2984
    %v3004 = vmul.f32 %v2981, 0.5
    %v3005 = vmul.f32 %v2985, 0.5
    %v3006 = vtanh.pop %v3004
    %v3007 = vtanh.pop %v3005
    %v3008 = vmul.f32 %v3006, 0.5
    %v3009 = vmul.f32 %v3007, 0.5
    %v3010 = vadd.f32 %v3008, 0.5
    %v3011 = vadd.f32 %v3009, 0.5
    %v3012 = vmul.f32 %v3000, %v2674
    %v3013 = vmul.f32 %v3001, %v2675
    %v3014 = vmul.f32 %v2992, %v3002
    %v3015 = vmul.f32 %v2993, %v3003
    %v3016 = vadd.f32 %v3012, %v3014
    %v3017 = vadd.f32 %v3013, %v3015
    %v3018 = vtanh.pop %v3016
    %v3019 = vtanh.pop %v3017
    %v3020 = vmul.f32 %v3010, %v3018
    %v3021 = vmul.f32 %v3011, %v3019
    %v3022 = vpack.c.bf16 %v3021, %v3020
    %v3024 = vunpack.c.l.b16 %v3022
    %v3025 = vunpack.c.h.b16 %v3022
    %v3026 = vpack.c.b16 %v3024, %v3024
    %v3027 = vpack.c.b16 %v3025, %v3025
    %s3030 = scalar_lea.vmem [#allocation11], 48
    %3031 = vst [vmem:[%s3030] sm:$0xf] %v3026
    %3032 = vst [vmem:[%s3030 + $0x4] sm:$0xf] %v3027
    %s3033 = scalar_lea.vmem [#allocation2], 448
    %v3034 = vld [vmem:[%s3033] sm:$0xff]
    %v3035 = vld [vmem:[%s3033 + $0x8] sm:$0xff]
    %v3036 = vld [vmem:[%s3033 + $0x10] sm:$0xff]
    %v3037 = vld [vmem:[%s3033 + $0x18] sm:$0xff]
    %v3038 = vld [vmem:[%s3033 + $0x20] sm:$0xff]
    %v3039 = vld [vmem:[%s3033 + $0x28] sm:$0xff]
    %v3040 = vld [vmem:[%s3033 + $0x30] sm:$0xff]
    %v3041 = vld [vmem:[%s3033 + $0x38] sm:$0xff]
    %v3042 = vld [vmem:[#allocation10] sm:$0xff]
    %v3043 = vld [vmem:[#allocation10 + $0x8] sm:$0xff]
    %v3044 = vld [vmem:[#allocation10 + $0x10] sm:$0xff]
    %v3045 = vld [vmem:[#allocation10 + $0x18] sm:$0xff]
    %v3046 = vld [vmem:[#allocation10 + $0x20] sm:$0xff]
    %v3047 = vld [vmem:[#allocation10 + $0x28] sm:$0xff]
    %v3048 = vld [vmem:[#allocation10 + $0x30] sm:$0xff]
    %v3049 = vld [vmem:[#allocation10 + $0x38] sm:$0xff]
    %v3050 = vld [vmem:[#allocation10 + $0x40] sm:$0xff]
    %v3051 = vld [vmem:[#allocation10 + $0x48] sm:$0xff]
    %v3052 = vld [vmem:[#allocation10 + $0x50] sm:$0xff]
    %v3053 = vld [vmem:[#allocation10 + $0x58] sm:$0xff]
    %v3054 = vld [vmem:[#allocation10 + $0x60] sm:$0xff]
    %v3055 = vld [vmem:[#allocation10 + $0x68] sm:$0xff]
    %v3056 = vld [vmem:[#allocation10 + $0x70] sm:$0xff]
    %v3057 = vld [vmem:[#allocation10 + $0x78] sm:$0xff]
    %v3058 = vld [vmem:[#allocation10 + $0x80] sm:$0xff]
    %v3059 = vld [vmem:[#allocation10 + $0x88] sm:$0xff]
    %v3060 = vld [vmem:[#allocation10 + $0x90] sm:$0xff]
    %v3061 = vld [vmem:[#allocation10 + $0x98] sm:$0xff]
    %v3062 = vld [vmem:[#allocation10 + $0xa0] sm:$0xff]
    %v3063 = vld [vmem:[#allocation10 + $0xa8] sm:$0xff]
    %v3064 = vld [vmem:[#allocation10 + $0xb0] sm:$0xff]
    %v3065 = vld [vmem:[#allocation10 + $0xb8] sm:$0xff]
    %v3066 = vld [vmem:[#allocation10 + $0xc0] sm:$0xff]
    %v3067 = vld [vmem:[#allocation10 + $0xc8] sm:$0xff]
    %v3068 = vld [vmem:[#allocation10 + $0xd0] sm:$0xff]
    %v3069 = vld [vmem:[#allocation10 + $0xd8] sm:$0xff]
    %v3070 = vld [vmem:[#allocation10 + $0xe0] sm:$0xff]
    %v3071 = vld [vmem:[#allocation10 + $0xe8] sm:$0xff]
    %v3072 = vld [vmem:[#allocation10 + $0xf0] sm:$0xff]
    %v3073 = vld [vmem:[#allocation10 + $0xf8] sm:$0xff]
    %v3106 = vunpack.c.l.b16 %v3042
    %v3107 = vunpack.c.h.b16 %v3042
    %v3108 = vunpack.c.l.b16 %v3043
    %v3109 = vunpack.c.h.b16 %v3043
    %v3110 = vunpack.c.l.b16 %v3044
    %v3111 = vunpack.c.h.b16 %v3044
    %v3112 = vunpack.c.l.b16 %v3045
    %v3113 = vunpack.c.h.b16 %v3045
    %v3114 = vunpack.c.l.b16 %v3046
    %v3115 = vunpack.c.h.b16 %v3046
    %v3116 = vunpack.c.l.b16 %v3047
    %v3117 = vunpack.c.h.b16 %v3047
    %v3118 = vunpack.c.l.b16 %v3048
    %v3119 = vunpack.c.h.b16 %v3048
    %v3120 = vunpack.c.l.b16 %v3049
    %v3121 = vunpack.c.h.b16 %v3049
    %v3122 = vunpack.c.l.b16 %v3050
    %v3123 = vunpack.c.h.b16 %v3050
    %v3124 = vunpack.c.l.b16 %v3051
    %v3125 = vunpack.c.h.b16 %v3051
    %v3126 = vunpack.c.l.b16 %v3052
    %v3127 = vunpack.c.h.b16 %v3052
    %v3128 = vunpack.c.l.b16 %v3053
    %v3129 = vunpack.c.h.b16 %v3053
    %v3130 = vunpack.c.l.b16 %v3054
    %v3131 = vunpack.c.h.b16 %v3054
    %v3132 = vunpack.c.l.b16 %v3055
    %v3133 = vunpack.c.h.b16 %v3055
    %v3134 = vunpack.c.l.b16 %v3056
    %v3135 = vunpack.c.h.b16 %v3056
    %v3136 = vunpack.c.l.b16 %v3057
    %v3137 = vunpack.c.h.b16 %v3057
    %v3138 = vunpack.c.l.b16 %v3058
    %v3139 = vunpack.c.h.b16 %v3058
    %v3140 = vunpack.c.l.b16 %v3059
    %v3141 = vunpack.c.h.b16 %v3059
    %v3142 = vunpack.c.l.b16 %v3060
    %v3143 = vunpack.c.h.b16 %v3060
    %v3144 = vunpack.c.l.b16 %v3061
    %v3145 = vunpack.c.h.b16 %v3061
    %v3146 = vunpack.c.l.b16 %v3062
    %v3147 = vunpack.c.h.b16 %v3062
    %v3148 = vunpack.c.l.b16 %v3063
    %v3149 = vunpack.c.h.b16 %v3063
    %v3150 = vunpack.c.l.b16 %v3064
    %v3151 = vunpack.c.h.b16 %v3064
    %v3152 = vunpack.c.l.b16 %v3065
    %v3153 = vunpack.c.h.b16 %v3065
    %v3154 = vunpack.c.l.b16 %v3066
    %v3155 = vunpack.c.h.b16 %v3066
    %v3156 = vunpack.c.l.b16 %v3067
    %v3157 = vunpack.c.h.b16 %v3067
    %v3158 = vunpack.c.l.b16 %v3068
    %v3159 = vunpack.c.h.b16 %v3068
    %v3160 = vunpack.c.l.b16 %v3069
    %v3161 = vunpack.c.h.b16 %v3069
    %v3162 = vunpack.c.l.b16 %v3070
    %v3163 = vunpack.c.h.b16 %v3070
    %v3164 = vunpack.c.l.b16 %v3071
    %v3165 = vunpack.c.h.b16 %v3071
    %v3166 = vunpack.c.l.b16 %v3072
    %v3167 = vunpack.c.h.b16 %v3072
    %v3168 = vunpack.c.l.b16 %v3073
    %v3169 = vunpack.c.h.b16 %v3073
    %v3170 = vpack.c.b16 %v3110, %v3106
    %v3171 = vpack.c.b16 %v3111, %v3107
    %v3172 = vpack.c.b16 %v3112, %v3108
    %v3173 = vpack.c.b16 %v3113, %v3109
    %v3174 = vpack.c.b16 %v3118, %v3114
    %v3175 = vpack.c.b16 %v3119, %v3115
    %v3176 = vpack.c.b16 %v3120, %v3116
    %v3177 = vpack.c.b16 %v3121, %v3117
    %v3178 = vpack.c.b16 %v3126, %v3122
    %v3179 = vpack.c.b16 %v3127, %v3123
    %v3180 = vpack.c.b16 %v3128, %v3124
    %v3181 = vpack.c.b16 %v3129, %v3125
    %v3182 = vpack.c.b16 %v3134, %v3130
    %v3183 = vpack.c.b16 %v3135, %v3131
    %v3184 = vpack.c.b16 %v3136, %v3132
    %v3185 = vpack.c.b16 %v3137, %v3133
    %v3186 = vpack.c.b16 %v3142, %v3138
    %v3187 = vpack.c.b16 %v3143, %v3139
    %v3188 = vpack.c.b16 %v3144, %v3140
    %v3189 = vpack.c.b16 %v3145, %v3141
    %v3190 = vpack.c.b16 %v3150, %v3146
    %v3191 = vpack.c.b16 %v3151, %v3147
    %v3192 = vpack.c.b16 %v3152, %v3148
    %v3193 = vpack.c.b16 %v3153, %v3149
    %v3194 = vpack.c.b16 %v3158, %v3154
    %v3195 = vpack.c.b16 %v3159, %v3155
    %v3196 = vpack.c.b16 %v3160, %v3156
    %v3197 = vpack.c.b16 %v3161, %v3157
    %v3198 = vpack.c.b16 %v3166, %v3162
    %v3199 = vpack.c.b16 %v3167, %v3163
    %v3200 = vpack.c.b16 %v3168, %v3164
    %v3201 = vpack.c.b16 %v3169, %v3165
    %3234 = vmatprep.subr.bf16.mxu0 %v3199
    %3235 = vmatpush1.bf16.msra.mxu0 %v3198
    %3236 = vmatprep.subr.bf16.mxu0 %v3195
    %3237 = vmatpush1.bf16.msra.mxu0 %v3194
    %3238 = vmatprep.subr.bf16.mxu0 %v3191
    %3239 = vmatpush1.bf16.msra.mxu0 %v3190
    %3240 = vmatprep.subr.bf16.mxu0 %v3187
    %3241 = vmatpush1.bf16.msra.mxu0 %v3186
    %3242 = vmatprep.subr.bf16.mxu0 %v3183
    %3243 = vmatpush1.bf16.msra.mxu0 %v3182
    %3244 = vmatprep.subr.bf16.mxu0 %v3179
    %3245 = vmatpush1.bf16.msra.mxu0 %v3178
    %3246 = vmatprep.subr.bf16.mxu0 %v3175
    %3247 = vmatpush1.bf16.msra.mxu0 %v3174
    %3248 = vmatprep.subr.bf16.mxu0 %v3171
    %3249 = vmatpush1.bf16.msra.mxu0 %v3170
    %3250 = vmatprep.subr.bf16.mxu0 0
    %3251 = vmatpush2.bf16.msra.mxu0 0
    %3252 = vmatprep.subr.bf16.mxu0 0
    %3253 = vmatpush2.bf16.msra.mxu0 0
    %3254 = vmatprep.subr.bf16.mxu0 0
    %3255 = vmatpush2.bf16.msra.mxu0 0
    %3256 = vmatprep.subr.bf16.mxu0 0
    %3257 = vmatpush2.bf16.msra.mxu0 0
    %3258 = vmatprep.subr.bf16.mxu0 0
    %3259 = vmatpush2.bf16.msra.mxu0 0
    %3260 = vmatprep.subr.bf16.mxu0 0
    %3261 = vmatpush2.bf16.msra.mxu0 0
    %3262 = vmatprep.subr.bf16.mxu0 0
    %3263 = vmatpush2.bf16.msra.mxu0 0
    %3264 = vmatprep.subr.bf16.mxu0 0
    %3265 = vmatpush2.bf16.msra.mxu0 0
    %3266 = vmatprep.mubr.bf16.mxu0 0
    %3267 = vmatmul.mubr.bf16.gmra.mxu0 %v3022
    %v3268 = vpop.f32.mrf.mxu0
    %v3269 = vadd.f32 0.0, %v3268
    %v3270 = vpop.f32.mrf.mxu0
    %v3271 = vadd.f32 0.0, %v3270
    %v3272 = vpop.f32.mrf.mxu0
    %v3273 = vadd.f32 0.0, %v3272
    %v3274 = vpop.f32.mrf.mxu0
    %v3275 = vadd.f32 0.0, %v3274
    %3276 = vdwg.mxu0
    %3277 = vmatprep.subr.bf16.mxu0 %v3201
    %3278 = vmatpush1.bf16.msra.mxu0 %v3200
    %3279 = vmatprep.subr.bf16.mxu0 %v3197
    %3280 = vmatpush1.bf16.msra.mxu0 %v3196
    %3281 = vmatprep.subr.bf16.mxu0 %v3193
    %3282 = vmatpush1.bf16.msra.mxu0 %v3192
    %3283 = vmatprep.subr.bf16.mxu0 %v3189
    %3284 = vmatpush1.bf16.msra.mxu0 %v3188
    %3285 = vmatprep.subr.bf16.mxu0 %v3185
    %3286 = vmatpush1.bf16.msra.mxu0 %v3184
    %3287 = vmatprep.subr.bf16.mxu0 %v3181
    %3288 = vmatpush1.bf16.msra.mxu0 %v3180
    %3289 = vmatprep.subr.bf16.mxu0 %v3177
    %3290 = vmatpush1.bf16.msra.mxu0 %v3176
    %3291 = vmatprep.subr.bf16.mxu0 %v3173
    %3292 = vmatpush1.bf16.msra.mxu0 %v3172
    %3293 = vmatprep.subr.bf16.mxu0 0
    %3294 = vmatpush2.bf16.msra.mxu0 0
    %3295 = vmatprep.subr.bf16.mxu0 0
    %3296 = vmatpush2.bf16.msra.mxu0 0
    %3297 = vmatprep.subr.bf16.mxu0 0
    %3298 = vmatpush2.bf16.msra.mxu0 0
    %3299 = vmatprep.subr.bf16.mxu0 0
    %3300 = vmatpush2.bf16.msra.mxu0 0
    %3301 = vmatprep.subr.bf16.mxu0 0
    %3302 = vmatpush2.bf16.msra.mxu0 0
    %3303 = vmatprep.subr.bf16.mxu0 0
    %3304 = vmatpush2.bf16.msra.mxu0 0
    %3305 = vmatprep.subr.bf16.mxu0 0
    %3306 = vmatpush2.bf16.msra.mxu0 0
    %3307 = vmatprep.subr.bf16.mxu0 0
    %3308 = vmatpush2.bf16.msra.mxu0 0
    %3309 = vmatprep.mubr.bf16.mxu0 0
    %3310 = vmatmul.mubr.bf16.gmra.mxu0 %v3022
    %v3311 = vpop.f32.mrf.mxu0
    %v3312 = vadd.f32 0.0, %v3311
    %v3313 = vpop.f32.mrf.mxu0
    %v3314 = vadd.f32 0.0, %v3313
    %v3315 = vpop.f32.mrf.mxu0
    %v3316 = vadd.f32 0.0, %v3315
    %v3317 = vpop.f32.mrf.mxu0
    %v3318 = vadd.f32 0.0, %v3317
    %3319 = vdwg.mxu0
    %v3320 = vadd.f32 %v3034, %v3269
    %v3321 = vadd.f32 %v3035, %v3271
    %v3322 = vadd.f32 %v3036, %v3312
    %v3323 = vadd.f32 %v3037, %v3314
    %v3324 = vadd.f32 %v3038, %v3273
    %v3325 = vadd.f32 %v3039, %v3275
    %v3326 = vadd.f32 %v3040, %v3316
    %v3327 = vadd.f32 %v3041, %v3318
    %v3328 = vmul.f32 %v3320, 0.5
    %v3329 = vmul.f32 %v3324, 0.5
    %v3330 = vtanh.pop %v3328
    %v3331 = vtanh.pop %v3329
    %v3332 = vmul.f32 %v3330, 0.5
    %v3333 = vmul.f32 %v3331, 0.5
    %v3334 = vadd.f32 %v3332, 0.5
    %v3335 = vadd.f32 %v3333, 0.5
    %v3336 = vmul.f32 %v3321, 0.5
    %v3337 = vmul.f32 %v3325, 0.5
    %v3338 = vtanh.pop %v3336
    %v3339 = vtanh.pop %v3337
    %v3340 = vmul.f32 %v3338, 0.5
    %v3341 = vmul.f32 %v3339, 0.5
    %v3342 = vadd.f32 %v3340, 0.5
    %v3343 = vadd.f32 %v3341, 0.5
    %v3344 = vtanh.pop %v3322
    %v3345 = vtanh.pop %v3326
    %v3346 = vmul.f32 %v3323, 0.5
    %v3347 = vmul.f32 %v3327, 0.5
    %v3348 = vtanh.pop %v3346
    %v3349 = vtanh.pop %v3347
    %v3350 = vmul.f32 %v3348, 0.5
    %v3351 = vmul.f32 %v3349, 0.5
    %v3352 = vadd.f32 %v3350, 0.5
    %v3353 = vadd.f32 %v3351, 0.5
    %v3354 = vmul.f32 %v3342, %v3016
    %v3355 = vmul.f32 %v3343, %v3017
    %v3356 = vmul.f32 %v3334, %v3344
    %v3357 = vmul.f32 %v3335, %v3345
    %v3358 = vadd.f32 %v3354, %v3356
    %v3359 = vadd.f32 %v3355, %v3357
    %v3360 = vtanh.pop %v3358
    %v3361 = vtanh.pop %v3359
    %v3362 = vmul.f32 %v3352, %v3360
    %v3363 = vmul.f32 %v3353, %v3361
    %v3364 = vpack.c.bf16 %v3363, %v3362
    %v3366 = vunpack.c.l.b16 %v3364
    %v3367 = vunpack.c.h.b16 %v3364
    %v3368 = vpack.c.b16 %v3366, %v3366
    %v3369 = vpack.c.b16 %v3367, %v3367
    %s3372 = scalar_lea.vmem [#allocation11], 56
    %3373 = vst [vmem:[%s3372] sm:$0xf] %v3368
    %3374 = vst [vmem:[%s3372 + $0x4] sm:$0xf] %v3369
    %3375 = vst [vmem:[#allocation3] sm:$0xff] %v3362
    %3376 = vst [vmem:[#allocation3 + $0x8] sm:$0xff] %v3363
    %3377 = vst [vmem:[#allocation4] sm:$0xff] %v3358
    %3378 = vst [vmem:[#allocation4 + $0x8] sm:$0xff] %v3359
    // Predicated region
    $region34: #{tpu_custom_call.1} parent=1 // pred_check
      _
    $region35: #{tpu_custom_call.1} parent=1 // pred_check_branch
      %3380 = sbr.rel (0) target = $region37
    $region36: #{tpu_custom_call.1} parent=1 // pred_region
      %s3382 = ssub.s32 1024, 1024
      %3383 = vsyncadd [#allocation7], %s3382
      %s3384 = sshll.u32 [#allocation11], 4
      %s3385 = int_to_ptr.vmem [resolvable:$true] %s3384
      %3390 = dma.vmem_to_hbm [thread:$0]  %s3385, 1024, %s4, [#allocation7], 64, 64, 4
    $region37: #{tpu_custom_call.1} parent=1 // pred_fallthru
      _
    // Predicated region
    $region38: #{tpu_custom_call.1} parent=1 // pred_check
      _
    $region39: #{tpu_custom_call.1} parent=1 // pred_check_branch
      %3392 = sbr.rel (0) target = $region41
    $region40: #{tpu_custom_call.1} parent=1 // pred_region
      %3393 = dma.done [#allocation7], 1024
    $region41: #{tpu_custom_call.1} parent=1 // pred_fallthru
      _
    %3394 = vsyncpa [#allocation6], 1
    %3395 = vsyncpa [#allocation9], 1
    %3396 = vsyncpa [#allocation7], 1

</llo_original>
